<compile_context>
chip_gen: v7x
topology: tpu7x:2x2x1
jax: 0.10.0
libtpu: 0.0.40
codegen_flags: <defaults>
</compile_context>

<pallas_src>
import jax
import jax.numpy as jnp
from jax.experimental import pallas as pl
from jax.experimental.pallas import tpu as pltpu

VIS_FEAT_IN = 768      # 3 * 16 * 16
VIS_HIDDEN = 768       # vision encoder output
BOTTLENECK = 512       # folded into the imi hidden weight offline
POS_IN_PAD = 8         # pos input (3) padded to 8 columns (sublane friendly, tiny)
POS_HIDDEN = 64
IMI_HIDDEN = 128
ACTION_DIM = 6
OUT_PAD = 128          # action head lane-padded to 128 for dense vst / output DMA
TILE_N_DEFAULT = 512   # fills the 256-tall MXU M dim (v6e/v7x), multiple of 128 (v5e)


def actor_kernel(vis_ref, pos_ref,
                 wv_ref, bv_ref,             # vision encoder  (768 -> 768), bf16
                 wp_ref, bp_ref,             # pos encoder     (3 -> 64), rows 3..7 zero
                 w1v_ref, w1p_ref, b1_ref,   # imi hidden with bottleneck folded in
                 w2_ref, b2_ref,             # imi out         (128 -> 128pad)
                 out_ref):
    # vision_encoder: flatten + Linear(768,768) + ReLU.
    # Input streamed as f32; bf16 cast happens here on the VPU (free under MXU).
    x = vis_ref[...].astype(jnp.bfloat16)                               # (tn, 768)
    vfeat = jnp.dot(x, wv_ref[...], preferred_element_type=jnp.float32) + bv_ref[...]
    vfeat = jnp.maximum(vfeat, 0.0)                                     # (tn, 768) f32

    # pos_encoder: Linear(3, 64) + ReLU on the VPU (3-term broadcast; no MXU).
    p = pos_ref[...]                                                    # (tn, 8) f32
    wp = wp_ref[...]                                                    # (8, 64) f32
    pfeat = (p[:, 0:1] * wp[0:1, :]
             + p[:, 1:2] * wp[1:2, :]
             + p[:, 2:3] * wp[2:3, :]
             + bp_ref[...])
    pfeat = jnp.maximum(pfeat, 0.0)                                     # (tn, 64) f32

    # embeds = cat(visual_feats, pos_feats); bottleneck(768->512) + imi Linear(576,128)
    # folded offline into w1v' (768,128) / b1'.  Split matmul == concat matmul.
    h = (jnp.dot(vfeat.astype(jnp.bfloat16), w1v_ref[...],
                 preferred_element_type=jnp.float32)
         + jnp.dot(pfeat.astype(jnp.bfloat16), w1p_ref[...],
                   preferred_element_type=jnp.float32)
         + b1_ref[...])
    h = jnp.maximum(h, 0.0)                                             # (tn, 128) f32

    # imi out Linear(128,6), lane-padded to 128 so stores are unmasked/dense.
    out_ref[...] = (jnp.dot(h.astype(jnp.bfloat16), w2_ref[...],
                            preferred_element_type=jnp.float32) + b2_ref[...])


def init_module_params(key):
    """f32 'master' weights mirroring the PyTorch module / synthetic submodules."""
    ks = jax.random.split(key, 5)

    def lin(k, fan_in, fan_out):
        return (jax.random.normal(k, (fan_in, fan_out), jnp.float32)
                * (1.0 / jnp.sqrt(jnp.float32(fan_in))))

    return {
        "wv": lin(ks[0], VIS_FEAT_IN, VIS_HIDDEN),
        "bv": jnp.full((1, VIS_HIDDEN), 0.01, jnp.float32),
        "wb": lin(ks[1], VIS_HIDDEN, BOTTLENECK),          # self.bottleneck
        "bb": jnp.full((1, BOTTLENECK), 0.01, jnp.float32),
        "wp": lin(ks[2], 3, POS_HIDDEN),
        "bp": jnp.full((1, POS_HIDDEN), 0.01, jnp.float32),
        "w1": lin(ks[3], BOTTLENECK + POS_HIDDEN, IMI_HIDDEN),
        "b1": jnp.full((1, IMI_HIDDEN), 0.01, jnp.float32),
        "w2": lin(ks[4], IMI_HIDDEN, ACTION_DIM),
        "b2": jnp.full((1, ACTION_DIM), 0.01, jnp.float32),
    }


def fold_params(m):
    """Kernel-ready params: bottleneck folded into the imi hidden weight (f32 math,
    then a single bf16 cast), pos weight row-padded 3->8, action head lane-padded."""
    w1v = m["w1"][:BOTTLENECK]                     # (512, 128) f32
    w1p = m["w1"][BOTTLENECK:]                     # (64, 128)  f32
    w1v_fold = m["wb"] @ w1v                       # (768, 128) f32  -- exact algebra
    b1_fold = m["bb"] @ w1v + m["b1"]              # (1, 128)   f32

    wp_pad = jnp.zeros((POS_IN_PAD, POS_HIDDEN), jnp.float32).at[:3, :].set(m["wp"])
    w2_pad = jnp.zeros((IMI_HIDDEN, OUT_PAD), jnp.float32).at[:, :ACTION_DIM].set(m["w2"])
    b2_pad = jnp.zeros((1, OUT_PAD), jnp.float32).at[:, :ACTION_DIM].set(m["b2"])

    return {
        "wv": m["wv"].astype(jnp.bfloat16),
        "bv": m["bv"],
        "wp": wp_pad,                              # f32, tiny (VPU path)
        "bp": m["bp"],
        "w1v": w1v_fold.astype(jnp.bfloat16),      # (768, 128)
        "w1p": w1p.astype(jnp.bfloat16),           # (64, 128)
        "b1": b1_fold,
        "w2": w2_pad.astype(jnp.bfloat16),
        "b2": b2_pad,
    }


def _round_up(a, b):
    return ((a + b - 1) // b) * b


def _choose_tile(n, tile_default=TILE_N_DEFAULT):
    # Keep tiles a multiple of 8 (f32 sublane).  For small N, clamp so the grid
    # has >= 2 steps, letting the "parallel" axis shard across v7x's 2 TensorCores
    # (no effect on single-TC v5e/v6e).
    if n >= 2 * tile_default:
        return tile_default
    return max(8, _round_up(pl.cdiv(n, 2), 8))


def rnn_robot_actor_forward(visual_input, pos_input, params, freeze=True,
                            tile_n=TILE_N_DEFAULT):
    # `freeze` only affects autograd in PyTorch; forward math is identical.
    batch, T, C, H, W = visual_input.shape
    assert C == 3, "forward views visual_input as (-1, 3, H, W)"
    n = batch * T

    # Reshape only (no dtype cast, no row pad): the f32 stream is cast to bf16
    # inside the kernel, and ragged N is handled by partial blocks.
    x = visual_input.reshape(n, C * H * W).astype(jnp.float32)          # (N, 768)
    p = pos_input.reshape(n, 3).astype(jnp.float32)
    p = jnp.pad(p, ((0, 0), (0, POS_IN_PAD - 3)))                       # (N, 8)

    tile_n = _choose_tile(n, tile_n)
    grid = (pl.cdiv(n, tile_n),)

    row = lambda i: (i, 0)      # activations: march over row tiles
    keep = lambda i: (0, 0)     # weights/biases: resident in VMEM (constant index)

    def wspec(arr):
        return pl.BlockSpec(arr.shape, keep)

    in_specs = [
        pl.BlockSpec((tile_n, VIS_FEAT_IN), row),
        pl.BlockSpec((tile_n, POS_IN_PAD), row),
        wspec(params["wv"]), wspec(params["bv"]),
        wspec(params["wp"]), wspec(params["bp"]),
        wspec(params["w1v"]), wspec(params["w1p"]), wspec(params["b1"]),
        wspec(params["w2"]), wspec(params["b2"]),
    ]

    flops = 2 * n * (VIS_FEAT_IN * VIS_HIDDEN          # vision encoder
                     + VIS_HIDDEN * IMI_HIDDEN         # folded bottleneck+imi hidden
                     + POS_HIDDEN * IMI_HIDDEN
                     + IMI_HIDDEN * OUT_PAD
                     + 3 * POS_HIDDEN)                 # pos encoder (VPU)
    bytes_accessed = (int(x.size) * 4 + int(p.size) * 4
                      + sum(int(v.size) * v.dtype.itemsize for v in params.values())
                      + n * OUT_PAD * 4)

    out = pl.pallas_call(
        actor_kernel,
        out_shape=jax.ShapeDtypeStruct((n, OUT_PAD), jnp.float32),
        grid_spec=pltpu.PrefetchScalarGridSpec(
            num_scalar_prefetch=0,
            grid=grid,
            in_specs=in_specs,
            out_specs=pl.BlockSpec((tile_n, OUT_PAD), row),
        ),
        compiler_params=pltpu.CompilerParams(
            dimension_semantics=("parallel",),          # megacore sharding on v7x
            vmem_limit_bytes=32 * 1024 * 1024,          # covers 512-row f32 tiles on all gens
        ),
        cost_estimate=pl.CostEstimate(flops=flops, transcendentals=0,
                                      bytes_accessed=bytes_accessed),
    )(x, p,
      params["wv"], params["bv"],
      params["wp"], params["bp"],
      params["w1v"], params["w1p"], params["b1"],
      params["w2"], params["b2"])

    return out[:, :ACTION_DIM]                                          # (batch*T, 6)


def reference_forward(visual_input, pos_input, kp):
    """Pure-JAX reference using the same folded params / same numerics."""
    batch, T, C, H, W = visual_input.shape
    n = batch * T
    x = visual_input.reshape(n, C * H * W).astype(jnp.bfloat16)
    p = pos_input.reshape(n, 3).astype(jnp.float32)
    vfeat = jnp.maximum(
        jnp.dot(x, kp["wv"], preferred_element_type=jnp.float32) + kp["bv"], 0.0)
    pfeat = jnp.maximum(p @ kp["wp"][:3, :] + kp["bp"], 0.0)
    h = jnp.maximum(
        jnp.dot(vfeat.astype(jnp.bfloat16), kp["w1v"],
                preferred_element_type=jnp.float32)
        + jnp.dot(pfeat.astype(jnp.bfloat16), kp["w1p"],
                  preferred_element_type=jnp.float32)
        + kp["b1"], 0.0)
    out = jnp.dot(h.astype(jnp.bfloat16), kp["w2"],
                  preferred_element_type=jnp.float32) + kp["b2"]
    return out[:, :ACTION_DIM]


if __name__ == "__main__":
    key = jax.random.PRNGKey(0)
    k_vis, k_pos, k_par = jax.random.split(key, 3)

    batch, T, C, H, W = 2, 8, 3, 16, 16
    visual_input = jax.random.normal(k_vis, (batch, T, C, H, W), jnp.float32)
    pos_input = jax.random.normal(k_pos, (batch, T, 3), jnp.float32)

    module_params = init_module_params(k_par)
    params = fold_params(module_params)

    out = rnn_robot_actor_forward(visual_input, pos_input, params, freeze=True)
    out = jax.block_until_ready(out)

    ref = reference_forward(visual_input, pos_input, params)
    assert out.shape == (batch * T, ACTION_DIM)
    assert jnp.allclose(out, ref, atol=2e-3, rtol=2e-3), "mismatch vs. pure-JAX reference"

    print("KERNEL_OK")
</pallas_src>

<mosaic_0001>
module attributes {stable_mosaic.version = 11 : i64} {
  func.func @actor_kernel(%arg0: i32, %arg1: memref<8x768xf32, #tpu.memory_space<vmem>>, %arg2: memref<8x8xf32, #tpu.memory_space<vmem>>, %arg3: memref<768x768xbf16, #tpu.memory_space<vmem>>, %arg4: memref<1x768xf32, #tpu.memory_space<vmem>>, %arg5: memref<8x64xf32, #tpu.memory_space<vmem>>, %arg6: memref<1x64xf32, #tpu.memory_space<vmem>>, %arg7: memref<768x128xbf16, #tpu.memory_space<vmem>>, %arg8: memref<64x128xbf16, #tpu.memory_space<vmem>>, %arg9: memref<1x128xf32, #tpu.memory_space<vmem>>, %arg10: memref<128x128xbf16, #tpu.memory_space<vmem>>, %arg11: memref<1x128xf32, #tpu.memory_space<vmem>>, %arg12: memref<8x128xf32, #tpu.memory_space<vmem>>) attributes {dimension_semantics = [#tpu.dimension_semantics<parallel>], iteration_bounds = array<i64: 2>, scalar_prefetch = 0 : i64, scratch_operands = 0 : i64, tpu.core_type = #tpu.core_type<tc>, window_params = [{transform_indices = @transform_0, window_bounds = array<i64: 8, 768>}, {transform_indices = @transform_1, window_bounds = array<i64: 8, 8>}, {pipeline_mode = #tpu.pipeline_mode<synchronous>, transform_indices = @transform_2, window_bounds = array<i64: 768, 768>}, {pipeline_mode = #tpu.pipeline_mode<synchronous>, transform_indices = @transform_3, window_bounds = array<i64: 1, 768>}, {pipeline_mode = #tpu.pipeline_mode<synchronous>, transform_indices = @transform_4, window_bounds = array<i64: 8, 64>}, {pipeline_mode = #tpu.pipeline_mode<synchronous>, transform_indices = @transform_5, window_bounds = array<i64: 1, 64>}, {pipeline_mode = #tpu.pipeline_mode<synchronous>, transform_indices = @transform_6, window_bounds = array<i64: 768, 128>}, {pipeline_mode = #tpu.pipeline_mode<synchronous>, transform_indices = @transform_7, window_bounds = array<i64: 64, 128>}, {pipeline_mode = #tpu.pipeline_mode<synchronous>, transform_indices = @transform_8, window_bounds = array<i64: 1, 128>}, {pipeline_mode = #tpu.pipeline_mode<synchronous>, transform_indices = @transform_9, window_bounds = array<i64: 128, 128>}, {pipeline_mode = #tpu.pipeline_mode<synchronous>, transform_indices = @transform_10, window_bounds = array<i64: 1, 128>}, {transform_indices = @transform_11, window_bounds = array<i64: 8, 128>}]} {
    %c0 = arith.constant 0 : index
    %c0_0 = arith.constant 0 : index
    %0 = vector.load %arg1[%c0, %c0_0] : memref<8x768xf32, #tpu.memory_space<vmem>>, vector<8x768xf32>
    %1 = arith.truncf %0 : vector<8x768xf32> to vector<8x768xbf16>
    %c0_1 = arith.constant 0 : index
    %c0_2 = arith.constant 0 : index
    %2 = vector.load %arg3[%c0_1, %c0_2] : memref<768x768xbf16, #tpu.memory_space<vmem>>, vector<768x768xbf16>
    %cst = arith.constant dense<0.000000e+00> : vector<8x768xf32>
    %3 = tpu.matmul %1, %2, %cst {dimension_numbers = #tpu.dot_dimension_numbers<[1], [0], [0], [1], [0, 0, 1, 1], [], []>} : vector<8x768xbf16>, vector<768x768xbf16>, vector<8x768xf32> -> vector<8x768xf32>
    %c0_3 = arith.constant 0 : index
    %c0_4 = arith.constant 0 : index
    %4 = vector.load %arg4[%c0_3, %c0_4] : memref<1x768xf32, #tpu.memory_space<vmem>>, vector<1x768xf32>
    %5 = vector.broadcast %4 : vector<1x768xf32> to vector<8x768xf32>
    %6 = arith.addf %3, %5 : vector<8x768xf32>
    %cst_5 = arith.constant 0.000000e+00 : f32
    %7 = vector.broadcast %cst_5 : f32 to vector<8x768xf32>
    %8 = arith.maximumf %6, %7 : vector<8x768xf32>
    %c0_6 = arith.constant 0 : index
    %c0_7 = arith.constant 0 : index
    %9 = vector.load %arg2[%c0_6, %c0_7] : memref<8x8xf32, #tpu.memory_space<vmem>>, vector<8x8xf32>
    %c0_8 = arith.constant 0 : index
    %c0_9 = arith.constant 0 : index
    %10 = vector.load %arg5[%c0_8, %c0_9] : memref<8x64xf32, #tpu.memory_space<vmem>>, vector<8x64xf32>
    %11 = vector.extract_strided_slice %9 {offsets = [0, 0], sizes = [8, 1], strides = [1, 1]} : vector<8x8xf32> to vector<8x1xf32>
    %12 = vector.extract_strided_slice %10 {offsets = [0, 0], sizes = [1, 64], strides = [1, 1]} : vector<8x64xf32> to vector<1x64xf32>
    %13 = vector.broadcast %11 : vector<8x1xf32> to vector<8x64xf32>
    %14 = vector.broadcast %12 : vector<1x64xf32> to vector<8x64xf32>
    %15 = arith.mulf %13, %14 : vector<8x64xf32>
    %16 = vector.extract_strided_slice %9 {offsets = [0, 1], sizes = [8, 1], strides = [1, 1]} : vector<8x8xf32> to vector<8x1xf32>
    %17 = vector.extract_strided_slice %10 {offsets = [1, 0], sizes = [1, 64], strides = [1, 1]} : vector<8x64xf32> to vector<1x64xf32>
    %18 = vector.broadcast %16 : vector<8x1xf32> to vector<8x64xf32>
    %19 = vector.broadcast %17 : vector<1x64xf32> to vector<8x64xf32>
    %20 = arith.mulf %18, %19 : vector<8x64xf32>
    %21 = arith.addf %15, %20 : vector<8x64xf32>
    %22 = vector.extract_strided_slice %9 {offsets = [0, 2], sizes = [8, 1], strides = [1, 1]} : vector<8x8xf32> to vector<8x1xf32>
    %23 = vector.extract_strided_slice %10 {offsets = [2, 0], sizes = [1, 64], strides = [1, 1]} : vector<8x64xf32> to vector<1x64xf32>
    %24 = vector.broadcast %22 : vector<8x1xf32> to vector<8x64xf32>
    %25 = vector.broadcast %23 : vector<1x64xf32> to vector<8x64xf32>
    %26 = arith.mulf %24, %25 : vector<8x64xf32>
    %27 = arith.addf %21, %26 : vector<8x64xf32>
    %c0_10 = arith.constant 0 : index
    %c0_11 = arith.constant 0 : index
    %28 = vector.load %arg6[%c0_10, %c0_11] : memref<1x64xf32, #tpu.memory_space<vmem>>, vector<1x64xf32>
    %29 = vector.broadcast %28 : vector<1x64xf32> to vector<8x64xf32>
    %30 = arith.addf %27, %29 : vector<8x64xf32>
    %cst_12 = arith.constant 0.000000e+00 : f32
    %31 = vector.broadcast %cst_12 : f32 to vector<8x64xf32>
    %32 = arith.maximumf %30, %31 : vector<8x64xf32>
    %33 = arith.truncf %8 : vector<8x768xf32> to vector<8x768xbf16>
    %c0_13 = arith.constant 0 : index
    %c0_14 = arith.constant 0 : index
    %34 = vector.load %arg7[%c0_13, %c0_14] : memref<768x128xbf16, #tpu.memory_space<vmem>>, vector<768x128xbf16>
    %cst_15 = arith.constant dense<0.000000e+00> : vector<8x128xf32>
    %35 = tpu.matmul %33, %34, %cst_15 {dimension_numbers = #tpu.dot_dimension_numbers<[1], [0], [0], [1], [0, 0, 1, 1], [], []>} : vector<8x768xbf16>, vector<768x128xbf16>, vector<8x128xf32> -> vector<8x128xf32>
    %36 = arith.truncf %32 : vector<8x64xf32> to vector<8x64xbf16>
    %c0_16 = arith.constant 0 : index
    %c0_17 = arith.constant 0 : index
    %37 = vector.load %arg8[%c0_16, %c0_17] : memref<64x128xbf16, #tpu.memory_space<vmem>>, vector<64x128xbf16>
    %cst_18 = arith.constant dense<0.000000e+00> : vector<8x128xf32>
    %38 = tpu.matmul %36, %37, %cst_18 {dimension_numbers = #tpu.dot_dimension_numbers<[1], [0], [0], [1], [0, 0, 1, 1], [], []>} : vector<8x64xbf16>, vector<64x128xbf16>, vector<8x128xf32> -> vector<8x128xf32>
    %39 = arith.addf %35, %38 : vector<8x128xf32>
    %c0_19 = arith.constant 0 : index
    %c0_20 = arith.constant 0 : index
    %40 = vector.load %arg9[%c0_19, %c0_20] : memref<1x128xf32, #tpu.memory_space<vmem>>, vector<1x128xf32>
    %41 = vector.broadcast %40 : vector<1x128xf32> to vector<8x128xf32>
    %42 = arith.addf %39, %41 : vector<8x128xf32>
    %cst_21 = arith.constant 0.000000e+00 : f32
    %43 = vector.broadcast %cst_21 : f32 to vector<8x128xf32>
    %44 = arith.maximumf %42, %43 : vector<8x128xf32>
    %45 = arith.truncf %44 : vector<8x128xf32> to vector<8x128xbf16>
    %c0_22 = arith.constant 0 : index
    %c0_23 = arith.constant 0 : index
    %46 = vector.load %arg10[%c0_22, %c0_23] : memref<128x128xbf16, #tpu.memory_space<vmem>>, vector<128x128xbf16>
    %cst_24 = arith.constant dense<0.000000e+00> : vector<8x128xf32>
    %47 = tpu.matmul %45, %46, %cst_24 {dimension_numbers = #tpu.dot_dimension_numbers<[1], [0], [0], [1], [0, 0, 1, 1], [], []>} : vector<8x128xbf16>, vector<128x128xbf16>, vector<8x128xf32> -> vector<8x128xf32>
    %c0_25 = arith.constant 0 : index
    %c0_26 = arith.constant 0 : index
    %48 = vector.load %arg11[%c0_25, %c0_26] : memref<1x128xf32, #tpu.memory_space<vmem>>, vector<1x128xf32>
    %49 = vector.broadcast %48 : vector<1x128xf32> to vector<8x128xf32>
    %50 = arith.addf %47, %49 : vector<8x128xf32>
    %c0_27 = arith.constant 0 : index
    %c0_28 = arith.constant 0 : index
    %51 = vector.load %arg12[%c0_27, %c0_28] : memref<8x128xf32, #tpu.memory_space<vmem>>, vector<8x128xf32>
    tpu.vector_store %arg12[%c0_27, %c0_28], %50 {strides = array<i32>} : memref<8x128xf32, #tpu.memory_space<vmem>>, vector<8x128xf32>,
    return
  }
  func.func @transform_0(%arg0: i32) -> (i32, i32) {
    %c0_i32 = arith.constant 0 : i32
    %c0_i32_0 = arith.constant 0 : i32
    return %arg0, %c0_i32 : i32, i32
  }
  func.func @transform_1(%arg0: i32) -> (i32, i32) {
    %c0_i32 = arith.constant 0 : i32
    %c0_i32_0 = arith.constant 0 : i32
    return %arg0, %c0_i32 : i32, i32
  }
  func.func @transform_2(%arg0: i32) -> (i32, i32) {
    %c0_i32 = arith.constant 0 : i32
    %c0_i32_0 = arith.constant 0 : i32
    %c0_i32_1 = arith.constant 0 : i32
    return %c0_i32, %c0_i32_0 : i32, i32
  }
  func.func @transform_3(%arg0: i32) -> (i32, i32) {
    %c0_i32 = arith.constant 0 : i32
    %c0_i32_0 = arith.constant 0 : i32
    %c0_i32_1 = arith.constant 0 : i32
    return %c0_i32, %c0_i32_0 : i32, i32
  }
  func.func @transform_4(%arg0: i32) -> (i32, i32) {
    %c0_i32 = arith.constant 0 : i32
    %c0_i32_0 = arith.constant 0 : i32
    %c0_i32_1 = arith.constant 0 : i32
    return %c0_i32, %c0_i32_0 : i32, i32
  }
  func.func @transform_5(%arg0: i32) -> (i32, i32) {
    %c0_i32 = arith.constant 0 : i32
    %c0_i32_0 = arith.constant 0 : i32
    %c0_i32_1 = arith.constant 0 : i32
    return %c0_i32, %c0_i32_0 : i32, i32
  }
  func.func @transform_6(%arg0: i32) -> (i32, i32) {
    %c0_i32 = arith.constant 0 : i32
    %c0_i32_0 = arith.constant 0 : i32
    %c0_i32_1 = arith.constant 0 : i32
    return %c0_i32, %c0_i32_0 : i32, i32
  }
  func.func @transform_7(%arg0: i32) -> (i32, i32) {
    %c0_i32 = arith.constant 0 : i32
    %c0_i32_0 = arith.constant 0 : i32
    %c0_i32_1 = arith.constant 0 : i32
    return %c0_i32, %c0_i32_0 : i32, i32
  }
  func.func @transform_8(%arg0: i32) -> (i32, i32) {
    %c0_i32 = arith.constant 0 : i32
    %c0_i32_0 = arith.constant 0 : i32
    %c0_i32_1 = arith.constant 0 : i32
    return %c0_i32, %c0_i32_0 : i32, i32
  }
  func.func @transform_9(%arg0: i32) -> (i32, i32) {
    %c0_i32 = arith.constant 0 : i32
    %c0_i32_0 = arith.constant 0 : i32
    %c0_i32_1 = arith.constant 0 : i32
    return %c0_i32, %c0_i32_0 : i32, i32
  }
  func.func @transform_10(%arg0: i32) -> (i32, i32) {
    %c0_i32 = arith.constant 0 : i32
    %c0_i32_0 = arith.constant 0 : i32
    %c0_i32_1 = arith.constant 0 : i32
    return %c0_i32, %c0_i32_0 : i32, i32
  }
  func.func @transform_11(%arg0: i32) -> (i32, i32) {
    %c0_i32 = arith.constant 0 : i32
    %c0_i32_0 = arith.constant 0 : i32
    return %arg0, %c0_i32 : i32, i32
  }
}

</mosaic_0001>

<llo_original>
// kernel: tpu_custom_call.1
$region0: #{tpu_custom_call.1}
  #allocation0 [shape = 'u32[]', space=smem, size = 0x4, offset = 0x4, fixed_abs, tag = 'smem constant byte address 0x4 - core index']
  #allocation1 [shape = 'u32[144,128]{1,0:T(1,128)}', space=vmem, size = 0x12000, scoped, tag = 'internal scratch']
  %s0 = inlined_call_operand.hbm [shape: f32[16,768], index: 0, kind: input, shape index: {}]
  %s1 = inlined_call_operand.vmem [shape: f32[16,8], index: 1, kind: input, shape index: {}]
  %s2 = inlined_call_operand.hbm [shape: bf16[768,768], index: 2, kind: input, shape index: {}]
  %s3 = inlined_call_operand.hbm [shape: f32[1,768], index: 3, kind: input, shape index: {}]
  %s4 = inlined_call_operand.hbm [shape: f32[8,64], index: 4, kind: input, shape index: {}]
  %s5 = inlined_call_operand.hbm [shape: f32[1,64], index: 5, kind: input, shape index: {}]
  %s6 = inlined_call_operand.hbm [shape: bf16[768,128], index: 6, kind: input, shape index: {}]
  %s7 = inlined_call_operand.hbm [shape: bf16[64,128], index: 7, kind: input, shape index: {}]
  %s8 = inlined_call_operand.hbm [shape: f32[1,128], index: 8, kind: input, shape index: {}]
  %s9 = inlined_call_operand.hbm [shape: bf16[128,128], index: 9, kind: input, shape index: {}]
  %s10 = inlined_call_operand.hbm [shape: f32[1,128], index: 10, kind: input, shape index: {}]
  %s11 = inlined_call_operand.hbm [shape: f32[16,128], index: 11, kind: output, shape index: {}]
  %s12 = sld [smem:[#allocation0]]
  $region117: #{tpu_custom_call.1} parent=0
    _
  %s14 = ssub.s32 1, %s12
  %s15 = scalar_select 0, %s14, %s12
  $region1: #{tpu_custom_call.1} parent=0
    #allocation2 [shape = 'u8[49152]{0}', space=vmem, size = 0xc000, scoped, tag = 'input window, operand 0']
    #allocation3 [shape = 's32[2]{0}', space=sflag, size = 0x8, scoped, tag = 'scoped memory for tpu_custom_call.1']
    #allocation4 [shape = 's32[2]{0}', space=sflag, size = 0x8, scoped, tag = 'scoped memory for tpu_custom_call.1']
    #allocation5 [shape = 'u8[1179648]{0}', space=vmem, size = 0x120000, scoped, tag = 'input window, operand 2, single buffered']
    #allocation6 [shape = 's32[1]{0}', space=sflag, size = 0x4, scoped, tag = 'scoped memory for tpu_custom_call.1']
    #allocation7 [shape = 'u8[3072]{0}', space=vmem, size = 0xc00, scoped, tag = 'input window, operand 3, single buffered']
    #allocation8 [shape = 'u8[4096]{0}', space=vmem, size = 0x1000, scoped, tag = 'input window, operand 4, single buffered']
    #allocation9 [shape = 's32[1]{0}', space=sflag, size = 0x4, scoped, tag = 'scoped memory for tpu_custom_call.1']
    #allocation10 [shape = 'u8[512]{0}', space=vmem, size = 0x400, scoped, tag = 'input window, operand 5, single buffered']
    #allocation11 [shape = 'u8[196608]{0}', space=vmem, size = 0x30000, scoped, tag = 'input window, operand 6, single buffered']
    #allocation12 [shape = 's32[1]{0}', space=sflag, size = 0x4, scoped, tag = 'scoped memory for tpu_custom_call.1']
    #allocation13 [shape = 'u8[16384]{0}', space=vmem, size = 0x4000, scoped, tag = 'input window, operand 7, single buffered']
    #allocation14 [shape = 'u8[512]{0}', space=vmem, size = 0x400, scoped, tag = 'input window, operand 8, single buffered']
    #allocation15 [shape = 's32[1]{0}', space=sflag, size = 0x4, scoped, tag = 'scoped memory for tpu_custom_call.1']
    #allocation16 [shape = 'u8[32768]{0}', space=vmem, size = 0x8000, scoped, tag = 'input window, operand 9, single buffered']
    #allocation17 [shape = 'u8[512]{0}', space=vmem, size = 0x400, scoped, tag = 'input window, operand 10, single buffered']
    #allocation18 [shape = 's32[1]{0}', space=sflag, size = 0x4, scoped, tag = 'scoped memory for tpu_custom_call.1']
    #allocation19 [shape = 'u8[8192]{0}', space=vmem, size = 0x2000, scoped, tag = 'output window, operand 0']
    %16 = vsyncpa [#allocation3], 0
    %s17 = scalar_lea.sflag [#allocation3], 1
    %18 = vsyncpa %s17, 0
    %19 = vsyncpa [#allocation6], 0
    %20 = vsyncpa [#allocation9], 0
    %21 = vsyncpa [#allocation12], 0
    %22 = vsyncpa [#allocation15], 0
    %23 = vsyncpa [#allocation18], 0
    %24 = vsyncpa [#allocation4], 0
    %s25 = scalar_lea.sflag [#allocation4], 1
    %26 = vsyncpa %s25, 0
    loop: start=0, step=1, limit=4
    $region2: #{tpu_custom_call.1} parent=1 // loop_pre_header
      _
    $region3: #{tpu_custom_call.1} parent=1 // loop_header
      %s28 = sphi 0, %s32
      %p29 = scmp.ge.s32.totalorder %s28, 4
      %s38 = sphi 0, %s40
      %s41 = sphi 0, %s38
      %s42 = sphi 0, %s41
      %s58 = sphi 0, %s42
      %s64 = sphi 0, %s66
      %s67 = sphi 0, %s64
      %s68 = sphi 0, %s67
      %s84 = sphi 0, %s68
      %s88 = sphi 0, %s88
      %s90 = sphi 0, %s88
      %s91 = sphi 0, %s90
      %s105 = sphi 0, %s91
      %s109 = sphi 0, %s109
      %s111 = sphi 0, %s109
      %s112 = sphi 0, %s111
      %s126 = sphi 0, %s112
      %s130 = sphi 0, %s130
      %s132 = sphi 0, %s130
      %s133 = sphi 0, %s132
      %s147 = sphi 0, %s133
      %s151 = sphi 0, %s151
      %s153 = sphi 0, %s151
      %s154 = sphi 0, %s153
      %s168 = sphi 0, %s154
      %s172 = sphi 0, %s172
      %s174 = sphi 0, %s172
      %s175 = sphi 0, %s174
      %s189 = sphi 0, %s175
      %s193 = sphi 0, %s193
      %s195 = sphi 0, %s193
      %s196 = sphi 0, %s195
      %s210 = sphi 0, %s196
      %s214 = sphi 0, %s214
      %s216 = sphi 0, %s214
      %s217 = sphi 0, %s216
      %s231 = sphi 0, %s217
      %s235 = sphi 0, %s235
      %s237 = sphi 0, %s235
      %s238 = sphi 0, %s237
      %s252 = sphi 0, %s238
      %s256 = sphi 0, %s256
      %s258 = sphi 0, %s256
      %s259 = sphi 0, %s258
      %s273 = sphi 0, %s259
      %s279 = sphi 0, %s281
      %s282 = sphi 0, %s279
      %s283 = sphi 0, %s282
      %s299 = sphi 0, %s283
    $region4: #{tpu_custom_call.1} parent=1 // loop_header_branch
      %31 = sbr.rel (%p29) target = $region8
    $region5: #{tpu_custom_call.1} parent=1 // loop_body
      %s33 = ssub.s32 %s28, 1
      %s34 = ssub.s32 %s28, 2
      %s35 = sadd.s32 %s28, 1
      %s36 = ssub.s32 %s28, %s35
      %p37 = scmp.eq.s32.totalorder %s36, 0
      %s39 = sadd.s32 %s38, 1
      %s40 = scalar_select %p37, %s38, %s39
      %p43 = pneg %p37
      %p44 = scmp.eq.s32.totalorder %s28, 1
      %p45 = por %p43, %p44
      %p46 = scmp.ne.s32.totalorder %s38, %s41
      %p47 = scmp.eq.s32.totalorder %s28, 0
      %p48 = por %p46, %p47
      %p49 = scmp.ne.s32.totalorder %s38, %s41
      %p50 = scmp.eq.s32.totalorder %s33, 1
      %p51 = por %p49, %p50
      %p52 = scmp.ne.s32.totalorder %s41, %s42
      %p53 = scmp.eq.s32.totalorder %s33, 0
      %p54 = por %p52, %p53
      %p55 = scmp.ne.s32.totalorder %s41, %s42
      %p56 = scmp.eq.s32.totalorder %s34, 1
      %p57 = por %p55, %p56
      %p59 = scmp.ne.s32.totalorder %s42, %s58
      %p60 = scmp.eq.s32.totalorder %s34, 0
      %p61 = por %p59, %p60
      %s62 = ssub.s32 %s28, %s35
      %p63 = scmp.eq.s32.totalorder %s62, 0
      %s65 = sadd.s32 %s64, 1
      %s66 = scalar_select %p63, %s64, %s65
      %p69 = pneg %p63
      %p70 = scmp.eq.s32.totalorder %s28, 1
      %p71 = por %p69, %p70
      %p72 = scmp.ne.s32.totalorder %s64, %s67
      %p73 = scmp.eq.s32.totalorder %s28, 0
      %p74 = por %p72, %p73
      %p75 = scmp.ne.s32.totalorder %s64, %s67
      %p76 = scmp.eq.s32.totalorder %s33, 1
      %p77 = por %p75, %p76
      %p78 = scmp.ne.s32.totalorder %s67, %s68
      %p79 = scmp.eq.s32.totalorder %s33, 0
      %p80 = por %p78, %p79
      %p81 = scmp.ne.s32.totalorder %s67, %s68
      %p82 = scmp.eq.s32.totalorder %s34, 1
      %p83 = por %p81, %p82
      %p85 = scmp.ne.s32.totalorder %s68, %s84
      %p86 = scmp.eq.s32.totalorder %s34, 0
      %p87 = por %p85, %p86
      %s89 = sadd.s32 %s88, 1
      %p92 = scmp.eq.s32.totalorder %s28, 1
      %p93 = scmp.ne.s32.totalorder %s88, %s90
      %p94 = scmp.eq.s32.totalorder %s28, 0
      %p95 = por %p93, %p94
      %p96 = scmp.ne.s32.totalorder %s88, %s90
      %p97 = scmp.eq.s32.totalorder %s33, 1
      %p98 = por %p96, %p97
      %p99 = scmp.ne.s32.totalorder %s90, %s91
      %p100 = scmp.eq.s32.totalorder %s33, 0
      %p101 = por %p99, %p100
      %p102 = scmp.ne.s32.totalorder %s90, %s91
      %p103 = scmp.eq.s32.totalorder %s34, 1
      %p104 = por %p102, %p103
      %p106 = scmp.ne.s32.totalorder %s91, %s105
      %p107 = scmp.eq.s32.totalorder %s34, 0
      %p108 = por %p106, %p107
      %s110 = sadd.s32 %s109, 1
      %p113 = scmp.eq.s32.totalorder %s28, 1
      %p114 = scmp.ne.s32.totalorder %s109, %s111
      %p115 = scmp.eq.s32.totalorder %s28, 0
      %p116 = por %p114, %p115
      %p117 = scmp.ne.s32.totalorder %s109, %s111
      %p118 = scmp.eq.s32.totalorder %s33, 1
      %p119 = por %p117, %p118
      %p120 = scmp.ne.s32.totalorder %s111, %s112
      %p121 = scmp.eq.s32.totalorder %s33, 0
      %p122 = por %p120, %p121
      %p123 = scmp.ne.s32.totalorder %s111, %s112
      %p124 = scmp.eq.s32.totalorder %s34, 1
      %p125 = por %p123, %p124
      %p127 = scmp.ne.s32.totalorder %s112, %s126
      %p128 = scmp.eq.s32.totalorder %s34, 0
      %p129 = por %p127, %p128
      %s131 = sadd.s32 %s130, 1
      %p134 = scmp.eq.s32.totalorder %s28, 1
      %p135 = scmp.ne.s32.totalorder %s130, %s132
      %p136 = scmp.eq.s32.totalorder %s28, 0
      %p137 = por %p135, %p136
      %p138 = scmp.ne.s32.totalorder %s130, %s132
      %p139 = scmp.eq.s32.totalorder %s33, 1
      %p140 = por %p138, %p139
      %p141 = scmp.ne.s32.totalorder %s132, %s133
      %p142 = scmp.eq.s32.totalorder %s33, 0
      %p143 = por %p141, %p142
      %p144 = scmp.ne.s32.totalorder %s132, %s133
      %p145 = scmp.eq.s32.totalorder %s34, 1
      %p146 = por %p144, %p145
      %p148 = scmp.ne.s32.totalorder %s133, %s147
      %p149 = scmp.eq.s32.totalorder %s34, 0
      %p150 = por %p148, %p149
      %s152 = sadd.s32 %s151, 1
      %p155 = scmp.eq.s32.totalorder %s28, 1
      %p156 = scmp.ne.s32.totalorder %s151, %s153
      %p157 = scmp.eq.s32.totalorder %s28, 0
      %p158 = por %p156, %p157
      %p159 = scmp.ne.s32.totalorder %s151, %s153
      %p160 = scmp.eq.s32.totalorder %s33, 1
      %p161 = por %p159, %p160
      %p162 = scmp.ne.s32.totalorder %s153, %s154
      %p163 = scmp.eq.s32.totalorder %s33, 0
      %p164 = por %p162, %p163
      %p165 = scmp.ne.s32.totalorder %s153, %s154
      %p166 = scmp.eq.s32.totalorder %s34, 1
      %p167 = por %p165, %p166
      %p169 = scmp.ne.s32.totalorder %s154, %s168
      %p170 = scmp.eq.s32.totalorder %s34, 0
      %p171 = por %p169, %p170
      %s173 = sadd.s32 %s172, 1
      %p176 = scmp.eq.s32.totalorder %s28, 1
      %p177 = scmp.ne.s32.totalorder %s172, %s174
      %p178 = scmp.eq.s32.totalorder %s28, 0
      %p179 = por %p177, %p178
      %p180 = scmp.ne.s32.totalorder %s172, %s174
      %p181 = scmp.eq.s32.totalorder %s33, 1
      %p182 = por %p180, %p181
      %p183 = scmp.ne.s32.totalorder %s174, %s175
      %p184 = scmp.eq.s32.totalorder %s33, 0
      %p185 = por %p183, %p184
      %p186 = scmp.ne.s32.totalorder %s174, %s175
      %p187 = scmp.eq.s32.totalorder %s34, 1
      %p188 = por %p186, %p187
      %p190 = scmp.ne.s32.totalorder %s175, %s189
      %p191 = scmp.eq.s32.totalorder %s34, 0
      %p192 = por %p190, %p191
      %s194 = sadd.s32 %s193, 1
      %p197 = scmp.eq.s32.totalorder %s28, 1
      %p198 = scmp.ne.s32.totalorder %s193, %s195
      %p199 = scmp.eq.s32.totalorder %s28, 0
      %p200 = por %p198, %p199
      %p201 = scmp.ne.s32.totalorder %s193, %s195
      %p202 = scmp.eq.s32.totalorder %s33, 1
      %p203 = por %p201, %p202
      %p204 = scmp.ne.s32.totalorder %s195, %s196
      %p205 = scmp.eq.s32.totalorder %s33, 0
      %p206 = por %p204, %p205
      %p207 = scmp.ne.s32.totalorder %s195, %s196
      %p208 = scmp.eq.s32.totalorder %s34, 1
      %p209 = por %p207, %p208
      %p211 = scmp.ne.s32.totalorder %s196, %s210
      %p212 = scmp.eq.s32.totalorder %s34, 0
      %p213 = por %p211, %p212
      %s215 = sadd.s32 %s214, 1
      %p218 = scmp.eq.s32.totalorder %s28, 1
      %p219 = scmp.ne.s32.totalorder %s214, %s216
      %p220 = scmp.eq.s32.totalorder %s28, 0
      %p221 = por %p219, %p220
      %p222 = scmp.ne.s32.totalorder %s214, %s216
      %p223 = scmp.eq.s32.totalorder %s33, 1
      %p224 = por %p222, %p223
      %p225 = scmp.ne.s32.totalorder %s216, %s217
      %p226 = scmp.eq.s32.totalorder %s33, 0
      %p227 = por %p225, %p226
      %p228 = scmp.ne.s32.totalorder %s216, %s217
      %p229 = scmp.eq.s32.totalorder %s34, 1
      %p230 = por %p228, %p229
      %p232 = scmp.ne.s32.totalorder %s217, %s231
      %p233 = scmp.eq.s32.totalorder %s34, 0
      %p234 = por %p232, %p233
      %s236 = sadd.s32 %s235, 1
      %p239 = scmp.eq.s32.totalorder %s28, 1
      %p240 = scmp.ne.s32.totalorder %s235, %s237
      %p241 = scmp.eq.s32.totalorder %s28, 0
      %p242 = por %p240, %p241
      %p243 = scmp.ne.s32.totalorder %s235, %s237
      %p244 = scmp.eq.s32.totalorder %s33, 1
      %p245 = por %p243, %p244
      %p246 = scmp.ne.s32.totalorder %s237, %s238
      %p247 = scmp.eq.s32.totalorder %s33, 0
      %p248 = por %p246, %p247
      %p249 = scmp.ne.s32.totalorder %s237, %s238
      %p250 = scmp.eq.s32.totalorder %s34, 1
      %p251 = por %p249, %p250
      %p253 = scmp.ne.s32.totalorder %s238, %s252
      %p254 = scmp.eq.s32.totalorder %s34, 0
      %p255 = por %p253, %p254
      %s257 = sadd.s32 %s256, 1
      %p260 = scmp.eq.s32.totalorder %s28, 1
      %p261 = scmp.ne.s32.totalorder %s256, %s258
      %p262 = scmp.eq.s32.totalorder %s28, 0
      %p263 = por %p261, %p262
      %p264 = scmp.ne.s32.totalorder %s256, %s258
      %p265 = scmp.eq.s32.totalorder %s33, 1
      %p266 = por %p264, %p265
      %p267 = scmp.ne.s32.totalorder %s258, %s259
      %p268 = scmp.eq.s32.totalorder %s33, 0
      %p269 = por %p267, %p268
      %p270 = scmp.ne.s32.totalorder %s258, %s259
      %p271 = scmp.eq.s32.totalorder %s34, 1
      %p272 = por %p270, %p271
      %p274 = scmp.ne.s32.totalorder %s259, %s273
      %p275 = scmp.eq.s32.totalorder %s34, 0
      %p276 = por %p274, %p275
      %s277 = ssub.s32 %s28, %s35
      %p278 = scmp.eq.s32.totalorder %s277, 0
      %s280 = sadd.s32 %s279, 1
      %s281 = scalar_select %p278, %s279, %s280
      %p284 = pneg %p278
      %p285 = scmp.eq.s32.totalorder %s28, 1
      %p286 = por %p284, %p285
      %p287 = scmp.ne.s32.totalorder %s279, %s282
      %p288 = scmp.eq.s32.totalorder %s28, 0
      %p289 = por %p287, %p288
      %p290 = scmp.ne.s32.totalorder %s279, %s282
      %p291 = scmp.eq.s32.totalorder %s33, 1
      %p292 = por %p290, %p291
      %p293 = scmp.ne.s32.totalorder %s282, %s283
      %p294 = scmp.eq.s32.totalorder %s33, 0
      %p295 = por %p293, %p294
      %p296 = scmp.ne.s32.totalorder %s282, %s283
      %p297 = scmp.eq.s32.totalorder %s34, 1
      %p298 = por %p296, %p297
      %p300 = scmp.ne.s32.totalorder %s283, %s299
      %p301 = scmp.eq.s32.totalorder %s34, 0
      %p302 = por %p300, %p301
      %p303 = scmp.le.s32.totalorder 1, %s28
      %p304 = scmp.lt.s32.totalorder %s28, 3
      %p305 = pnand %p303, %p304
      %p306 = pneg %p305
      // Predicated region
      $region9: #{tpu_custom_call.1} parent=5 // pred_check
        _
      $region10: #{tpu_custom_call.1} parent=5 // pred_check_branch
        %308 = sbr.rel (%p305) target = $region12
      $region11: #{tpu_custom_call.1} parent=5 // pred_region
        %s309 = ssub.s32 %s28, 1
        // Predicated region
        $region13: #{tpu_custom_call.1} parent=11 // pred_check
          %p310 = pneg %p101
        $region14: #{tpu_custom_call.1} parent=11 // pred_check_branch
          %312 = sbr.rel (%p310) target = $region16
        $region15: #{tpu_custom_call.1} parent=11 // pred_region
          %s314 = ssub.s32 36864, 36864
          %315 = vsyncadd [#allocation6], %s314
          %s316 = sshll.u32 [#allocation5], 4
          %s317 = int_to_ptr.vmem [resolvable:$true] %s316
          %322 = dma.hbm_to_vmem [thread:$0]  %s2, 36864, %s317, [#allocation6], 384, 384, 24
        $region16: #{tpu_custom_call.1} parent=11 // pred_fallthru
          _
        // Predicated region
        $region17: #{tpu_custom_call.1} parent=11 // pred_check
          %p323 = pneg %p122
        $region18: #{tpu_custom_call.1} parent=11 // pred_check_branch
          %325 = sbr.rel (%p323) target = $region20
        $region19: #{tpu_custom_call.1} parent=11 // pred_region
          %s327 = ssub.s32 96, 96
          %328 = vsyncadd [#allocation6], %s327
          %s330 = sshll.u32 [#allocation7], 4
          %s331 = int_to_ptr.vmem [resolvable:$true] %s330
          %333 = dma.hbm_to_vmem [thread:$0]  %s3, 96, %s331, [#allocation6]
        $region20: #{tpu_custom_call.1} parent=11 // pred_fallthru
          _
        // Predicated region
        $region21: #{tpu_custom_call.1} parent=11 // pred_check
          %p334 = pneg %p143
        $region22: #{tpu_custom_call.1} parent=11 // pred_check_branch
          %336 = sbr.rel (%p334) target = $region24
        $region23: #{tpu_custom_call.1} parent=11 // pred_region
          %s338 = ssub.s32 128, 128
          %339 = vsyncadd [#allocation9], %s338
          %s341 = sshll.u32 [#allocation8], 4
          %s342 = int_to_ptr.vmem [resolvable:$true] %s341
          %344 = dma.hbm_to_vmem [thread:$0]  %s4, 128, %s342, [#allocation9]
        $region24: #{tpu_custom_call.1} parent=11 // pred_fallthru
          _
        // Predicated region
        $region25: #{tpu_custom_call.1} parent=11 // pred_check
          %p345 = pneg %p164
        $region26: #{tpu_custom_call.1} parent=11 // pred_check_branch
          %347 = sbr.rel (%p345) target = $region28
        $region27: #{tpu_custom_call.1} parent=11 // pred_region
          %s349 = ssub.s32 16, 16
          %350 = vsyncadd [#allocation9], %s349
          %s352 = sshll.u32 [#allocation10], 4
          %s353 = int_to_ptr.vmem [resolvable:$true] %s352
          %355 = dma.hbm_to_vmem [thread:$0]  %s5, 16, %s353, [#allocation9]
        $region28: #{tpu_custom_call.1} parent=11 // pred_fallthru
          _
        // Predicated region
        $region29: #{tpu_custom_call.1} parent=11 // pred_check
          %p356 = pneg %p185
        $region30: #{tpu_custom_call.1} parent=11 // pred_check_branch
          %358 = sbr.rel (%p356) target = $region32
        $region31: #{tpu_custom_call.1} parent=11 // pred_region
          %s360 = ssub.s32 6144, 6144
          %361 = vsyncadd [#allocation12], %s360
          %s362 = sshll.u32 [#allocation11], 4
          %s363 = int_to_ptr.vmem [resolvable:$true] %s362
          %368 = dma.hbm_to_vmem [thread:$0]  %s6, 6144, %s363, [#allocation12], 64, 64, 4
        $region32: #{tpu_custom_call.1} parent=11 // pred_fallthru
          _
        // Predicated region
        $region33: #{tpu_custom_call.1} parent=11 // pred_check
          %p369 = pneg %p206
        $region34: #{tpu_custom_call.1} parent=11 // pred_check_branch
          %371 = sbr.rel (%p369) target = $region36
        $region35: #{tpu_custom_call.1} parent=11 // pred_region
          %s373 = ssub.s32 512, 512
          %374 = vsyncadd [#allocation12], %s373
          %s375 = sshll.u32 [#allocation13], 4
          %s376 = int_to_ptr.vmem [resolvable:$true] %s375
          %381 = dma.hbm_to_vmem [thread:$0]  %s7, 512, %s376, [#allocation12], 64, 64, 4
        $region36: #{tpu_custom_call.1} parent=11 // pred_fallthru
          _
        // Predicated region
        $region37: #{tpu_custom_call.1} parent=11 // pred_check
          %p382 = pneg %p227
        $region38: #{tpu_custom_call.1} parent=11 // pred_check_branch
          %384 = sbr.rel (%p382) target = $region40
        $region39: #{tpu_custom_call.1} parent=11 // pred_region
          %s386 = ssub.s32 16, 16
          %387 = vsyncadd [#allocation15], %s386
          %s389 = sshll.u32 [#allocation14], 4
          %s390 = int_to_ptr.vmem [resolvable:$true] %s389
          %392 = dma.hbm_to_vmem [thread:$0]  %s8, 16, %s390, [#allocation15]
        $region40: #{tpu_custom_call.1} parent=11 // pred_fallthru
          _
        // Predicated region
        $region41: #{tpu_custom_call.1} parent=11 // pred_check
          %p393 = pneg %p248
        $region42: #{tpu_custom_call.1} parent=11 // pred_check_branch
          %395 = sbr.rel (%p393) target = $region44
        $region43: #{tpu_custom_call.1} parent=11 // pred_region
          %s397 = ssub.s32 1024, 1024
          %398 = vsyncadd [#allocation15], %s397
          %s399 = sshll.u32 [#allocation16], 4
          %s400 = int_to_ptr.vmem [resolvable:$true] %s399
          %405 = dma.hbm_to_vmem [thread:$0]  %s9, 1024, %s400, [#allocation15], 64, 64, 4
        $region44: #{tpu_custom_call.1} parent=11 // pred_fallthru
          _
        // Predicated region
        $region45: #{tpu_custom_call.1} parent=11 // pred_check
          %p406 = pneg %p269
        $region46: #{tpu_custom_call.1} parent=11 // pred_check_branch
          %408 = sbr.rel (%p406) target = $region48
        $region47: #{tpu_custom_call.1} parent=11 // pred_region
          %s410 = ssub.s32 16, 16
          %411 = vsyncadd [#allocation18], %s410
          %s413 = sshll.u32 [#allocation17], 4
          %s414 = int_to_ptr.vmem [resolvable:$true] %s413
          %416 = dma.hbm_to_vmem [thread:$0]  %s10, 16, %s414, [#allocation18]
        $region48: #{tpu_custom_call.1} parent=11 // pred_fallthru
          _
      $region12: #{tpu_custom_call.1} parent=5 // pred_fallthru
        _
      %p417 = scmp.lt.s32.totalorder %s28, 2
      // Predicated region
      $region49: #{tpu_custom_call.1} parent=5 // pred_check
        %p418 = pneg %p417
      $region50: #{tpu_custom_call.1} parent=5 // pred_check_branch
        %420 = sbr.rel (%p418) target = $region52
      $region51: #{tpu_custom_call.1} parent=5 // pred_region
        // Predicated region
        $region53: #{tpu_custom_call.1} parent=51 // pred_check
          %p421 = pneg %p48
        $region54: #{tpu_custom_call.1} parent=51 // pred_check_branch
          %423 = sbr.rel (%p421) target = $region56
        $region55: #{tpu_custom_call.1} parent=51 // pred_region
          %s424 = sand.u32 %s38, 1
          %s425 = scalar_lea.sflag [#allocation3], %s424
          %s426 = sand.u32 %s38, 1
          %s427 = smul.addr %s426, 48
          %s428 = scalar_lea.vmem [#allocation2], %s427
          %s430 = ssub.s32 768, 768
          %431 = vsyncadd %s425, %s430
          %s432 = smul.addr %s28, 6
          %s433 = smul.addr %s432, 128
          %s434 = scalar_lea.hbm %s0, %s433
          %s436 = sshll.u32 %s428, 4
          %s437 = int_to_ptr.vmem [resolvable:$true] %s436
          %439 = dma.hbm_to_vmem [thread:$0]  %s434, 768, %s437, %s425
        $region56: #{tpu_custom_call.1} parent=51 // pred_fallthru
          _
        // Predicated region
        $region57: #{tpu_custom_call.1} parent=51 // pred_check
          %p440 = pneg %p74
        $region58: #{tpu_custom_call.1} parent=51 // pred_check_branch
          %442 = sbr.rel (%p440) target = $region60
        $region59: #{tpu_custom_call.1} parent=51 // pred_region
          %p443 = scmp.lt.s32.totalorder %s28, 1
          %s444 = scalar_select %p443, %s28, 1
          %s445 = smul.addr %s444, 8
          %s446 = scalar_lea.vmem %s1, %s445
        $region60: #{tpu_custom_call.1} parent=51 // pred_fallthru
          _
      $region52: #{tpu_custom_call.1} parent=5 // pred_fallthru
        _
      %p447 = scmp.le.s32.totalorder 1, %s28
      %p448 = scmp.lt.s32.totalorder %s28, 3
      %p449 = pnand %p447, %p448
      %p450 = pneg %p449
      // Predicated region
      $region61: #{tpu_custom_call.1} parent=5 // pred_check
        _
      $region62: #{tpu_custom_call.1} parent=5 // pred_check_branch
        %452 = sbr.rel (%p449) target = $region64
      $region63: #{tpu_custom_call.1} parent=5 // pred_region
        %s453 = ssub.s32 %s28, 1
        %s454 = sand.u32 %s41, 1
        %s455 = scalar_lea.sflag [#allocation3], %s454
        %s456 = sand.u32 %s41, 1
        %s457 = smul.addr %s456, 48
        %s458 = scalar_lea.vmem [#allocation2], %s457
        // Predicated region
        $region65: #{tpu_custom_call.1} parent=63 // pred_check
          %p459 = pneg %p54
        $region66: #{tpu_custom_call.1} parent=63 // pred_check_branch
          %461 = sbr.rel (%p459) target = $region68
        $region67: #{tpu_custom_call.1} parent=63 // pred_region
          %462 = dma.done %s455, 768
        $region68: #{tpu_custom_call.1} parent=63 // pred_fallthru
          _
        // Predicated region
        $region69: #{tpu_custom_call.1} parent=63 // pred_check
          %p463 = pneg %p101
        $region70: #{tpu_custom_call.1} parent=63 // pred_check_branch
          %465 = sbr.rel (%p463) target = $region72
        $region71: #{tpu_custom_call.1} parent=63 // pred_region
          %466 = dma.done [#allocation6], 36864
        $region72: #{tpu_custom_call.1} parent=63 // pred_fallthru
          _
        // Predicated region
        $region73: #{tpu_custom_call.1} parent=63 // pred_check
          %p467 = pneg %p122
        $region74: #{tpu_custom_call.1} parent=63 // pred_check_branch
          %469 = sbr.rel (%p467) target = $region76
        $region75: #{tpu_custom_call.1} parent=63 // pred_region
          %470 = dma.done [#allocation6], 96
        $region76: #{tpu_custom_call.1} parent=63 // pred_fallthru
          _
        // Predicated region
        $region77: #{tpu_custom_call.1} parent=63 // pred_check
          %p471 = pneg %p143
        $region78: #{tpu_custom_call.1} parent=63 // pred_check_branch
          %473 = sbr.rel (%p471) target = $region80
        $region79: #{tpu_custom_call.1} parent=63 // pred_region
          %474 = dma.done [#allocation9], 128
        $region80: #{tpu_custom_call.1} parent=63 // pred_fallthru
          _
        // Predicated region
        $region81: #{tpu_custom_call.1} parent=63 // pred_check
          %p475 = pneg %p164
        $region82: #{tpu_custom_call.1} parent=63 // pred_check_branch
          %477 = sbr.rel (%p475) target = $region84
        $region83: #{tpu_custom_call.1} parent=63 // pred_region
          %478 = dma.done [#allocation9], 16
        $region84: #{tpu_custom_call.1} parent=63 // pred_fallthru
          _
        // Predicated region
        $region85: #{tpu_custom_call.1} parent=63 // pred_check
          %p479 = pneg %p185
        $region86: #{tpu_custom_call.1} parent=63 // pred_check_branch
          %481 = sbr.rel (%p479) target = $region88
        $region87: #{tpu_custom_call.1} parent=63 // pred_region
          %482 = dma.done [#allocation12], 6144
        $region88: #{tpu_custom_call.1} parent=63 // pred_fallthru
          _
        // Predicated region
        $region89: #{tpu_custom_call.1} parent=63 // pred_check
          %p483 = pneg %p206
        $region90: #{tpu_custom_call.1} parent=63 // pred_check_branch
          %485 = sbr.rel (%p483) target = $region92
        $region91: #{tpu_custom_call.1} parent=63 // pred_region
          %486 = dma.done [#allocation12], 512
        $region92: #{tpu_custom_call.1} parent=63 // pred_fallthru
          _
        // Predicated region
        $region93: #{tpu_custom_call.1} parent=63 // pred_check
          %p487 = pneg %p227
        $region94: #{tpu_custom_call.1} parent=63 // pred_check_branch
          %489 = sbr.rel (%p487) target = $region96
        $region95: #{tpu_custom_call.1} parent=63 // pred_region
          %490 = dma.done [#allocation15], 16
        $region96: #{tpu_custom_call.1} parent=63 // pred_fallthru
          _
        // Predicated region
        $region97: #{tpu_custom_call.1} parent=63 // pred_check
          %p491 = pneg %p248
        $region98: #{tpu_custom_call.1} parent=63 // pred_check_branch
          %493 = sbr.rel (%p491) target = $region100
        $region99: #{tpu_custom_call.1} parent=63 // pred_region
          %494 = dma.done [#allocation15], 1024
        $region100: #{tpu_custom_call.1} parent=63 // pred_fallthru
          _
        // Predicated region
        $region101: #{tpu_custom_call.1} parent=63 // pred_check
          %p495 = pneg %p269
        $region102: #{tpu_custom_call.1} parent=63 // pred_check_branch
          %497 = sbr.rel (%p495) target = $region104
        $region103: #{tpu_custom_call.1} parent=63 // pred_region
          %498 = dma.done [#allocation18], 16
        $region104: #{tpu_custom_call.1} parent=63 // pred_fallthru
          _
        %s499 = sand.u32 %s41, 1
        %s500 = scalar_lea.sflag [#allocation3], %s499
        %s501 = sand.u32 %s41, 1
        %s502 = smul.addr %s501, 48
        %s503 = scalar_lea.vmem [#allocation2], %s502
        %p504 = pneg %p54
        %p505 = pneg %p51
        %p506 = scmp.lt.s32.totalorder %s33, 1
        %s507 = scalar_select %p506, %s33, 1
        %s508 = smul.addr %s507, 8
        %s509 = scalar_lea.vmem %s1, %s508
        %p510 = pneg %p80
        %p511 = pneg %p77
        %p512 = pneg %p101
        %p513 = pneg %p98
        %p514 = pneg %p122
        %p515 = pneg %p119
        %p516 = pneg %p143
        %p517 = pneg %p140
        %p518 = pneg %p164
        %p519 = pneg %p161
        %p520 = pneg %p185
        %p521 = pneg %p182
        %p522 = pneg %p206
        %p523 = pneg %p203
        %p524 = pneg %p227
        %p525 = pneg %p224
        %p526 = pneg %p248
        %p527 = pneg %p245
        %p528 = pneg %p269
        %p529 = pneg %p266
        %p530 = pneg %p295
        %p531 = pneg %p292
        %s532 = sand.u32 %s282, 1
        %s533 = scalar_lea.sflag [#allocation4], %s532
        %s534 = sand.u32 %s282, 1
        %s535 = smul.addr %s534, 8
        %s536 = scalar_lea.vmem [#allocation19], %s535
        %p537 = scmp.lt.s32.totalorder %s33, 1
        %s538 = scalar_select %p537, %s33, 1
        %s539 = smul.addr %s538, 8
        %s540 = scalar_lea.vmem %s1, %s539
        %v542 = vld [vmem:[%s458] sm:$0xff]
        %v543 = vld [vmem:[%s458 + $0x8] sm:$0xff]
        %v544 = vld [vmem:[%s458 + $0x10] sm:$0xff]
        %v545 = vld [vmem:[%s458 + $0x18] sm:$0xff]
        %v546 = vld [vmem:[%s458 + $0x20] sm:$0xff]
        %v547 = vld [vmem:[%s458 + $0x28] sm:$0xff]
        %v548 = vpack.c.bf16 %v542, %v542
        %v549 = vpack.c.bf16 %v543, %v543
        %v550 = vpack.c.bf16 %v544, %v544
        %v551 = vpack.c.bf16 %v545, %v545
        %v552 = vpack.c.bf16 %v546, %v546
        %v553 = vpack.c.bf16 %v547, %v547
        %v554 = vld [vmem:[#allocation5] sm:$0xff]
        %v555 = vld [vmem:[#allocation5 + $0x8] sm:$0xff]
        %v556 = vld [vmem:[#allocation5 + $0x10] sm:$0xff]
        %v557 = vld [vmem:[#allocation5 + $0x18] sm:$0xff]
        %v558 = vld [vmem:[#allocation5 + $0x20] sm:$0xff]
        %v559 = vld [vmem:[#allocation5 + $0x28] sm:$0xff]
        %v560 = vld [vmem:[#allocation5 + $0x30] sm:$0xff]
        %v561 = vld [vmem:[#allocation5 + $0x38] sm:$0xff]
        %v562 = vld [vmem:[#allocation5 + $0x40] sm:$0xff]
        %v563 = vld [vmem:[#allocation5 + $0x48] sm:$0xff]
        %v564 = vld [vmem:[#allocation5 + $0x50] sm:$0xff]
        %v565 = vld [vmem:[#allocation5 + $0x58] sm:$0xff]
        %v566 = vld [vmem:[#allocation5 + $0x60] sm:$0xff]
        %v567 = vld [vmem:[#allocation5 + $0x68] sm:$0xff]
        %v568 = vld [vmem:[#allocation5 + $0x70] sm:$0xff]
        %v569 = vld [vmem:[#allocation5 + $0x78] sm:$0xff]
        %v570 = vld [vmem:[#allocation5 + $0x80] sm:$0xff]
        %v571 = vld [vmem:[#allocation5 + $0x88] sm:$0xff]
        %v572 = vld [vmem:[#allocation5 + $0x90] sm:$0xff]
        %v573 = vld [vmem:[#allocation5 + $0x98] sm:$0xff]
        %v574 = vld [vmem:[#allocation5 + $0xa0] sm:$0xff]
        %v575 = vld [vmem:[#allocation5 + $0xa8] sm:$0xff]
        %v576 = vld [vmem:[#allocation5 + $0xb0] sm:$0xff]
        %v577 = vld [vmem:[#allocation5 + $0xb8] sm:$0xff]
        %v578 = vld [vmem:[#allocation5 + $0xc0] sm:$0xff]
        %v579 = vld [vmem:[#allocation5 + $0xc8] sm:$0xff]
        %v580 = vld [vmem:[#allocation5 + $0xd0] sm:$0xff]
        %v581 = vld [vmem:[#allocation5 + $0xd8] sm:$0xff]
        %v582 = vld [vmem:[#allocation5 + $0xe0] sm:$0xff]
        %v583 = vld [vmem:[#allocation5 + $0xe8] sm:$0xff]
        %v584 = vld [vmem:[#allocation5 + $0xf0] sm:$0xff]
        %v585 = vld [vmem:[#allocation5 + $0xf8] sm:$0xff]
        %v586 = vld [vmem:[#allocation5 + $0x100] sm:$0xff]
        %v587 = vld [vmem:[#allocation5 + $0x108] sm:$0xff]
        %v588 = vld [vmem:[#allocation5 + $0x110] sm:$0xff]
        %v589 = vld [vmem:[#allocation5 + $0x118] sm:$0xff]
        %v590 = vld [vmem:[#allocation5 + $0x120] sm:$0xff]
        %v591 = vld [vmem:[#allocation5 + $0x128] sm:$0xff]
        %v592 = vld [vmem:[#allocation5 + $0x130] sm:$0xff]
        %v593 = vld [vmem:[#allocation5 + $0x138] sm:$0xff]
        %v594 = vld [vmem:[#allocation5 + $0x140] sm:$0xff]
        %v595 = vld [vmem:[#allocation5 + $0x148] sm:$0xff]
        %v596 = vld [vmem:[#allocation5 + $0x150] sm:$0xff]
        %v597 = vld [vmem:[#allocation5 + $0x158] sm:$0xff]
        %v598 = vld [vmem:[#allocation5 + $0x160] sm:$0xff]
        %v599 = vld [vmem:[#allocation5 + $0x168] sm:$0xff]
        %v600 = vld [vmem:[#allocation5 + $0x170] sm:$0xff]
        %v601 = vld [vmem:[#allocation5 + $0x178] sm:$0xff]
        %v602 = vld [vmem:[#allocation5 + $0x180] sm:$0xff]
        %v603 = vld [vmem:[#allocation5 + $0x188] sm:$0xff]
        %v604 = vld [vmem:[#allocation5 + $0x190] sm:$0xff]
        %v605 = vld [vmem:[#allocation5 + $0x198] sm:$0xff]
        %v606 = vld [vmem:[#allocation5 + $0x1a0] sm:$0xff]
        %v607 = vld [vmem:[#allocation5 + $0x1a8] sm:$0xff]
        %v608 = vld [vmem:[#allocation5 + $0x1b0] sm:$0xff]
        %v609 = vld [vmem:[#allocation5 + $0x1b8] sm:$0xff]
        %v610 = vld [vmem:[#allocation5 + $0x1c0] sm:$0xff]
        %v611 = vld [vmem:[#allocation5 + $0x1c8] sm:$0xff]
        %v612 = vld [vmem:[#allocation5 + $0x1d0] sm:$0xff]
        %v613 = vld [vmem:[#allocation5 + $0x1d8] sm:$0xff]
        %v614 = vld [vmem:[#allocation5 + $0x1e0] sm:$0xff]
        %v615 = vld [vmem:[#allocation5 + $0x1e8] sm:$0xff]
        %v616 = vld [vmem:[#allocation5 + $0x1f0] sm:$0xff]
        %v617 = vld [vmem:[#allocation5 + $0x1f8] sm:$0xff]
        %v618 = vld [vmem:[#allocation5 + $0x200] sm:$0xff]
        %v619 = vld [vmem:[#allocation5 + $0x208] sm:$0xff]
        %v620 = vld [vmem:[#allocation5 + $0x210] sm:$0xff]
        %v621 = vld [vmem:[#allocation5 + $0x218] sm:$0xff]
        %v622 = vld [vmem:[#allocation5 + $0x220] sm:$0xff]
        %v623 = vld [vmem:[#allocation5 + $0x228] sm:$0xff]
        %v624 = vld [vmem:[#allocation5 + $0x230] sm:$0xff]
        %v625 = vld [vmem:[#allocation5 + $0x238] sm:$0xff]
        %v626 = vld [vmem:[#allocation5 + $0x240] sm:$0xff]
        %v627 = vld [vmem:[#allocation5 + $0x248] sm:$0xff]
        %v628 = vld [vmem:[#allocation5 + $0x250] sm:$0xff]
        %v629 = vld [vmem:[#allocation5 + $0x258] sm:$0xff]
        %v630 = vld [vmem:[#allocation5 + $0x260] sm:$0xff]
        %v631 = vld [vmem:[#allocation5 + $0x268] sm:$0xff]
        %v632 = vld [vmem:[#allocation5 + $0x270] sm:$0xff]
        %v633 = vld [vmem:[#allocation5 + $0x278] sm:$0xff]
        %v634 = vld [vmem:[#allocation5 + $0x280] sm:$0xff]
        %v635 = vld [vmem:[#allocation5 + $0x288] sm:$0xff]
        %v636 = vld [vmem:[#allocation5 + $0x290] sm:$0xff]
        %v637 = vld [vmem:[#allocation5 + $0x298] sm:$0xff]
        %v638 = vld [vmem:[#allocation5 + $0x2a0] sm:$0xff]
        %v639 = vld [vmem:[#allocation5 + $0x2a8] sm:$0xff]
        %v640 = vld [vmem:[#allocation5 + $0x2b0] sm:$0xff]
        %v641 = vld [vmem:[#allocation5 + $0x2b8] sm:$0xff]
        %v642 = vld [vmem:[#allocation5 + $0x2c0] sm:$0xff]
        %v643 = vld [vmem:[#allocation5 + $0x2c8] sm:$0xff]
        %v644 = vld [vmem:[#allocation5 + $0x2d0] sm:$0xff]
        %v645 = vld [vmem:[#allocation5 + $0x2d8] sm:$0xff]
        %v646 = vld [vmem:[#allocation5 + $0x2e0] sm:$0xff]
        %v647 = vld [vmem:[#allocation5 + $0x2e8] sm:$0xff]
        %v648 = vld [vmem:[#allocation5 + $0x2f0] sm:$0xff]
        %v649 = vld [vmem:[#allocation5 + $0x2f8] sm:$0xff]
        %v650 = vld [vmem:[#allocation5 + $0x300] sm:$0xff]
        %v651 = vld [vmem:[#allocation5 + $0x308] sm:$0xff]
        %v652 = vld [vmem:[#allocation5 + $0x310] sm:$0xff]
        %v653 = vld [vmem:[#allocation5 + $0x318] sm:$0xff]
        %v654 = vld [vmem:[#allocation5 + $0x320] sm:$0xff]
        %v655 = vld [vmem:[#allocation5 + $0x328] sm:$0xff]
        %v656 = vld [vmem:[#allocation5 + $0x330] sm:$0xff]
        %v657 = vld [vmem:[#allocation5 + $0x338] sm:$0xff]
        %v658 = vld [vmem:[#allocation5 + $0x340] sm:$0xff]
        %v659 = vld [vmem:[#allocation5 + $0x348] sm:$0xff]
        %v660 = vld [vmem:[#allocation5 + $0x350] sm:$0xff]
        %v661 = vld [vmem:[#allocation5 + $0x358] sm:$0xff]
        %v662 = vld [vmem:[#allocation5 + $0x360] sm:$0xff]
        %v663 = vld [vmem:[#allocation5 + $0x368] sm:$0xff]
        %v664 = vld [vmem:[#allocation5 + $0x370] sm:$0xff]
        %v665 = vld [vmem:[#allocation5 + $0x378] sm:$0xff]
        %v666 = vld [vmem:[#allocation5 + $0x380] sm:$0xff]
        %v667 = vld [vmem:[#allocation5 + $0x388] sm:$0xff]
        %v668 = vld [vmem:[#allocation5 + $0x390] sm:$0xff]
        %v669 = vld [vmem:[#allocation5 + $0x398] sm:$0xff]
        %v670 = vld [vmem:[#allocation5 + $0x3a0] sm:$0xff]
        %v671 = vld [vmem:[#allocation5 + $0x3a8] sm:$0xff]
        %v672 = vld [vmem:[#allocation5 + $0x3b0] sm:$0xff]
        %v673 = vld [vmem:[#allocation5 + $0x3b8] sm:$0xff]
        %v674 = vld [vmem:[#allocation5 + $0x3c0] sm:$0xff]
        %v675 = vld [vmem:[#allocation5 + $0x3c8] sm:$0xff]
        %v676 = vld [vmem:[#allocation5 + $0x3d0] sm:$0xff]
        %v677 = vld [vmem:[#allocation5 + $0x3d8] sm:$0xff]
        %v678 = vld [vmem:[#allocation5 + $0x3e0] sm:$0xff]
        %v679 = vld [vmem:[#allocation5 + $0x3e8] sm:$0xff]
        %v680 = vld [vmem:[#allocation5 + $0x3f0] sm:$0xff]
        %v681 = vld [vmem:[#allocation5 + $0x3f8] sm:$0xff]
        %v682 = vld [vmem:[#allocation5 + $0x400] sm:$0xff]
        %v683 = vld [vmem:[#allocation5 + $0x408] sm:$0xff]
        %v684 = vld [vmem:[#allocation5 + $0x410] sm:$0xff]
        %v685 = vld [vmem:[#allocation5 + $0x418] sm:$0xff]
        %v686 = vld [vmem:[#allocation5 + $0x420] sm:$0xff]
        %v687 = vld [vmem:[#allocation5 + $0x428] sm:$0xff]
        %v688 = vld [vmem:[#allocation5 + $0x430] sm:$0xff]
        %v689 = vld [vmem:[#allocation5 + $0x438] sm:$0xff]
        %v690 = vld [vmem:[#allocation5 + $0x440] sm:$0xff]
        %v691 = vld [vmem:[#allocation5 + $0x448] sm:$0xff]
        %v692 = vld [vmem:[#allocation5 + $0x450] sm:$0xff]
        %v693 = vld [vmem:[#allocation5 + $0x458] sm:$0xff]
        %v694 = vld [vmem:[#allocation5 + $0x460] sm:$0xff]
        %v695 = vld [vmem:[#allocation5 + $0x468] sm:$0xff]
        %v696 = vld [vmem:[#allocation5 + $0x470] sm:$0xff]
        %v697 = vld [vmem:[#allocation5 + $0x478] sm:$0xff]
        %v698 = vld [vmem:[#allocation5 + $0x480] sm:$0xff]
        %v699 = vld [vmem:[#allocation5 + $0x488] sm:$0xff]
        %v700 = vld [vmem:[#allocation5 + $0x490] sm:$0xff]
        %v701 = vld [vmem:[#allocation5 + $0x498] sm:$0xff]
        %v702 = vld [vmem:[#allocation5 + $0x4a0] sm:$0xff]
        %v703 = vld [vmem:[#allocation5 + $0x4a8] sm:$0xff]
        %v704 = vld [vmem:[#allocation5 + $0x4b0] sm:$0xff]
        %v705 = vld [vmem:[#allocation5 + $0x4b8] sm:$0xff]
        %v706 = vld [vmem:[#allocation5 + $0x4c0] sm:$0xff]
        %v707 = vld [vmem:[#allocation5 + $0x4c8] sm:$0xff]
        %v708 = vld [vmem:[#allocation5 + $0x4d0] sm:$0xff]
        %v709 = vld [vmem:[#allocation5 + $0x4d8] sm:$0xff]
        %v710 = vld [vmem:[#allocation5 + $0x4e0] sm:$0xff]
        %v711 = vld [vmem:[#allocation5 + $0x4e8] sm:$0xff]
        %v712 = vld [vmem:[#allocation5 + $0x4f0] sm:$0xff]
        %v713 = vld [vmem:[#allocation5 + $0x4f8] sm:$0xff]
        %v714 = vld [vmem:[#allocation5 + $0x500] sm:$0xff]
        %v715 = vld [vmem:[#allocation5 + $0x508] sm:$0xff]
        %v716 = vld [vmem:[#allocation5 + $0x510] sm:$0xff]
        %v717 = vld [vmem:[#allocation5 + $0x518] sm:$0xff]
        %v718 = vld [vmem:[#allocation5 + $0x520] sm:$0xff]
        %v719 = vld [vmem:[#allocation5 + $0x528] sm:$0xff]
        %v720 = vld [vmem:[#allocation5 + $0x530] sm:$0xff]
        %v721 = vld [vmem:[#allocation5 + $0x538] sm:$0xff]
        %v722 = vld [vmem:[#allocation5 + $0x540] sm:$0xff]
        %v723 = vld [vmem:[#allocation5 + $0x548] sm:$0xff]
        %v724 = vld [vmem:[#allocation5 + $0x550] sm:$0xff]
        %v725 = vld [vmem:[#allocation5 + $0x558] sm:$0xff]
        %v726 = vld [vmem:[#allocation5 + $0x560] sm:$0xff]
        %v727 = vld [vmem:[#allocation5 + $0x568] sm:$0xff]
        %v728 = vld [vmem:[#allocation5 + $0x570] sm:$0xff]
        %v729 = vld [vmem:[#allocation5 + $0x578] sm:$0xff]
        %v730 = vld [vmem:[#allocation5 + $0x580] sm:$0xff]
        %v731 = vld [vmem:[#allocation5 + $0x588] sm:$0xff]
        %v732 = vld [vmem:[#allocation5 + $0x590] sm:$0xff]
        %v733 = vld [vmem:[#allocation5 + $0x598] sm:$0xff]
        %v734 = vld [vmem:[#allocation5 + $0x5a0] sm:$0xff]
        %v735 = vld [vmem:[#allocation5 + $0x5a8] sm:$0xff]
        %v736 = vld [vmem:[#allocation5 + $0x5b0] sm:$0xff]
        %v737 = vld [vmem:[#allocation5 + $0x5b8] sm:$0xff]
        %v738 = vld [vmem:[#allocation5 + $0x5c0] sm:$0xff]
        %v739 = vld [vmem:[#allocation5 + $0x5c8] sm:$0xff]
        %v740 = vld [vmem:[#allocation5 + $0x5d0] sm:$0xff]
        %v741 = vld [vmem:[#allocation5 + $0x5d8] sm:$0xff]
        %v742 = vld [vmem:[#allocation5 + $0x5e0] sm:$0xff]
        %v743 = vld [vmem:[#allocation5 + $0x5e8] sm:$0xff]
        %v744 = vld [vmem:[#allocation5 + $0x5f0] sm:$0xff]
        %v745 = vld [vmem:[#allocation5 + $0x5f8] sm:$0xff]
        %v746 = vld [vmem:[#allocation5 + $0x600] sm:$0xff]
        %v747 = vld [vmem:[#allocation5 + $0x608] sm:$0xff]
        %v748 = vld [vmem:[#allocation5 + $0x610] sm:$0xff]
        %v749 = vld [vmem:[#allocation5 + $0x618] sm:$0xff]
        %v750 = vld [vmem:[#allocation5 + $0x620] sm:$0xff]
        %v751 = vld [vmem:[#allocation5 + $0x628] sm:$0xff]
        %v752 = vld [vmem:[#allocation5 + $0x630] sm:$0xff]
        %v753 = vld [vmem:[#allocation5 + $0x638] sm:$0xff]
        %v754 = vld [vmem:[#allocation5 + $0x640] sm:$0xff]
        %v755 = vld [vmem:[#allocation5 + $0x648] sm:$0xff]
        %v756 = vld [vmem:[#allocation5 + $0x650] sm:$0xff]
        %v757 = vld [vmem:[#allocation5 + $0x658] sm:$0xff]
        %v758 = vld [vmem:[#allocation5 + $0x660] sm:$0xff]
        %v759 = vld [vmem:[#allocation5 + $0x668] sm:$0xff]
        %v760 = vld [vmem:[#allocation5 + $0x670] sm:$0xff]
        %v761 = vld [vmem:[#allocation5 + $0x678] sm:$0xff]
        %v762 = vld [vmem:[#allocation5 + $0x680] sm:$0xff]
        %v763 = vld [vmem:[#allocation5 + $0x688] sm:$0xff]
        %v764 = vld [vmem:[#allocation5 + $0x690] sm:$0xff]
        %v765 = vld [vmem:[#allocation5 + $0x698] sm:$0xff]
        %v766 = vld [vmem:[#allocation5 + $0x6a0] sm:$0xff]
        %v767 = vld [vmem:[#allocation5 + $0x6a8] sm:$0xff]
        %v768 = vld [vmem:[#allocation5 + $0x6b0] sm:$0xff]
        %v769 = vld [vmem:[#allocation5 + $0x6b8] sm:$0xff]
        %v770 = vld [vmem:[#allocation5 + $0x6c0] sm:$0xff]
        %v771 = vld [vmem:[#allocation5 + $0x6c8] sm:$0xff]
        %v772 = vld [vmem:[#allocation5 + $0x6d0] sm:$0xff]
        %v773 = vld [vmem:[#allocation5 + $0x6d8] sm:$0xff]
        %v774 = vld [vmem:[#allocation5 + $0x6e0] sm:$0xff]
        %v775 = vld [vmem:[#allocation5 + $0x6e8] sm:$0xff]
        %v776 = vld [vmem:[#allocation5 + $0x6f0] sm:$0xff]
        %v777 = vld [vmem:[#allocation5 + $0x6f8] sm:$0xff]
        %v778 = vld [vmem:[#allocation5 + $0x700] sm:$0xff]
        %v779 = vld [vmem:[#allocation5 + $0x708] sm:$0xff]
        %v780 = vld [vmem:[#allocation5 + $0x710] sm:$0xff]
        %v781 = vld [vmem:[#allocation5 + $0x718] sm:$0xff]
        %v782 = vld [vmem:[#allocation5 + $0x720] sm:$0xff]
        %v783 = vld [vmem:[#allocation5 + $0x728] sm:$0xff]
        %v784 = vld [vmem:[#allocation5 + $0x730] sm:$0xff]
        %v785 = vld [vmem:[#allocation5 + $0x738] sm:$0xff]
        %v786 = vld [vmem:[#allocation5 + $0x740] sm:$0xff]
        %v787 = vld [vmem:[#allocation5 + $0x748] sm:$0xff]
        %v788 = vld [vmem:[#allocation5 + $0x750] sm:$0xff]
        %v789 = vld [vmem:[#allocation5 + $0x758] sm:$0xff]
        %v790 = vld [vmem:[#allocation5 + $0x760] sm:$0xff]
        %v791 = vld [vmem:[#allocation5 + $0x768] sm:$0xff]
        %v792 = vld [vmem:[#allocation5 + $0x770] sm:$0xff]
        %v793 = vld [vmem:[#allocation5 + $0x778] sm:$0xff]
        %v794 = vld [vmem:[#allocation5 + $0x780] sm:$0xff]
        %v795 = vld [vmem:[#allocation5 + $0x788] sm:$0xff]
        %v796 = vld [vmem:[#allocation5 + $0x790] sm:$0xff]
        %v797 = vld [vmem:[#allocation5 + $0x798] sm:$0xff]
        %v798 = vld [vmem:[#allocation5 + $0x7a0] sm:$0xff]
        %v799 = vld [vmem:[#allocation5 + $0x7a8] sm:$0xff]
        %v800 = vld [vmem:[#allocation5 + $0x7b0] sm:$0xff]
        %v801 = vld [vmem:[#allocation5 + $0x7b8] sm:$0xff]
        %v802 = vld [vmem:[#allocation5 + $0x7c0] sm:$0xff]
        %v803 = vld [vmem:[#allocation5 + $0x7c8] sm:$0xff]
        %v804 = vld [vmem:[#allocation5 + $0x7d0] sm:$0xff]
        %v805 = vld [vmem:[#allocation5 + $0x7d8] sm:$0xff]
        %v806 = vld [vmem:[#allocation5 + $0x7e0] sm:$0xff]
        %v807 = vld [vmem:[#allocation5 + $0x7e8] sm:$0xff]
        %v808 = vld [vmem:[#allocation5 + $0x7f0] sm:$0xff]
        %v809 = vld [vmem:[#allocation5 + $0x7f8] sm:$0xff]
        %v810 = vld [vmem:[#allocation5 + $0x800] sm:$0xff]
        %v811 = vld [vmem:[#allocation5 + $0x808] sm:$0xff]
        %v812 = vld [vmem:[#allocation5 + $0x810] sm:$0xff]
        %v813 = vld [vmem:[#allocation5 + $0x818] sm:$0xff]
        %v814 = vld [vmem:[#allocation5 + $0x820] sm:$0xff]
        %v815 = vld [vmem:[#allocation5 + $0x828] sm:$0xff]
        %v816 = vld [vmem:[#allocation5 + $0x830] sm:$0xff]
        %v817 = vld [vmem:[#allocation5 + $0x838] sm:$0xff]
        %v818 = vld [vmem:[#allocation5 + $0x840] sm:$0xff]
        %v819 = vld [vmem:[#allocation5 + $0x848] sm:$0xff]
        %v820 = vld [vmem:[#allocation5 + $0x850] sm:$0xff]
        %v821 = vld [vmem:[#allocation5 + $0x858] sm:$0xff]
        %v822 = vld [vmem:[#allocation5 + $0x860] sm:$0xff]
        %v823 = vld [vmem:[#allocation5 + $0x868] sm:$0xff]
        %v824 = vld [vmem:[#allocation5 + $0x870] sm:$0xff]
        %v825 = vld [vmem:[#allocation5 + $0x878] sm:$0xff]
        %v826 = vld [vmem:[#allocation5 + $0x880] sm:$0xff]
        %v827 = vld [vmem:[#allocation5 + $0x888] sm:$0xff]
        %v828 = vld [vmem:[#allocation5 + $0x890] sm:$0xff]
        %v829 = vld [vmem:[#allocation5 + $0x898] sm:$0xff]
        %v830 = vld [vmem:[#allocation5 + $0x8a0] sm:$0xff]
        %v831 = vld [vmem:[#allocation5 + $0x8a8] sm:$0xff]
        %v832 = vld [vmem:[#allocation5 + $0x8b0] sm:$0xff]
        %v833 = vld [vmem:[#allocation5 + $0x8b8] sm:$0xff]
        %v834 = vld [vmem:[#allocation5 + $0x8c0] sm:$0xff]
        %v835 = vld [vmem:[#allocation5 + $0x8c8] sm:$0xff]
        %v836 = vld [vmem:[#allocation5 + $0x8d0] sm:$0xff]
        %v837 = vld [vmem:[#allocation5 + $0x8d8] sm:$0xff]
        %v838 = vld [vmem:[#allocation5 + $0x8e0] sm:$0xff]
        %v839 = vld [vmem:[#allocation5 + $0x8e8] sm:$0xff]
        %v840 = vld [vmem:[#allocation5 + $0x8f0] sm:$0xff]
        %v841 = vld [vmem:[#allocation5 + $0x8f8] sm:$0xff]
        %v842 = vld [vmem:[#allocation7] sm:$0x3f]
        %v844 = vlaneseq
        %v845 = vshrl.u32 %v844, 7
        %v846 = vsub.s32 0, %v845
        %v847 = vrot.slane %v842, %v846
        %v848 = vlaneseq
        %v849 = vshrl.u32 %v848, 7
        %v850 = vsub.s32 1, %v849
        %v851 = vrot.slane %v842, %v850
        %v852 = vlaneseq
        %v853 = vshrl.u32 %v852, 7
        %v854 = vsub.s32 2, %v853
        %v855 = vrot.slane %v842, %v854
        %v856 = vlaneseq
        %v857 = vshrl.u32 %v856, 7
        %v858 = vsub.s32 3, %v857
        %v859 = vrot.slane %v842, %v858
        %v860 = vlaneseq
        %v861 = vshrl.u32 %v860, 7
        %v862 = vsub.s32 4, %v861
        %v863 = vrot.slane %v842, %v862
        %v864 = vlaneseq
        %v865 = vshrl.u32 %v864, 7
        %v866 = vsub.s32 5, %v865
        %v867 = vrot.slane %v842, %v866
        %v1162 = vunpack.c.l.b16 %v554
        %v1163 = vunpack.c.h.b16 %v554
        %v1164 = vunpack.c.l.b16 %v555
        %v1165 = vunpack.c.h.b16 %v555
        %v1166 = vunpack.c.l.b16 %v556
        %v1167 = vunpack.c.h.b16 %v556
        %v1168 = vunpack.c.l.b16 %v557
        %v1169 = vunpack.c.h.b16 %v557
        %v1170 = vunpack.c.l.b16 %v558
        %v1171 = vunpack.c.h.b16 %v558
        %v1172 = vunpack.c.l.b16 %v559
        %v1173 = vunpack.c.h.b16 %v559
        %v1174 = vunpack.c.l.b16 %v560
        %v1175 = vunpack.c.h.b16 %v560
        %v1176 = vunpack.c.l.b16 %v561
        %v1177 = vunpack.c.h.b16 %v561
        %v1178 = vunpack.c.l.b16 %v562
        %v1179 = vunpack.c.h.b16 %v562
        %v1180 = vunpack.c.l.b16 %v563
        %v1181 = vunpack.c.h.b16 %v563
        %v1182 = vunpack.c.l.b16 %v564
        %v1183 = vunpack.c.h.b16 %v564
        %v1184 = vunpack.c.l.b16 %v565
        %v1185 = vunpack.c.h.b16 %v565
        %v1186 = vunpack.c.l.b16 %v566
        %v1187 = vunpack.c.h.b16 %v566
        %v1188 = vunpack.c.l.b16 %v567
        %v1189 = vunpack.c.h.b16 %v567
        %v1190 = vunpack.c.l.b16 %v568
        %v1191 = vunpack.c.h.b16 %v568
        %v1192 = vunpack.c.l.b16 %v569
        %v1193 = vunpack.c.h.b16 %v569
        %v1194 = vunpack.c.l.b16 %v570
        %v1195 = vunpack.c.h.b16 %v570
        %v1196 = vunpack.c.l.b16 %v571
        %v1197 = vunpack.c.h.b16 %v571
        %v1198 = vunpack.c.l.b16 %v572
        %v1199 = vunpack.c.h.b16 %v572
        %v1200 = vunpack.c.l.b16 %v573
        %v1201 = vunpack.c.h.b16 %v573
        %v1202 = vunpack.c.l.b16 %v574
        %v1203 = vunpack.c.h.b16 %v574
        %v1204 = vunpack.c.l.b16 %v575
        %v1205 = vunpack.c.h.b16 %v575
        %v1206 = vunpack.c.l.b16 %v576
        %v1207 = vunpack.c.h.b16 %v576
        %v1208 = vunpack.c.l.b16 %v577
        %v1209 = vunpack.c.h.b16 %v577
        %v1210 = vunpack.c.l.b16 %v578
        %v1211 = vunpack.c.h.b16 %v578
        %v1212 = vunpack.c.l.b16 %v579
        %v1213 = vunpack.c.h.b16 %v579
        %v1214 = vunpack.c.l.b16 %v580
        %v1215 = vunpack.c.h.b16 %v580
        %v1216 = vunpack.c.l.b16 %v581
        %v1217 = vunpack.c.h.b16 %v581
        %v1218 = vunpack.c.l.b16 %v582
        %v1219 = vunpack.c.h.b16 %v582
        %v1220 = vunpack.c.l.b16 %v583
        %v1221 = vunpack.c.h.b16 %v583
        %v1222 = vunpack.c.l.b16 %v584
        %v1223 = vunpack.c.h.b16 %v584
        %v1224 = vunpack.c.l.b16 %v585
        %v1225 = vunpack.c.h.b16 %v585
        %v1226 = vunpack.c.l.b16 %v586
        %v1227 = vunpack.c.h.b16 %v586
        %v1228 = vunpack.c.l.b16 %v587
        %v1229 = vunpack.c.h.b16 %v587
        %v1230 = vunpack.c.l.b16 %v588
        %v1231 = vunpack.c.h.b16 %v588
        %v1232 = vunpack.c.l.b16 %v589
        %v1233 = vunpack.c.h.b16 %v589
        %v1234 = vunpack.c.l.b16 %v590
        %v1235 = vunpack.c.h.b16 %v590
        %v1236 = vunpack.c.l.b16 %v591
        %v1237 = vunpack.c.h.b16 %v591
        %v1238 = vunpack.c.l.b16 %v592
        %v1239 = vunpack.c.h.b16 %v592
        %v1240 = vunpack.c.l.b16 %v593
        %v1241 = vunpack.c.h.b16 %v593
        %v1242 = vunpack.c.l.b16 %v594
        %v1243 = vunpack.c.h.b16 %v594
        %v1244 = vunpack.c.l.b16 %v595
        %v1245 = vunpack.c.h.b16 %v595
        %v1246 = vunpack.c.l.b16 %v596
        %v1247 = vunpack.c.h.b16 %v596
        %v1248 = vunpack.c.l.b16 %v597
        %v1249 = vunpack.c.h.b16 %v597
        %v1250 = vunpack.c.l.b16 %v598
        %v1251 = vunpack.c.h.b16 %v598
        %v1252 = vunpack.c.l.b16 %v599
        %v1253 = vunpack.c.h.b16 %v599
        %v1254 = vunpack.c.l.b16 %v600
        %v1255 = vunpack.c.h.b16 %v600
        %v1256 = vunpack.c.l.b16 %v601
        %v1257 = vunpack.c.h.b16 %v601
        %v1258 = vunpack.c.l.b16 %v602
        %v1259 = vunpack.c.h.b16 %v602
        %v1260 = vunpack.c.l.b16 %v603
        %v1261 = vunpack.c.h.b16 %v603
        %v1262 = vunpack.c.l.b16 %v604
        %v1263 = vunpack.c.h.b16 %v604
        %v1264 = vunpack.c.l.b16 %v605
        %v1265 = vunpack.c.h.b16 %v605
        %v1266 = vunpack.c.l.b16 %v606
        %v1267 = vunpack.c.h.b16 %v606
        %v1268 = vunpack.c.l.b16 %v607
        %v1269 = vunpack.c.h.b16 %v607
        %v1270 = vunpack.c.l.b16 %v608
        %v1271 = vunpack.c.h.b16 %v608
        %v1272 = vunpack.c.l.b16 %v609
        %v1273 = vunpack.c.h.b16 %v609
        %v1274 = vunpack.c.l.b16 %v610
        %v1275 = vunpack.c.h.b16 %v610
        %v1276 = vunpack.c.l.b16 %v611
        %v1277 = vunpack.c.h.b16 %v611
        %v1278 = vunpack.c.l.b16 %v612
        %v1279 = vunpack.c.h.b16 %v612
        %v1280 = vunpack.c.l.b16 %v613
        %v1281 = vunpack.c.h.b16 %v613
        %v1282 = vunpack.c.l.b16 %v614
        %v1283 = vunpack.c.h.b16 %v614
        %v1284 = vunpack.c.l.b16 %v615
        %v1285 = vunpack.c.h.b16 %v615
        %v1286 = vunpack.c.l.b16 %v616
        %v1287 = vunpack.c.h.b16 %v616
        %v1288 = vunpack.c.l.b16 %v617
        %v1289 = vunpack.c.h.b16 %v617
        %v1290 = vunpack.c.l.b16 %v618
        %v1291 = vunpack.c.h.b16 %v618
        %v1292 = vunpack.c.l.b16 %v619
        %v1293 = vunpack.c.h.b16 %v619
        %v1294 = vunpack.c.l.b16 %v620
        %v1295 = vunpack.c.h.b16 %v620
        %v1296 = vunpack.c.l.b16 %v621
        %v1297 = vunpack.c.h.b16 %v621
        %v1298 = vunpack.c.l.b16 %v622
        %v1299 = vunpack.c.h.b16 %v622
        %v1300 = vunpack.c.l.b16 %v623
        %v1301 = vunpack.c.h.b16 %v623
        %v1302 = vunpack.c.l.b16 %v624
        %v1303 = vunpack.c.h.b16 %v624
        %v1304 = vunpack.c.l.b16 %v625
        %v1305 = vunpack.c.h.b16 %v625
        %v1306 = vunpack.c.l.b16 %v626
        %v1307 = vunpack.c.h.b16 %v626
        %v1308 = vunpack.c.l.b16 %v627
        %v1309 = vunpack.c.h.b16 %v627
        %v1310 = vunpack.c.l.b16 %v628
        %v1311 = vunpack.c.h.b16 %v628
        %v1312 = vunpack.c.l.b16 %v629
        %v1313 = vunpack.c.h.b16 %v629
        %v1314 = vunpack.c.l.b16 %v630
        %v1315 = vunpack.c.h.b16 %v630
        %v1316 = vunpack.c.l.b16 %v631
        %v1317 = vunpack.c.h.b16 %v631
        %v1318 = vunpack.c.l.b16 %v632
        %v1319 = vunpack.c.h.b16 %v632
        %v1320 = vunpack.c.l.b16 %v633
        %v1321 = vunpack.c.h.b16 %v633
        %v1322 = vunpack.c.l.b16 %v634
        %v1323 = vunpack.c.h.b16 %v634
        %v1324 = vunpack.c.l.b16 %v635
        %v1325 = vunpack.c.h.b16 %v635
        %v1326 = vunpack.c.l.b16 %v636
        %v1327 = vunpack.c.h.b16 %v636
        %v1328 = vunpack.c.l.b16 %v637
        %v1329 = vunpack.c.h.b16 %v637
        %v1330 = vunpack.c.l.b16 %v638
        %v1331 = vunpack.c.h.b16 %v638
        %v1332 = vunpack.c.l.b16 %v639
        %v1333 = vunpack.c.h.b16 %v639
        %v1334 = vunpack.c.l.b16 %v640
        %v1335 = vunpack.c.h.b16 %v640
        %v1336 = vunpack.c.l.b16 %v641
        %v1337 = vunpack.c.h.b16 %v641
        %v1338 = vunpack.c.l.b16 %v642
        %v1339 = vunpack.c.h.b16 %v642
        %v1340 = vunpack.c.l.b16 %v643
        %v1341 = vunpack.c.h.b16 %v643
        %v1342 = vunpack.c.l.b16 %v644
        %v1343 = vunpack.c.h.b16 %v644
        %v1344 = vunpack.c.l.b16 %v645
        %v1345 = vunpack.c.h.b16 %v645
        %v1346 = vunpack.c.l.b16 %v646
        %v1347 = vunpack.c.h.b16 %v646
        %v1348 = vunpack.c.l.b16 %v647
        %v1349 = vunpack.c.h.b16 %v647
        %v1350 = vunpack.c.l.b16 %v648
        %v1351 = vunpack.c.h.b16 %v648
        %v1352 = vunpack.c.l.b16 %v649
        %v1353 = vunpack.c.h.b16 %v649
        %v1354 = vunpack.c.l.b16 %v650
        %v1355 = vunpack.c.h.b16 %v650
        %v1356 = vunpack.c.l.b16 %v651
        %v1357 = vunpack.c.h.b16 %v651
        %v1358 = vunpack.c.l.b16 %v652
        %v1359 = vunpack.c.h.b16 %v652
        %v1360 = vunpack.c.l.b16 %v653
        %v1361 = vunpack.c.h.b16 %v653
        %v1362 = vunpack.c.l.b16 %v654
        %v1363 = vunpack.c.h.b16 %v654
        %v1364 = vunpack.c.l.b16 %v655
        %v1365 = vunpack.c.h.b16 %v655
        %v1366 = vunpack.c.l.b16 %v656
        %v1367 = vunpack.c.h.b16 %v656
        %v1368 = vunpack.c.l.b16 %v657
        %v1369 = vunpack.c.h.b16 %v657
        %v1370 = vunpack.c.l.b16 %v658
        %v1371 = vunpack.c.h.b16 %v658
        %v1372 = vunpack.c.l.b16 %v659
        %v1373 = vunpack.c.h.b16 %v659
        %v1374 = vunpack.c.l.b16 %v660
        %v1375 = vunpack.c.h.b16 %v660
        %v1376 = vunpack.c.l.b16 %v661
        %v1377 = vunpack.c.h.b16 %v661
        %v1378 = vunpack.c.l.b16 %v662
        %v1379 = vunpack.c.h.b16 %v662
        %v1380 = vunpack.c.l.b16 %v663
        %v1381 = vunpack.c.h.b16 %v663
        %v1382 = vunpack.c.l.b16 %v664
        %v1383 = vunpack.c.h.b16 %v664
        %v1384 = vunpack.c.l.b16 %v665
        %v1385 = vunpack.c.h.b16 %v665
        %v1386 = vunpack.c.l.b16 %v666
        %v1387 = vunpack.c.h.b16 %v666
        %v1388 = vunpack.c.l.b16 %v667
        %v1389 = vunpack.c.h.b16 %v667
        %v1390 = vunpack.c.l.b16 %v668
        %v1391 = vunpack.c.h.b16 %v668
        %v1392 = vunpack.c.l.b16 %v669
        %v1393 = vunpack.c.h.b16 %v669
        %v1394 = vunpack.c.l.b16 %v670
        %v1395 = vunpack.c.h.b16 %v670
        %v1396 = vunpack.c.l.b16 %v671
        %v1397 = vunpack.c.h.b16 %v671
        %v1398 = vunpack.c.l.b16 %v672
        %v1399 = vunpack.c.h.b16 %v672
        %v1400 = vunpack.c.l.b16 %v673
        %v1401 = vunpack.c.h.b16 %v673
        %v1402 = vunpack.c.l.b16 %v674
        %v1403 = vunpack.c.h.b16 %v674
        %v1404 = vunpack.c.l.b16 %v675
        %v1405 = vunpack.c.h.b16 %v675
        %v1406 = vunpack.c.l.b16 %v676
        %v1407 = vunpack.c.h.b16 %v676
        %v1408 = vunpack.c.l.b16 %v677
        %v1409 = vunpack.c.h.b16 %v677
        %v1410 = vunpack.c.l.b16 %v678
        %v1411 = vunpack.c.h.b16 %v678
        %v1412 = vunpack.c.l.b16 %v679
        %v1413 = vunpack.c.h.b16 %v679
        %v1414 = vunpack.c.l.b16 %v680
        %v1415 = vunpack.c.h.b16 %v680
        %v1416 = vunpack.c.l.b16 %v681
        %v1417 = vunpack.c.h.b16 %v681
        %v1418 = vunpack.c.l.b16 %v682
        %v1419 = vunpack.c.h.b16 %v682
        %v1420 = vunpack.c.l.b16 %v683
        %v1421 = vunpack.c.h.b16 %v683
        %v1422 = vunpack.c.l.b16 %v684
        %v1423 = vunpack.c.h.b16 %v684
        %v1424 = vunpack.c.l.b16 %v685
        %v1425 = vunpack.c.h.b16 %v685
        %v1426 = vunpack.c.l.b16 %v686
        %v1427 = vunpack.c.h.b16 %v686
        %v1428 = vunpack.c.l.b16 %v687
        %v1429 = vunpack.c.h.b16 %v687
        %v1430 = vunpack.c.l.b16 %v688
        %v1431 = vunpack.c.h.b16 %v688
        %v1432 = vunpack.c.l.b16 %v689
        %v1433 = vunpack.c.h.b16 %v689
        %v1434 = vunpack.c.l.b16 %v690
        %v1435 = vunpack.c.h.b16 %v690
        %v1436 = vunpack.c.l.b16 %v691
        %v1437 = vunpack.c.h.b16 %v691
        %v1438 = vunpack.c.l.b16 %v692
        %v1439 = vunpack.c.h.b16 %v692
        %v1440 = vunpack.c.l.b16 %v693
        %v1441 = vunpack.c.h.b16 %v693
        %v1442 = vunpack.c.l.b16 %v694
        %v1443 = vunpack.c.h.b16 %v694
        %v1444 = vunpack.c.l.b16 %v695
        %v1445 = vunpack.c.h.b16 %v695
        %v1446 = vunpack.c.l.b16 %v696
        %v1447 = vunpack.c.h.b16 %v696
        %v1448 = vunpack.c.l.b16 %v697
        %v1449 = vunpack.c.h.b16 %v697
        %v1450 = vunpack.c.l.b16 %v698
        %v1451 = vunpack.c.h.b16 %v698
        %v1452 = vunpack.c.l.b16 %v699
        %v1453 = vunpack.c.h.b16 %v699
        %v1454 = vunpack.c.l.b16 %v700
        %v1455 = vunpack.c.h.b16 %v700
        %v1456 = vunpack.c.l.b16 %v701
        %v1457 = vunpack.c.h.b16 %v701
        %v1458 = vunpack.c.l.b16 %v702
        %v1459 = vunpack.c.h.b16 %v702
        %v1460 = vunpack.c.l.b16 %v703
        %v1461 = vunpack.c.h.b16 %v703
        %v1462 = vunpack.c.l.b16 %v704
        %v1463 = vunpack.c.h.b16 %v704
        %v1464 = vunpack.c.l.b16 %v705
        %v1465 = vunpack.c.h.b16 %v705
        %v1466 = vunpack.c.l.b16 %v706
        %v1467 = vunpack.c.h.b16 %v706
        %v1468 = vunpack.c.l.b16 %v707
        %v1469 = vunpack.c.h.b16 %v707
        %v1470 = vunpack.c.l.b16 %v708
        %v1471 = vunpack.c.h.b16 %v708
        %v1472 = vunpack.c.l.b16 %v709
        %v1473 = vunpack.c.h.b16 %v709
        %v1474 = vunpack.c.l.b16 %v710
        %v1475 = vunpack.c.h.b16 %v710
        %v1476 = vunpack.c.l.b16 %v711
        %v1477 = vunpack.c.h.b16 %v711
        %v1478 = vunpack.c.l.b16 %v712
        %v1479 = vunpack.c.h.b16 %v712
        %v1480 = vunpack.c.l.b16 %v713
        %v1481 = vunpack.c.h.b16 %v713
        %v1482 = vunpack.c.l.b16 %v714
        %v1483 = vunpack.c.h.b16 %v714
        %v1484 = vunpack.c.l.b16 %v715
        %v1485 = vunpack.c.h.b16 %v715
        %v1486 = vunpack.c.l.b16 %v716
        %v1487 = vunpack.c.h.b16 %v716
        %v1488 = vunpack.c.l.b16 %v717
        %v1489 = vunpack.c.h.b16 %v717
        %v1490 = vunpack.c.l.b16 %v718
        %v1491 = vunpack.c.h.b16 %v718
        %v1492 = vunpack.c.l.b16 %v719
        %v1493 = vunpack.c.h.b16 %v719
        %v1494 = vunpack.c.l.b16 %v720
        %v1495 = vunpack.c.h.b16 %v720
        %v1496 = vunpack.c.l.b16 %v721
        %v1497 = vunpack.c.h.b16 %v721
        %v1498 = vunpack.c.l.b16 %v722
        %v1499 = vunpack.c.h.b16 %v722
        %v1500 = vunpack.c.l.b16 %v723
        %v1501 = vunpack.c.h.b16 %v723
        %v1502 = vunpack.c.l.b16 %v724
        %v1503 = vunpack.c.h.b16 %v724
        %v1504 = vunpack.c.l.b16 %v725
        %v1505 = vunpack.c.h.b16 %v725
        %v1506 = vunpack.c.l.b16 %v726
        %v1507 = vunpack.c.h.b16 %v726
        %v1508 = vunpack.c.l.b16 %v727
        %v1509 = vunpack.c.h.b16 %v727
        %v1510 = vunpack.c.l.b16 %v728
        %v1511 = vunpack.c.h.b16 %v728
        %v1512 = vunpack.c.l.b16 %v729
        %v1513 = vunpack.c.h.b16 %v729
        %v1514 = vunpack.c.l.b16 %v730
        %v1515 = vunpack.c.h.b16 %v730
        %v1516 = vunpack.c.l.b16 %v731
        %v1517 = vunpack.c.h.b16 %v731
        %v1518 = vunpack.c.l.b16 %v732
        %v1519 = vunpack.c.h.b16 %v732
        %v1520 = vunpack.c.l.b16 %v733
        %v1521 = vunpack.c.h.b16 %v733
        %v1522 = vunpack.c.l.b16 %v734
        %v1523 = vunpack.c.h.b16 %v734
        %v1524 = vunpack.c.l.b16 %v735
        %v1525 = vunpack.c.h.b16 %v735
        %v1526 = vunpack.c.l.b16 %v736
        %v1527 = vunpack.c.h.b16 %v736
        %v1528 = vunpack.c.l.b16 %v737
        %v1529 = vunpack.c.h.b16 %v737
        %v1530 = vunpack.c.l.b16 %v738
        %v1531 = vunpack.c.h.b16 %v738
        %v1532 = vunpack.c.l.b16 %v739
        %v1533 = vunpack.c.h.b16 %v739
        %v1534 = vunpack.c.l.b16 %v740
        %v1535 = vunpack.c.h.b16 %v740
        %v1536 = vunpack.c.l.b16 %v741
        %v1537 = vunpack.c.h.b16 %v741
        %v1538 = vunpack.c.l.b16 %v742
        %v1539 = vunpack.c.h.b16 %v742
        %v1540 = vunpack.c.l.b16 %v743
        %v1541 = vunpack.c.h.b16 %v743
        %v1542 = vunpack.c.l.b16 %v744
        %v1543 = vunpack.c.h.b16 %v744
        %v1544 = vunpack.c.l.b16 %v745
        %v1545 = vunpack.c.h.b16 %v745
        %v1546 = vunpack.c.l.b16 %v746
        %v1547 = vunpack.c.h.b16 %v746
        %v1548 = vunpack.c.l.b16 %v747
        %v1549 = vunpack.c.h.b16 %v747
        %v1550 = vunpack.c.l.b16 %v748
        %v1551 = vunpack.c.h.b16 %v748
        %v1552 = vunpack.c.l.b16 %v749
        %v1553 = vunpack.c.h.b16 %v749
        %v1554 = vunpack.c.l.b16 %v750
        %v1555 = vunpack.c.h.b16 %v750
        %v1556 = vunpack.c.l.b16 %v751
        %v1557 = vunpack.c.h.b16 %v751
        %v1558 = vunpack.c.l.b16 %v752
        %v1559 = vunpack.c.h.b16 %v752
        %v1560 = vunpack.c.l.b16 %v753
        %v1561 = vunpack.c.h.b16 %v753
        %v1562 = vunpack.c.l.b16 %v754
        %v1563 = vunpack.c.h.b16 %v754
        %v1564 = vunpack.c.l.b16 %v755
        %v1565 = vunpack.c.h.b16 %v755
        %v1566 = vunpack.c.l.b16 %v756
        %v1567 = vunpack.c.h.b16 %v756
        %v1568 = vunpack.c.l.b16 %v757
        %v1569 = vunpack.c.h.b16 %v757
        %v1570 = vunpack.c.l.b16 %v758
        %v1571 = vunpack.c.h.b16 %v758
        %v1572 = vunpack.c.l.b16 %v759
        %v1573 = vunpack.c.h.b16 %v759
        %v1574 = vunpack.c.l.b16 %v760
        %v1575 = vunpack.c.h.b16 %v760
        %v1576 = vunpack.c.l.b16 %v761
        %v1577 = vunpack.c.h.b16 %v761
        %v1578 = vunpack.c.l.b16 %v762
        %v1579 = vunpack.c.h.b16 %v762
        %v1580 = vunpack.c.l.b16 %v763
        %v1581 = vunpack.c.h.b16 %v763
        %v1582 = vunpack.c.l.b16 %v764
        %v1583 = vunpack.c.h.b16 %v764
        %v1584 = vunpack.c.l.b16 %v765
        %v1585 = vunpack.c.h.b16 %v765
        %v1586 = vunpack.c.l.b16 %v766
        %v1587 = vunpack.c.h.b16 %v766
        %v1588 = vunpack.c.l.b16 %v767
        %v1589 = vunpack.c.h.b16 %v767
        %v1590 = vunpack.c.l.b16 %v768
        %v1591 = vunpack.c.h.b16 %v768
        %v1592 = vunpack.c.l.b16 %v769
        %v1593 = vunpack.c.h.b16 %v769
        %v1594 = vunpack.c.l.b16 %v770
        %v1595 = vunpack.c.h.b16 %v770
        %v1596 = vunpack.c.l.b16 %v771
        %v1597 = vunpack.c.h.b16 %v771
        %v1598 = vunpack.c.l.b16 %v772
        %v1599 = vunpack.c.h.b16 %v772
        %v1600 = vunpack.c.l.b16 %v773
        %v1601 = vunpack.c.h.b16 %v773
        %v1602 = vunpack.c.l.b16 %v774
        %v1603 = vunpack.c.h.b16 %v774
        %v1604 = vunpack.c.l.b16 %v775
        %v1605 = vunpack.c.h.b16 %v775
        %v1606 = vunpack.c.l.b16 %v776
        %v1607 = vunpack.c.h.b16 %v776
        %v1608 = vunpack.c.l.b16 %v777
        %v1609 = vunpack.c.h.b16 %v777
        %v1610 = vunpack.c.l.b16 %v778
        %v1611 = vunpack.c.h.b16 %v778
        %v1612 = vunpack.c.l.b16 %v779
        %v1613 = vunpack.c.h.b16 %v779
        %v1614 = vunpack.c.l.b16 %v780
        %v1615 = vunpack.c.h.b16 %v780
        %v1616 = vunpack.c.l.b16 %v781
        %v1617 = vunpack.c.h.b16 %v781
        %v1618 = vunpack.c.l.b16 %v782
        %v1619 = vunpack.c.h.b16 %v782
        %v1620 = vunpack.c.l.b16 %v783
        %v1621 = vunpack.c.h.b16 %v783
        %v1622 = vunpack.c.l.b16 %v784
        %v1623 = vunpack.c.h.b16 %v784
        %v1624 = vunpack.c.l.b16 %v785
        %v1625 = vunpack.c.h.b16 %v785
        %v1626 = vunpack.c.l.b16 %v786
        %v1627 = vunpack.c.h.b16 %v786
        %v1628 = vunpack.c.l.b16 %v787
        %v1629 = vunpack.c.h.b16 %v787
        %v1630 = vunpack.c.l.b16 %v788
        %v1631 = vunpack.c.h.b16 %v788
        %v1632 = vunpack.c.l.b16 %v789
        %v1633 = vunpack.c.h.b16 %v789
        %v1634 = vunpack.c.l.b16 %v790
        %v1635 = vunpack.c.h.b16 %v790
        %v1636 = vunpack.c.l.b16 %v791
        %v1637 = vunpack.c.h.b16 %v791
        %v1638 = vunpack.c.l.b16 %v792
        %v1639 = vunpack.c.h.b16 %v792
        %v1640 = vunpack.c.l.b16 %v793
        %v1641 = vunpack.c.h.b16 %v793
        %v1642 = vunpack.c.l.b16 %v794
        %v1643 = vunpack.c.h.b16 %v794
        %v1644 = vunpack.c.l.b16 %v795
        %v1645 = vunpack.c.h.b16 %v795
        %v1646 = vunpack.c.l.b16 %v796
        %v1647 = vunpack.c.h.b16 %v796
        %v1648 = vunpack.c.l.b16 %v797
        %v1649 = vunpack.c.h.b16 %v797
        %v1650 = vunpack.c.l.b16 %v798
        %v1651 = vunpack.c.h.b16 %v798
        %v1652 = vunpack.c.l.b16 %v799
        %v1653 = vunpack.c.h.b16 %v799
        %v1654 = vunpack.c.l.b16 %v800
        %v1655 = vunpack.c.h.b16 %v800
        %v1656 = vunpack.c.l.b16 %v801
        %v1657 = vunpack.c.h.b16 %v801
        %v1658 = vunpack.c.l.b16 %v802
        %v1659 = vunpack.c.h.b16 %v802
        %v1660 = vunpack.c.l.b16 %v803
        %v1661 = vunpack.c.h.b16 %v803
        %v1662 = vunpack.c.l.b16 %v804
        %v1663 = vunpack.c.h.b16 %v804
        %v1664 = vunpack.c.l.b16 %v805
        %v1665 = vunpack.c.h.b16 %v805
        %v1666 = vunpack.c.l.b16 %v806
        %v1667 = vunpack.c.h.b16 %v806
        %v1668 = vunpack.c.l.b16 %v807
        %v1669 = vunpack.c.h.b16 %v807
        %v1670 = vunpack.c.l.b16 %v808
        %v1671 = vunpack.c.h.b16 %v808
        %v1672 = vunpack.c.l.b16 %v809
        %v1673 = vunpack.c.h.b16 %v809
        %v1674 = vunpack.c.l.b16 %v810
        %v1675 = vunpack.c.h.b16 %v810
        %v1676 = vunpack.c.l.b16 %v811
        %v1677 = vunpack.c.h.b16 %v811
        %v1678 = vunpack.c.l.b16 %v812
        %v1679 = vunpack.c.h.b16 %v812
        %v1680 = vunpack.c.l.b16 %v813
        %v1681 = vunpack.c.h.b16 %v813
        %v1682 = vunpack.c.l.b16 %v814
        %v1683 = vunpack.c.h.b16 %v814
        %v1684 = vunpack.c.l.b16 %v815
        %v1685 = vunpack.c.h.b16 %v815
        %v1686 = vunpack.c.l.b16 %v816
        %v1687 = vunpack.c.h.b16 %v816
        %v1688 = vunpack.c.l.b16 %v817
        %v1689 = vunpack.c.h.b16 %v817
        %v1690 = vunpack.c.l.b16 %v818
        %v1691 = vunpack.c.h.b16 %v818
        %v1692 = vunpack.c.l.b16 %v819
        %v1693 = vunpack.c.h.b16 %v819
        %v1694 = vunpack.c.l.b16 %v820
        %v1695 = vunpack.c.h.b16 %v820
        %v1696 = vunpack.c.l.b16 %v821
        %v1697 = vunpack.c.h.b16 %v821
        %v1698 = vunpack.c.l.b16 %v822
        %v1699 = vunpack.c.h.b16 %v822
        %v1700 = vunpack.c.l.b16 %v823
        %v1701 = vunpack.c.h.b16 %v823
        %v1702 = vunpack.c.l.b16 %v824
        %v1703 = vunpack.c.h.b16 %v824
        %v1704 = vunpack.c.l.b16 %v825
        %v1705 = vunpack.c.h.b16 %v825
        %v1706 = vunpack.c.l.b16 %v826
        %v1707 = vunpack.c.h.b16 %v826
        %v1708 = vunpack.c.l.b16 %v827
        %v1709 = vunpack.c.h.b16 %v827
        %v1710 = vunpack.c.l.b16 %v828
        %v1711 = vunpack.c.h.b16 %v828
        %v1712 = vunpack.c.l.b16 %v829
        %v1713 = vunpack.c.h.b16 %v829
        %v1714 = vunpack.c.l.b16 %v830
        %v1715 = vunpack.c.h.b16 %v830
        %v1716 = vunpack.c.l.b16 %v831
        %v1717 = vunpack.c.h.b16 %v831
        %v1718 = vunpack.c.l.b16 %v832
        %v1719 = vunpack.c.h.b16 %v832
        %v1720 = vunpack.c.l.b16 %v833
        %v1721 = vunpack.c.h.b16 %v833
        %v1722 = vunpack.c.l.b16 %v834
        %v1723 = vunpack.c.h.b16 %v834
        %v1724 = vunpack.c.l.b16 %v835
        %v1725 = vunpack.c.h.b16 %v835
        %v1726 = vunpack.c.l.b16 %v836
        %v1727 = vunpack.c.h.b16 %v836
        %v1728 = vunpack.c.l.b16 %v837
        %v1729 = vunpack.c.h.b16 %v837
        %v1730 = vunpack.c.l.b16 %v838
        %v1731 = vunpack.c.h.b16 %v838
        %v1732 = vunpack.c.l.b16 %v839
        %v1733 = vunpack.c.h.b16 %v839
        %v1734 = vunpack.c.l.b16 %v840
        %v1735 = vunpack.c.h.b16 %v840
        %v1736 = vunpack.c.l.b16 %v841
        %v1737 = vunpack.c.h.b16 %v841
        %v1738 = vpack.c.b16 %v1168, %v1162
        %v1739 = vpack.c.b16 %v1169, %v1163
        %v1740 = vpack.c.b16 %v1170, %v1164
        %v1741 = vpack.c.b16 %v1171, %v1165
        %v1742 = vpack.c.b16 %v1172, %v1166
        %v1743 = vpack.c.b16 %v1173, %v1167
        %v1744 = vpack.c.b16 %v1180, %v1174
        %v1745 = vpack.c.b16 %v1181, %v1175
        %v1746 = vpack.c.b16 %v1182, %v1176
        %v1747 = vpack.c.b16 %v1183, %v1177
        %v1748 = vpack.c.b16 %v1184, %v1178
        %v1749 = vpack.c.b16 %v1185, %v1179
        %v1750 = vpack.c.b16 %v1192, %v1186
        %v1751 = vpack.c.b16 %v1193, %v1187
        %v1752 = vpack.c.b16 %v1194, %v1188
        %v1753 = vpack.c.b16 %v1195, %v1189
        %v1754 = vpack.c.b16 %v1196, %v1190
        %v1755 = vpack.c.b16 %v1197, %v1191
        %v1756 = vpack.c.b16 %v1204, %v1198
        %v1757 = vpack.c.b16 %v1205, %v1199
        %v1758 = vpack.c.b16 %v1206, %v1200
        %v1759 = vpack.c.b16 %v1207, %v1201
        %v1760 = vpack.c.b16 %v1208, %v1202
        %v1761 = vpack.c.b16 %v1209, %v1203
        %v1762 = vpack.c.b16 %v1216, %v1210
        %v1763 = vpack.c.b16 %v1217, %v1211
        %v1764 = vpack.c.b16 %v1218, %v1212
        %v1765 = vpack.c.b16 %v1219, %v1213
        %v1766 = vpack.c.b16 %v1220, %v1214
        %v1767 = vpack.c.b16 %v1221, %v1215
        %v1768 = vpack.c.b16 %v1228, %v1222
        %v1769 = vpack.c.b16 %v1229, %v1223
        %v1770 = vpack.c.b16 %v1230, %v1224
        %v1771 = vpack.c.b16 %v1231, %v1225
        %v1772 = vpack.c.b16 %v1232, %v1226
        %v1773 = vpack.c.b16 %v1233, %v1227
        %v1774 = vpack.c.b16 %v1240, %v1234
        %v1775 = vpack.c.b16 %v1241, %v1235
        %v1776 = vpack.c.b16 %v1242, %v1236
        %v1777 = vpack.c.b16 %v1243, %v1237
        %v1778 = vpack.c.b16 %v1244, %v1238
        %v1779 = vpack.c.b16 %v1245, %v1239
        %v1780 = vpack.c.b16 %v1252, %v1246
        %v1781 = vpack.c.b16 %v1253, %v1247
        %v1782 = vpack.c.b16 %v1254, %v1248
        %v1783 = vpack.c.b16 %v1255, %v1249
        %v1784 = vpack.c.b16 %v1256, %v1250
        %v1785 = vpack.c.b16 %v1257, %v1251
        %v1786 = vpack.c.b16 %v1264, %v1258
        %v1787 = vpack.c.b16 %v1265, %v1259
        %v1788 = vpack.c.b16 %v1266, %v1260
        %v1789 = vpack.c.b16 %v1267, %v1261
        %v1790 = vpack.c.b16 %v1268, %v1262
        %v1791 = vpack.c.b16 %v1269, %v1263
        %v1792 = vpack.c.b16 %v1276, %v1270
        %v1793 = vpack.c.b16 %v1277, %v1271
        %v1794 = vpack.c.b16 %v1278, %v1272
        %v1795 = vpack.c.b16 %v1279, %v1273
        %v1796 = vpack.c.b16 %v1280, %v1274
        %v1797 = vpack.c.b16 %v1281, %v1275
        %v1798 = vpack.c.b16 %v1288, %v1282
        %v1799 = vpack.c.b16 %v1289, %v1283
        %v1800 = vpack.c.b16 %v1290, %v1284
        %v1801 = vpack.c.b16 %v1291, %v1285
        %v1802 = vpack.c.b16 %v1292, %v1286
        %v1803 = vpack.c.b16 %v1293, %v1287
        %v1804 = vpack.c.b16 %v1300, %v1294
        %v1805 = vpack.c.b16 %v1301, %v1295
        %v1806 = vpack.c.b16 %v1302, %v1296
        %v1807 = vpack.c.b16 %v1303, %v1297
        %v1808 = vpack.c.b16 %v1304, %v1298
        %v1809 = vpack.c.b16 %v1305, %v1299
        %v1810 = vpack.c.b16 %v1312, %v1306
        %v1811 = vpack.c.b16 %v1313, %v1307
        %v1812 = vpack.c.b16 %v1314, %v1308
        %v1813 = vpack.c.b16 %v1315, %v1309
        %v1814 = vpack.c.b16 %v1316, %v1310
        %v1815 = vpack.c.b16 %v1317, %v1311
        %v1816 = vpack.c.b16 %v1324, %v1318
        %v1817 = vpack.c.b16 %v1325, %v1319
        %v1818 = vpack.c.b16 %v1326, %v1320
        %v1819 = vpack.c.b16 %v1327, %v1321
        %v1820 = vpack.c.b16 %v1328, %v1322
        %v1821 = vpack.c.b16 %v1329, %v1323
        %v1822 = vpack.c.b16 %v1336, %v1330
        %v1823 = vpack.c.b16 %v1337, %v1331
        %v1824 = vpack.c.b16 %v1338, %v1332
        %v1825 = vpack.c.b16 %v1339, %v1333
        %v1826 = vpack.c.b16 %v1340, %v1334
        %v1827 = vpack.c.b16 %v1341, %v1335
        %v1828 = vpack.c.b16 %v1348, %v1342
        %v1829 = vpack.c.b16 %v1349, %v1343
        %v1830 = vpack.c.b16 %v1350, %v1344
        %v1831 = vpack.c.b16 %v1351, %v1345
        %v1832 = vpack.c.b16 %v1352, %v1346
        %v1833 = vpack.c.b16 %v1353, %v1347
        %v1834 = vpack.c.b16 %v1360, %v1354
        %v1835 = vpack.c.b16 %v1361, %v1355
        %v1836 = vpack.c.b16 %v1362, %v1356
        %v1837 = vpack.c.b16 %v1363, %v1357
        %v1838 = vpack.c.b16 %v1364, %v1358
        %v1839 = vpack.c.b16 %v1365, %v1359
        %v1840 = vpack.c.b16 %v1372, %v1366
        %v1841 = vpack.c.b16 %v1373, %v1367
        %v1842 = vpack.c.b16 %v1374, %v1368
        %v1843 = vpack.c.b16 %v1375, %v1369
        %v1844 = vpack.c.b16 %v1376, %v1370
        %v1845 = vpack.c.b16 %v1377, %v1371
        %v1846 = vpack.c.b16 %v1384, %v1378
        %v1847 = vpack.c.b16 %v1385, %v1379
        %v1848 = vpack.c.b16 %v1386, %v1380
        %v1849 = vpack.c.b16 %v1387, %v1381
        %v1850 = vpack.c.b16 %v1388, %v1382
        %v1851 = vpack.c.b16 %v1389, %v1383
        %v1852 = vpack.c.b16 %v1396, %v1390
        %v1853 = vpack.c.b16 %v1397, %v1391
        %v1854 = vpack.c.b16 %v1398, %v1392
        %v1855 = vpack.c.b16 %v1399, %v1393
        %v1856 = vpack.c.b16 %v1400, %v1394
        %v1857 = vpack.c.b16 %v1401, %v1395
        %v1858 = vpack.c.b16 %v1408, %v1402
        %v1859 = vpack.c.b16 %v1409, %v1403
        %v1860 = vpack.c.b16 %v1410, %v1404
        %v1861 = vpack.c.b16 %v1411, %v1405
        %v1862 = vpack.c.b16 %v1412, %v1406
        %v1863 = vpack.c.b16 %v1413, %v1407
        %v1864 = vpack.c.b16 %v1420, %v1414
        %v1865 = vpack.c.b16 %v1421, %v1415
        %v1866 = vpack.c.b16 %v1422, %v1416
        %v1867 = vpack.c.b16 %v1423, %v1417
        %v1868 = vpack.c.b16 %v1424, %v1418
        %v1869 = vpack.c.b16 %v1425, %v1419
        %v1870 = vpack.c.b16 %v1432, %v1426
        %v1871 = vpack.c.b16 %v1433, %v1427
        %v1872 = vpack.c.b16 %v1434, %v1428
        %v1873 = vpack.c.b16 %v1435, %v1429
        %v1874 = vpack.c.b16 %v1436, %v1430
        %v1875 = vpack.c.b16 %v1437, %v1431
        %v1876 = vpack.c.b16 %v1444, %v1438
        %v1877 = vpack.c.b16 %v1445, %v1439
        %v1878 = vpack.c.b16 %v1446, %v1440
        %v1879 = vpack.c.b16 %v1447, %v1441
        %v1880 = vpack.c.b16 %v1448, %v1442
        %v1881 = vpack.c.b16 %v1449, %v1443
        %v1882 = vpack.c.b16 %v1456, %v1450
        %v1883 = vpack.c.b16 %v1457, %v1451
        %v1884 = vpack.c.b16 %v1458, %v1452
        %v1885 = vpack.c.b16 %v1459, %v1453
        %v1886 = vpack.c.b16 %v1460, %v1454
        %v1887 = vpack.c.b16 %v1461, %v1455
        %v1888 = vpack.c.b16 %v1468, %v1462
        %v1889 = vpack.c.b16 %v1469, %v1463
        %v1890 = vpack.c.b16 %v1470, %v1464
        %v1891 = vpack.c.b16 %v1471, %v1465
        %v1892 = vpack.c.b16 %v1472, %v1466
        %v1893 = vpack.c.b16 %v1473, %v1467
        %v1894 = vpack.c.b16 %v1480, %v1474
        %v1895 = vpack.c.b16 %v1481, %v1475
        %v1896 = vpack.c.b16 %v1482, %v1476
        %v1897 = vpack.c.b16 %v1483, %v1477
        %v1898 = vpack.c.b16 %v1484, %v1478
        %v1899 = vpack.c.b16 %v1485, %v1479
        %v1900 = vpack.c.b16 %v1492, %v1486
        %v1901 = vpack.c.b16 %v1493, %v1487
        %v1902 = vpack.c.b16 %v1494, %v1488
        %v1903 = vpack.c.b16 %v1495, %v1489
        %v1904 = vpack.c.b16 %v1496, %v1490
        %v1905 = vpack.c.b16 %v1497, %v1491
        %v1906 = vpack.c.b16 %v1504, %v1498
        %v1907 = vpack.c.b16 %v1505, %v1499
        %v1908 = vpack.c.b16 %v1506, %v1500
        %v1909 = vpack.c.b16 %v1507, %v1501
        %v1910 = vpack.c.b16 %v1508, %v1502
        %v1911 = vpack.c.b16 %v1509, %v1503
        %v1912 = vpack.c.b16 %v1516, %v1510
        %v1913 = vpack.c.b16 %v1517, %v1511
        %v1914 = vpack.c.b16 %v1518, %v1512
        %v1915 = vpack.c.b16 %v1519, %v1513
        %v1916 = vpack.c.b16 %v1520, %v1514
        %v1917 = vpack.c.b16 %v1521, %v1515
        %v1918 = vpack.c.b16 %v1528, %v1522
        %v1919 = vpack.c.b16 %v1529, %v1523
        %v1920 = vpack.c.b16 %v1530, %v1524
        %v1921 = vpack.c.b16 %v1531, %v1525
        %v1922 = vpack.c.b16 %v1532, %v1526
        %v1923 = vpack.c.b16 %v1533, %v1527
        %v1924 = vpack.c.b16 %v1540, %v1534
        %v1925 = vpack.c.b16 %v1541, %v1535
        %v1926 = vpack.c.b16 %v1542, %v1536
        %v1927 = vpack.c.b16 %v1543, %v1537
        %v1928 = vpack.c.b16 %v1544, %v1538
        %v1929 = vpack.c.b16 %v1545, %v1539
        %v1930 = vpack.c.b16 %v1552, %v1546
        %v1931 = vpack.c.b16 %v1553, %v1547
        %v1932 = vpack.c.b16 %v1554, %v1548
        %v1933 = vpack.c.b16 %v1555, %v1549
        %v1934 = vpack.c.b16 %v1556, %v1550
        %v1935 = vpack.c.b16 %v1557, %v1551
        %v1936 = vpack.c.b16 %v1564, %v1558
        %v1937 = vpack.c.b16 %v1565, %v1559
        %v1938 = vpack.c.b16 %v1566, %v1560
        %v1939 = vpack.c.b16 %v1567, %v1561
        %v1940 = vpack.c.b16 %v1568, %v1562
        %v1941 = vpack.c.b16 %v1569, %v1563
        %v1942 = vpack.c.b16 %v1576, %v1570
        %v1943 = vpack.c.b16 %v1577, %v1571
        %v1944 = vpack.c.b16 %v1578, %v1572
        %v1945 = vpack.c.b16 %v1579, %v1573
        %v1946 = vpack.c.b16 %v1580, %v1574
        %v1947 = vpack.c.b16 %v1581, %v1575
        %v1948 = vpack.c.b16 %v1588, %v1582
        %v1949 = vpack.c.b16 %v1589, %v1583
        %v1950 = vpack.c.b16 %v1590, %v1584
        %v1951 = vpack.c.b16 %v1591, %v1585
        %v1952 = vpack.c.b16 %v1592, %v1586
        %v1953 = vpack.c.b16 %v1593, %v1587
        %v1954 = vpack.c.b16 %v1600, %v1594
        %v1955 = vpack.c.b16 %v1601, %v1595
        %v1956 = vpack.c.b16 %v1602, %v1596
        %v1957 = vpack.c.b16 %v1603, %v1597
        %v1958 = vpack.c.b16 %v1604, %v1598
        %v1959 = vpack.c.b16 %v1605, %v1599
        %v1960 = vpack.c.b16 %v1612, %v1606
        %v1961 = vpack.c.b16 %v1613, %v1607
        %v1962 = vpack.c.b16 %v1614, %v1608
        %v1963 = vpack.c.b16 %v1615, %v1609
        %v1964 = vpack.c.b16 %v1616, %v1610
        %v1965 = vpack.c.b16 %v1617, %v1611
        %v1966 = vpack.c.b16 %v1624, %v1618
        %v1967 = vpack.c.b16 %v1625, %v1619
        %v1968 = vpack.c.b16 %v1626, %v1620
        %v1969 = vpack.c.b16 %v1627, %v1621
        %v1970 = vpack.c.b16 %v1628, %v1622
        %v1971 = vpack.c.b16 %v1629, %v1623
        %v1972 = vpack.c.b16 %v1636, %v1630
        %v1973 = vpack.c.b16 %v1637, %v1631
        %v1974 = vpack.c.b16 %v1638, %v1632
        %v1975 = vpack.c.b16 %v1639, %v1633
        %v1976 = vpack.c.b16 %v1640, %v1634
        %v1977 = vpack.c.b16 %v1641, %v1635
        %v1978 = vpack.c.b16 %v1648, %v1642
        %v1979 = vpack.c.b16 %v1649, %v1643
        %v1980 = vpack.c.b16 %v1650, %v1644
        %v1981 = vpack.c.b16 %v1651, %v1645
        %v1982 = vpack.c.b16 %v1652, %v1646
        %v1983 = vpack.c.b16 %v1653, %v1647
        %v1984 = vpack.c.b16 %v1660, %v1654
        %v1985 = vpack.c.b16 %v1661, %v1655
        %v1986 = vpack.c.b16 %v1662, %v1656
        %v1987 = vpack.c.b16 %v1663, %v1657
        %v1988 = vpack.c.b16 %v1664, %v1658
        %v1989 = vpack.c.b16 %v1665, %v1659
        %v1990 = vpack.c.b16 %v1672, %v1666
        %v1991 = vpack.c.b16 %v1673, %v1667
        %v1992 = vpack.c.b16 %v1674, %v1668
        %v1993 = vpack.c.b16 %v1675, %v1669
        %v1994 = vpack.c.b16 %v1676, %v1670
        %v1995 = vpack.c.b16 %v1677, %v1671
        %v1996 = vpack.c.b16 %v1684, %v1678
        %v1997 = vpack.c.b16 %v1685, %v1679
        %v1998 = vpack.c.b16 %v1686, %v1680
        %v1999 = vpack.c.b16 %v1687, %v1681
        %v2000 = vpack.c.b16 %v1688, %v1682
        %v2001 = vpack.c.b16 %v1689, %v1683
        %v2002 = vpack.c.b16 %v1696, %v1690
        %v2003 = vpack.c.b16 %v1697, %v1691
        %v2004 = vpack.c.b16 %v1698, %v1692
        %v2005 = vpack.c.b16 %v1699, %v1693
        %v2006 = vpack.c.b16 %v1700, %v1694
        %v2007 = vpack.c.b16 %v1701, %v1695
        %v2008 = vpack.c.b16 %v1708, %v1702
        %v2009 = vpack.c.b16 %v1709, %v1703
        %v2010 = vpack.c.b16 %v1710, %v1704
        %v2011 = vpack.c.b16 %v1711, %v1705
        %v2012 = vpack.c.b16 %v1712, %v1706
        %v2013 = vpack.c.b16 %v1713, %v1707
        %v2014 = vpack.c.b16 %v1720, %v1714
        %v2015 = vpack.c.b16 %v1721, %v1715
        %v2016 = vpack.c.b16 %v1722, %v1716
        %v2017 = vpack.c.b16 %v1723, %v1717
        %v2018 = vpack.c.b16 %v1724, %v1718
        %v2019 = vpack.c.b16 %v1725, %v1719
        %v2020 = vpack.c.b16 %v1732, %v1726
        %v2021 = vpack.c.b16 %v1733, %v1727
        %v2022 = vpack.c.b16 %v1734, %v1728
        %v2023 = vpack.c.b16 %v1735, %v1729
        %v2024 = vpack.c.b16 %v1736, %v1730
        %v2025 = vpack.c.b16 %v1737, %v1731
        %2314 = vmatprep.subr.bf16.mxu0 %v1739
        %2315 = vmatpush1.bf16.msra.mxu0 %v1738
        %2316 = vmatprep.subr.bf16.mxu0 %v1745
        %2317 = vmatpush1.bf16.msra.mxu0 %v1744
        %2318 = vmatprep.subr.bf16.mxu0 %v1751
        %2319 = vmatpush1.bf16.msra.mxu0 %v1750
        %2320 = vmatprep.subr.bf16.mxu0 %v1757
        %2321 = vmatpush1.bf16.msra.mxu0 %v1756
        %2322 = vmatprep.subr.bf16.mxu0 %v1763
        %2323 = vmatpush1.bf16.msra.mxu0 %v1762
        %2324 = vmatprep.subr.bf16.mxu0 %v1769
        %2325 = vmatpush1.bf16.msra.mxu0 %v1768
        %2326 = vmatprep.subr.bf16.mxu0 %v1775
        %2327 = vmatpush1.bf16.msra.mxu0 %v1774
        %2328 = vmatprep.subr.bf16.mxu0 %v1781
        %2329 = vmatpush1.bf16.msra.mxu0 %v1780
        %2330 = vmatprep.subr.bf16.mxu0 %v1787
        %2331 = vmatpush1.bf16.msra.mxu0 %v1786
        %2332 = vmatprep.subr.bf16.mxu0 %v1793
        %2333 = vmatpush1.bf16.msra.mxu0 %v1792
        %2334 = vmatprep.subr.bf16.mxu0 %v1799
        %2335 = vmatpush1.bf16.msra.mxu0 %v1798
        %2336 = vmatprep.subr.bf16.mxu0 %v1805
        %2337 = vmatpush1.bf16.msra.mxu0 %v1804
        %2338 = vmatprep.subr.bf16.mxu0 %v1811
        %2339 = vmatpush1.bf16.msra.mxu0 %v1810
        %2340 = vmatprep.subr.bf16.mxu0 %v1817
        %2341 = vmatpush1.bf16.msra.mxu0 %v1816
        %2342 = vmatprep.subr.bf16.mxu0 %v1823
        %2343 = vmatpush1.bf16.msra.mxu0 %v1822
        %2344 = vmatprep.subr.bf16.mxu0 %v1829
        %2345 = vmatpush1.bf16.msra.mxu0 %v1828
        %2346 = vmatprep.mubr.bf16.mxu0 %v549
        %2347 = vmatmul.mubr.bf16.gmra.mrb[0].mxu0 %v548
        %v2348 = vpop.f32.mrb[0].mxu0
        %v2349 = vadd.f32 %v847, %v2348
        %v2350 = vpop.f32.mrb[0].mxu0
        %v2351 = vadd.f32 %v851, %v2350
        %v2352 = vpop.f32.mrb[0].mxu0
        %v2353 = vpop.f32.mrb[0].mxu0
        %2354 = vdwg.mxu0
        %2355 = vmatprep.subr.bf16.mxu0 %v1835
        %2356 = vmatpush1.bf16.msra.mxu0 %v1834
        %2357 = vmatprep.subr.bf16.mxu0 %v1841
        %2358 = vmatpush1.bf16.msra.mxu0 %v1840
        %2359 = vmatprep.subr.bf16.mxu0 %v1847
        %2360 = vmatpush1.bf16.msra.mxu0 %v1846
        %2361 = vmatprep.subr.bf16.mxu0 %v1853
        %2362 = vmatpush1.bf16.msra.mxu0 %v1852
        %2363 = vmatprep.subr.bf16.mxu0 %v1859
        %2364 = vmatpush1.bf16.msra.mxu0 %v1858
        %2365 = vmatprep.subr.bf16.mxu0 %v1865
        %2366 = vmatpush1.bf16.msra.mxu0 %v1864
        %2367 = vmatprep.subr.bf16.mxu0 %v1871
        %2368 = vmatpush1.bf16.msra.mxu0 %v1870
        %2369 = vmatprep.subr.bf16.mxu0 %v1877
        %2370 = vmatpush1.bf16.msra.mxu0 %v1876
        %2371 = vmatprep.subr.bf16.mxu0 %v1883
        %2372 = vmatpush1.bf16.msra.mxu0 %v1882
        %2373 = vmatprep.subr.bf16.mxu0 %v1889
        %2374 = vmatpush1.bf16.msra.mxu0 %v1888
        %2375 = vmatprep.subr.bf16.mxu0 %v1895
        %2376 = vmatpush1.bf16.msra.mxu0 %v1894
        %2377 = vmatprep.subr.bf16.mxu0 %v1901
        %2378 = vmatpush1.bf16.msra.mxu0 %v1900
        %2379 = vmatprep.subr.bf16.mxu0 %v1907
        %2380 = vmatpush1.bf16.msra.mxu0 %v1906
        %2381 = vmatprep.subr.bf16.mxu0 %v1913
        %2382 = vmatpush1.bf16.msra.mxu0 %v1912
        %2383 = vmatprep.subr.bf16.mxu0 %v1919
        %2384 = vmatpush1.bf16.msra.mxu0 %v1918
        %2385 = vmatprep.subr.bf16.mxu0 %v1925
        %2386 = vmatpush1.bf16.msra.mxu0 %v1924
        %2387 = vmatprep.mubr.bf16.mxu0 %v551
        %2388 = vmatmul.mubr.bf16.gmra.mrb[0].mxu0 %v550
        %v2389 = vpop.f32.mrb[0].mxu0
        %v2390 = vadd.f32 %v2349, %v2389
        %v2391 = vpop.f32.mrb[0].mxu0
        %v2392 = vadd.f32 %v2351, %v2391
        %v2393 = vpop.f32.mrb[0].mxu0
        %v2394 = vpop.f32.mrb[0].mxu0
        %2395 = vdwg.mxu0
        %2396 = vmatprep.subr.bf16.mxu0 %v1931
        %2397 = vmatpush1.bf16.msra.mxu0 %v1930
        %2398 = vmatprep.subr.bf16.mxu0 %v1937
        %2399 = vmatpush1.bf16.msra.mxu0 %v1936
        %2400 = vmatprep.subr.bf16.mxu0 %v1943
        %2401 = vmatpush1.bf16.msra.mxu0 %v1942
        %2402 = vmatprep.subr.bf16.mxu0 %v1949
        %2403 = vmatpush1.bf16.msra.mxu0 %v1948
        %2404 = vmatprep.subr.bf16.mxu0 %v1955
        %2405 = vmatpush1.bf16.msra.mxu0 %v1954
        %2406 = vmatprep.subr.bf16.mxu0 %v1961
        %2407 = vmatpush1.bf16.msra.mxu0 %v1960
        %2408 = vmatprep.subr.bf16.mxu0 %v1967
        %2409 = vmatpush1.bf16.msra.mxu0 %v1966
        %2410 = vmatprep.subr.bf16.mxu0 %v1973
        %2411 = vmatpush1.bf16.msra.mxu0 %v1972
        %2412 = vmatprep.subr.bf16.mxu0 %v1979
        %2413 = vmatpush1.bf16.msra.mxu0 %v1978
        %2414 = vmatprep.subr.bf16.mxu0 %v1985
        %2415 = vmatpush1.bf16.msra.mxu0 %v1984
        %2416 = vmatprep.subr.bf16.mxu0 %v1991
        %2417 = vmatpush1.bf16.msra.mxu0 %v1990
        %2418 = vmatprep.subr.bf16.mxu0 %v1997
        %2419 = vmatpush1.bf16.msra.mxu0 %v1996
        %2420 = vmatprep.subr.bf16.mxu0 %v2003
        %2421 = vmatpush1.bf16.msra.mxu0 %v2002
        %2422 = vmatprep.subr.bf16.mxu0 %v2009
        %2423 = vmatpush1.bf16.msra.mxu0 %v2008
        %2424 = vmatprep.subr.bf16.mxu0 %v2015
        %2425 = vmatpush1.bf16.msra.mxu0 %v2014
        %2426 = vmatprep.subr.bf16.mxu0 %v2021
        %2427 = vmatpush1.bf16.msra.mxu0 %v2020
        %2428 = vmatprep.mubr.bf16.mxu0 %v553
        %2429 = vmatmul.mubr.bf16.gmra.mrb[0].mxu0 %v552
        %v2430 = vpop.f32.mrb[0].mxu0
        %v2431 = vadd.f32 %v2390, %v2430
        %v2432 = vpop.f32.mrb[0].mxu0
        %v2433 = vadd.f32 %v2392, %v2432
        %v2434 = vpop.f32.mrb[0].mxu0
        %v2435 = vpop.f32.mrb[0].mxu0
        %2436 = vdwg.mxu0
        %2437 = vmatprep.subr.bf16.mxu0 %v1741
        %2438 = vmatpush1.bf16.msra.mxu0 %v1740
        %2439 = vmatprep.subr.bf16.mxu0 %v1747
        %2440 = vmatpush1.bf16.msra.mxu0 %v1746
        %2441 = vmatprep.subr.bf16.mxu0 %v1753
        %2442 = vmatpush1.bf16.msra.mxu0 %v1752
        %2443 = vmatprep.subr.bf16.mxu0 %v1759
        %2444 = vmatpush1.bf16.msra.mxu0 %v1758
        %2445 = vmatprep.subr.bf16.mxu0 %v1765
        %2446 = vmatpush1.bf16.msra.mxu0 %v1764
        %2447 = vmatprep.subr.bf16.mxu0 %v1771
        %2448 = vmatpush1.bf16.msra.mxu0 %v1770
        %2449 = vmatprep.subr.bf16.mxu0 %v1777
        %2450 = vmatpush1.bf16.msra.mxu0 %v1776
        %2451 = vmatprep.subr.bf16.mxu0 %v1783
        %2452 = vmatpush1.bf16.msra.mxu0 %v1782
        %2453 = vmatprep.subr.bf16.mxu0 %v1789
        %2454 = vmatpush1.bf16.msra.mxu0 %v1788
        %2455 = vmatprep.subr.bf16.mxu0 %v1795
        %2456 = vmatpush1.bf16.msra.mxu0 %v1794
        %2457 = vmatprep.subr.bf16.mxu0 %v1801
        %2458 = vmatpush1.bf16.msra.mxu0 %v1800
        %2459 = vmatprep.subr.bf16.mxu0 %v1807
        %2460 = vmatpush1.bf16.msra.mxu0 %v1806
        %2461 = vmatprep.subr.bf16.mxu0 %v1813
        %2462 = vmatpush1.bf16.msra.mxu0 %v1812
        %2463 = vmatprep.subr.bf16.mxu0 %v1819
        %2464 = vmatpush1.bf16.msra.mxu0 %v1818
        %2465 = vmatprep.subr.bf16.mxu0 %v1825
        %2466 = vmatpush1.bf16.msra.mxu0 %v1824
        %2467 = vmatprep.subr.bf16.mxu0 %v1831
        %2468 = vmatpush1.bf16.msra.mxu0 %v1830
        %2469 = vmatprep.mubr.bf16.mxu0 %v549
        %2470 = vmatmul.mubr.bf16.gmra.mrb[0].mxu0 %v548
        %v2471 = vpop.f32.mrb[0].mxu0
        %v2472 = vadd.f32 %v855, %v2471
        %v2473 = vpop.f32.mrb[0].mxu0
        %v2474 = vadd.f32 %v859, %v2473
        %v2475 = vpop.f32.mrb[0].mxu0
        %v2476 = vpop.f32.mrb[0].mxu0
        %2477 = vdwg.mxu0
        %2478 = vmatprep.subr.bf16.mxu0 %v1837
        %2479 = vmatpush1.bf16.msra.mxu0 %v1836
        %2480 = vmatprep.subr.bf16.mxu0 %v1843
        %2481 = vmatpush1.bf16.msra.mxu0 %v1842
        %2482 = vmatprep.subr.bf16.mxu0 %v1849
        %2483 = vmatpush1.bf16.msra.mxu0 %v1848
        %2484 = vmatprep.subr.bf16.mxu0 %v1855
        %2485 = vmatpush1.bf16.msra.mxu0 %v1854
        %2486 = vmatprep.subr.bf16.mxu0 %v1861
        %2487 = vmatpush1.bf16.msra.mxu0 %v1860
        %2488 = vmatprep.subr.bf16.mxu0 %v1867
        %2489 = vmatpush1.bf16.msra.mxu0 %v1866
        %2490 = vmatprep.subr.bf16.mxu0 %v1873
        %2491 = vmatpush1.bf16.msra.mxu0 %v1872
        %2492 = vmatprep.subr.bf16.mxu0 %v1879
        %2493 = vmatpush1.bf16.msra.mxu0 %v1878
        %2494 = vmatprep.subr.bf16.mxu0 %v1885
        %2495 = vmatpush1.bf16.msra.mxu0 %v1884
        %2496 = vmatprep.subr.bf16.mxu0 %v1891
        %2497 = vmatpush1.bf16.msra.mxu0 %v1890
        %2498 = vmatprep.subr.bf16.mxu0 %v1897
        %2499 = vmatpush1.bf16.msra.mxu0 %v1896
        %2500 = vmatprep.subr.bf16.mxu0 %v1903
        %2501 = vmatpush1.bf16.msra.mxu0 %v1902
        %2502 = vmatprep.subr.bf16.mxu0 %v1909
        %2503 = vmatpush1.bf16.msra.mxu0 %v1908
        %2504 = vmatprep.subr.bf16.mxu0 %v1915
        %2505 = vmatpush1.bf16.msra.mxu0 %v1914
        %2506 = vmatprep.subr.bf16.mxu0 %v1921
        %2507 = vmatpush1.bf16.msra.mxu0 %v1920
        %2508 = vmatprep.subr.bf16.mxu0 %v1927
        %2509 = vmatpush1.bf16.msra.mxu0 %v1926
        %2510 = vmatprep.mubr.bf16.mxu0 %v551
        %2511 = vmatmul.mubr.bf16.gmra.mrb[0].mxu0 %v550
        %v2512 = vpop.f32.mrb[0].mxu0
        %v2513 = vadd.f32 %v2472, %v2512
        %v2514 = vpop.f32.mrb[0].mxu0
        %v2515 = vadd.f32 %v2474, %v2514
        %v2516 = vpop.f32.mrb[0].mxu0
        %v2517 = vpop.f32.mrb[0].mxu0
        %2518 = vdwg.mxu0
        %2519 = vmatprep.subr.bf16.mxu0 %v1933
        %2520 = vmatpush1.bf16.msra.mxu0 %v1932
        %2521 = vmatprep.subr.bf16.mxu0 %v1939
        %2522 = vmatpush1.bf16.msra.mxu0 %v1938
        %2523 = vmatprep.subr.bf16.mxu0 %v1945
        %2524 = vmatpush1.bf16.msra.mxu0 %v1944
        %2525 = vmatprep.subr.bf16.mxu0 %v1951
        %2526 = vmatpush1.bf16.msra.mxu0 %v1950
        %2527 = vmatprep.subr.bf16.mxu0 %v1957
        %2528 = vmatpush1.bf16.msra.mxu0 %v1956
        %2529 = vmatprep.subr.bf16.mxu0 %v1963
        %2530 = vmatpush1.bf16.msra.mxu0 %v1962
        %2531 = vmatprep.subr.bf16.mxu0 %v1969
        %2532 = vmatpush1.bf16.msra.mxu0 %v1968
        %2533 = vmatprep.subr.bf16.mxu0 %v1975
        %2534 = vmatpush1.bf16.msra.mxu0 %v1974
        %2535 = vmatprep.subr.bf16.mxu0 %v1981
        %2536 = vmatpush1.bf16.msra.mxu0 %v1980
        %2537 = vmatprep.subr.bf16.mxu0 %v1987
        %2538 = vmatpush1.bf16.msra.mxu0 %v1986
        %2539 = vmatprep.subr.bf16.mxu0 %v1993
        %2540 = vmatpush1.bf16.msra.mxu0 %v1992
        %2541 = vmatprep.subr.bf16.mxu0 %v1999
        %2542 = vmatpush1.bf16.msra.mxu0 %v1998
        %2543 = vmatprep.subr.bf16.mxu0 %v2005
        %2544 = vmatpush1.bf16.msra.mxu0 %v2004
        %2545 = vmatprep.subr.bf16.mxu0 %v2011
        %2546 = vmatpush1.bf16.msra.mxu0 %v2010
        %2547 = vmatprep.subr.bf16.mxu0 %v2017
        %2548 = vmatpush1.bf16.msra.mxu0 %v2016
        %2549 = vmatprep.subr.bf16.mxu0 %v2023
        %2550 = vmatpush1.bf16.msra.mxu0 %v2022
        %2551 = vmatprep.mubr.bf16.mxu0 %v553
        %2552 = vmatmul.mubr.bf16.gmra.mrb[0].mxu0 %v552
        %v2553 = vpop.f32.mrb[0].mxu0
        %v2554 = vadd.f32 %v2513, %v2553
        %v2555 = vpop.f32.mrb[0].mxu0
        %v2556 = vadd.f32 %v2515, %v2555
        %v2557 = vpop.f32.mrb[0].mxu0
        %v2558 = vpop.f32.mrb[0].mxu0
        %2559 = vdwg.mxu0
        %2560 = vmatprep.subr.bf16.mxu0 %v1743
        %2561 = vmatpush1.bf16.msra.mxu0 %v1742
        %2562 = vmatprep.subr.bf16.mxu0 %v1749
        %2563 = vmatpush1.bf16.msra.mxu0 %v1748
        %2564 = vmatprep.subr.bf16.mxu0 %v1755
        %2565 = vmatpush1.bf16.msra.mxu0 %v1754
        %2566 = vmatprep.subr.bf16.mxu0 %v1761
        %2567 = vmatpush1.bf16.msra.mxu0 %v1760
        %2568 = vmatprep.subr.bf16.mxu0 %v1767
        %2569 = vmatpush1.bf16.msra.mxu0 %v1766
        %2570 = vmatprep.subr.bf16.mxu0 %v1773
        %2571 = vmatpush1.bf16.msra.mxu0 %v1772
        %2572 = vmatprep.subr.bf16.mxu0 %v1779
        %2573 = vmatpush1.bf16.msra.mxu0 %v1778
        %2574 = vmatprep.subr.bf16.mxu0 %v1785
        %2575 = vmatpush1.bf16.msra.mxu0 %v1784
        %2576 = vmatprep.subr.bf16.mxu0 %v1791
        %2577 = vmatpush1.bf16.msra.mxu0 %v1790
        %2578 = vmatprep.subr.bf16.mxu0 %v1797
        %2579 = vmatpush1.bf16.msra.mxu0 %v1796
        %2580 = vmatprep.subr.bf16.mxu0 %v1803
        %2581 = vmatpush1.bf16.msra.mxu0 %v1802
        %2582 = vmatprep.subr.bf16.mxu0 %v1809
        %2583 = vmatpush1.bf16.msra.mxu0 %v1808
        %2584 = vmatprep.subr.bf16.mxu0 %v1815
        %2585 = vmatpush1.bf16.msra.mxu0 %v1814
        %2586 = vmatprep.subr.bf16.mxu0 %v1821
        %2587 = vmatpush1.bf16.msra.mxu0 %v1820
        %2588 = vmatprep.subr.bf16.mxu0 %v1827
        %2589 = vmatpush1.bf16.msra.mxu0 %v1826
        %2590 = vmatprep.subr.bf16.mxu0 %v1833
        %2591 = vmatpush1.bf16.msra.mxu0 %v1832
        %2592 = vmatprep.mubr.bf16.mxu0 %v549
        %2593 = vmatmul.mubr.bf16.gmra.mrb[0].mxu0 %v548
        %v2594 = vpop.f32.mrb[0].mxu0
        %v2595 = vadd.f32 %v863, %v2594
        %v2596 = vpop.f32.mrb[0].mxu0
        %v2597 = vadd.f32 %v867, %v2596
        %v2598 = vpop.f32.mrb[0].mxu0
        %v2599 = vpop.f32.mrb[0].mxu0
        %2600 = vdwg.mxu0
        %2601 = vmatprep.subr.bf16.mxu0 %v1839
        %2602 = vmatpush1.bf16.msra.mxu0 %v1838
        %2603 = vmatprep.subr.bf16.mxu0 %v1845
        %2604 = vmatpush1.bf16.msra.mxu0 %v1844
        %2605 = vmatprep.subr.bf16.mxu0 %v1851
        %2606 = vmatpush1.bf16.msra.mxu0 %v1850
        %2607 = vmatprep.subr.bf16.mxu0 %v1857
        %2608 = vmatpush1.bf16.msra.mxu0 %v1856
        %2609 = vmatprep.subr.bf16.mxu0 %v1863
        %2610 = vmatpush1.bf16.msra.mxu0 %v1862
        %2611 = vmatprep.subr.bf16.mxu0 %v1869
        %2612 = vmatpush1.bf16.msra.mxu0 %v1868
        %2613 = vmatprep.subr.bf16.mxu0 %v1875
        %2614 = vmatpush1.bf16.msra.mxu0 %v1874
        %2615 = vmatprep.subr.bf16.mxu0 %v1881
        %2616 = vmatpush1.bf16.msra.mxu0 %v1880
        %2617 = vmatprep.subr.bf16.mxu0 %v1887
        %2618 = vmatpush1.bf16.msra.mxu0 %v1886
        %2619 = vmatprep.subr.bf16.mxu0 %v1893
        %2620 = vmatpush1.bf16.msra.mxu0 %v1892
        %2621 = vmatprep.subr.bf16.mxu0 %v1899
        %2622 = vmatpush1.bf16.msra.mxu0 %v1898
        %2623 = vmatprep.subr.bf16.mxu0 %v1905
        %2624 = vmatpush1.bf16.msra.mxu0 %v1904
        %2625 = vmatprep.subr.bf16.mxu0 %v1911
        %2626 = vmatpush1.bf16.msra.mxu0 %v1910
        %2627 = vmatprep.subr.bf16.mxu0 %v1917
        %2628 = vmatpush1.bf16.msra.mxu0 %v1916
        %2629 = vmatprep.subr.bf16.mxu0 %v1923
        %2630 = vmatpush1.bf16.msra.mxu0 %v1922
        %2631 = vmatprep.subr.bf16.mxu0 %v1929
        %2632 = vmatpush1.bf16.msra.mxu0 %v1928
        %2633 = vmatprep.mubr.bf16.mxu0 %v551
        %2634 = vmatmul.mubr.bf16.gmra.mrb[0].mxu0 %v550
        %v2635 = vpop.f32.mrb[0].mxu0
        %v2636 = vadd.f32 %v2595, %v2635
        %v2637 = vpop.f32.mrb[0].mxu0
        %v2638 = vadd.f32 %v2597, %v2637
        %v2639 = vpop.f32.mrb[0].mxu0
        %v2640 = vpop.f32.mrb[0].mxu0
        %2641 = vdwg.mxu0
        %2642 = vmatprep.subr.bf16.mxu0 %v1935
        %2643 = vmatpush1.bf16.msra.mxu0 %v1934
        %2644 = vmatprep.subr.bf16.mxu0 %v1941
        %2645 = vmatpush1.bf16.msra.mxu0 %v1940
        %2646 = vmatprep.subr.bf16.mxu0 %v1947
        %2647 = vmatpush1.bf16.msra.mxu0 %v1946
        %2648 = vmatprep.subr.bf16.mxu0 %v1953
        %2649 = vmatpush1.bf16.msra.mxu0 %v1952
        %2650 = vmatprep.subr.bf16.mxu0 %v1959
        %2651 = vmatpush1.bf16.msra.mxu0 %v1958
        %2652 = vmatprep.subr.bf16.mxu0 %v1965
        %2653 = vmatpush1.bf16.msra.mxu0 %v1964
        %2654 = vmatprep.subr.bf16.mxu0 %v1971
        %2655 = vmatpush1.bf16.msra.mxu0 %v1970
        %2656 = vmatprep.subr.bf16.mxu0 %v1977
        %2657 = vmatpush1.bf16.msra.mxu0 %v1976
        %2658 = vmatprep.subr.bf16.mxu0 %v1983
        %2659 = vmatpush1.bf16.msra.mxu0 %v1982
        %2660 = vmatprep.subr.bf16.mxu0 %v1989
        %2661 = vmatpush1.bf16.msra.mxu0 %v1988
        %2662 = vmatprep.subr.bf16.mxu0 %v1995
        %2663 = vmatpush1.bf16.msra.mxu0 %v1994
        %2664 = vmatprep.subr.bf16.mxu0 %v2001
        %2665 = vmatpush1.bf16.msra.mxu0 %v2000
        %2666 = vmatprep.subr.bf16.mxu0 %v2007
        %2667 = vmatpush1.bf16.msra.mxu0 %v2006
        %2668 = vmatprep.subr.bf16.mxu0 %v2013
        %2669 = vmatpush1.bf16.msra.mxu0 %v2012
        %2670 = vmatprep.subr.bf16.mxu0 %v2019
        %2671 = vmatpush1.bf16.msra.mxu0 %v2018
        %2672 = vmatprep.subr.bf16.mxu0 %v2025
        %2673 = vmatpush1.bf16.msra.mxu0 %v2024
        %2674 = vmatprep.mubr.bf16.mxu0 %v553
        %2675 = vmatmul.mubr.bf16.gmra.mrb[0].mxu0 %v552
        %v2676 = vpop.f32.mrb[0].mxu0
        %v2677 = vadd.f32 %v2636, %v2676
        %v2678 = vpop.f32.mrb[0].mxu0
        %v2679 = vadd.f32 %v2638, %v2678
        %v2680 = vpop.f32.mrb[0].mxu0
        %v2681 = vpop.f32.mrb[0].mxu0
        %2682 = vdwg.mxu0
        %v2683 = vmax.f32 %v2431, 0.0
        %v2684 = vmax.f32 %v2433, 0.0
        %v2685 = vmax.f32 %v2554, 0.0
        %v2686 = vmax.f32 %v2556, 0.0
        %v2687 = vmax.f32 %v2677, 0.0
        %v2688 = vmax.f32 %v2679, 0.0
        %v2689 = vld [vmem:[%s540] sm:$0xff]
        %v2690 = vld [vmem:[#allocation8] sm:$0xff]
        %2692 = vset.pattern.permute.xlu0 0
        %2693 = vperm.xlu0 %2692, %v2689
        %v2694 = vpop.permute.xlu0 %2693
        %v2696 = vlaneseq
        %v2697 = vshrl.u32 %v2696, 7
        %v2698 = vsub.s32 0, %v2697
        %v2699 = vrot.slane %v2690, %v2698
        %v2700 = vmul.f32 %v2694, %v2699
        %2701 = vset.pattern.permute.xlu0 1
        %2702 = vperm.xlu0 %2701, %v2689
        %v2703 = vpop.permute.xlu0 %2702
        %v2705 = vlaneseq
        %v2706 = vshrl.u32 %v2705, 7
        %v2707 = vsub.s32 1, %v2706
        %v2708 = vrot.slane %v2690, %v2707
        %v2709 = vmul.f32 %v2703, %v2708
        %v2710 = vadd.f32 %v2700, %v2709
        %2711 = vset.pattern.permute.xlu0 2
        %2712 = vperm.xlu0 %2711, %v2689
        %v2713 = vpop.permute.xlu0 %2712
        %v2715 = vlaneseq
        %v2716 = vshrl.u32 %v2715, 7
        %v2717 = vsub.s32 2, %v2716
        %v2718 = vrot.slane %v2690, %v2717
        %v2719 = vmul.f32 %v2713, %v2718
        %v2720 = vadd.f32 %v2710, %v2719
        %v2721 = vld [vmem:[#allocation10] sm:$0x1]
        %v2723 = vlaneseq
        %v2724 = vshrl.u32 %v2723, 7
        %v2725 = vsub.s32 0, %v2724
        %v2726 = vrot.slane %v2721, %v2725
        %v2728 = vadd.f32 %v2720, %v2726
        %v2729 = vmax.f32 %v2728, 0.0
        %v2730 = vpack.c.bf16 %v2683, %v2683
        %v2731 = vpack.c.bf16 %v2684, %v2684
        %v2732 = vpack.c.bf16 %v2685, %v2685
        %v2733 = vpack.c.bf16 %v2686, %v2686
        %v2734 = vpack.c.bf16 %v2687, %v2687
        %v2735 = vpack.c.bf16 %v2688, %v2688
        %v2736 = vld [vmem:[#allocation11] sm:$0xf]
        %v2737 = vld [vmem:[#allocation11 + $0x4] sm:$0xf]
        %v2738 = vld [vmem:[#allocation11 + $0x8] sm:$0xf]
        %v2739 = vld [vmem:[#allocation11 + $0xc] sm:$0xf]
        %v2740 = vld [vmem:[#allocation11 + $0x10] sm:$0xf]
        %v2741 = vld [vmem:[#allocation11 + $0x14] sm:$0xf]
        %v2742 = vld [vmem:[#allocation11 + $0x18] sm:$0xf]
        %v2743 = vld [vmem:[#allocation11 + $0x1c] sm:$0xf]
        %v2744 = vld [vmem:[#allocation11 + $0x20] sm:$0xf]
        %v2745 = vld [vmem:[#allocation11 + $0x24] sm:$0xf]
        %v2746 = vld [vmem:[#allocation11 + $0x28] sm:$0xf]
        %v2747 = vld [vmem:[#allocation11 + $0x2c] sm:$0xf]
        %v2748 = vld [vmem:[#allocation11 + $0x30] sm:$0xf]
        %v2749 = vld [vmem:[#allocation11 + $0x34] sm:$0xf]
        %v2750 = vld [vmem:[#allocation11 + $0x38] sm:$0xf]
        %v2751 = vld [vmem:[#allocation11 + $0x3c] sm:$0xf]
        %v2752 = vld [vmem:[#allocation11 + $0x40] sm:$0xf]
        %v2753 = vld [vmem:[#allocation11 + $0x44] sm:$0xf]
        %v2754 = vld [vmem:[#allocation11 + $0x48] sm:$0xf]
        %v2755 = vld [vmem:[#allocation11 + $0x4c] sm:$0xf]
        %v2756 = vld [vmem:[#allocation11 + $0x50] sm:$0xf]
        %v2757 = vld [vmem:[#allocation11 + $0x54] sm:$0xf]
        %v2758 = vld [vmem:[#allocation11 + $0x58] sm:$0xf]
        %v2759 = vld [vmem:[#allocation11 + $0x5c] sm:$0xf]
        %v2760 = vld [vmem:[#allocation11 + $0x60] sm:$0xf]
        %v2761 = vld [vmem:[#allocation11 + $0x64] sm:$0xf]
        %v2762 = vld [vmem:[#allocation11 + $0x68] sm:$0xf]
        %v2763 = vld [vmem:[#allocation11 + $0x6c] sm:$0xf]
        %v2764 = vld [vmem:[#allocation11 + $0x70] sm:$0xf]
        %v2765 = vld [vmem:[#allocation11 + $0x74] sm:$0xf]
        %v2766 = vld [vmem:[#allocation11 + $0x78] sm:$0xf]
        %v2767 = vld [vmem:[#allocation11 + $0x7c] sm:$0xf]
        %v2768 = vld [vmem:[#allocation11 + $0x80] sm:$0xf]
        %v2769 = vld [vmem:[#allocation11 + $0x84] sm:$0xf]
        %v2770 = vld [vmem:[#allocation11 + $0x88] sm:$0xf]
        %v2771 = vld [vmem:[#allocation11 + $0x8c] sm:$0xf]
        %v2772 = vld [vmem:[#allocation11 + $0x90] sm:$0xf]
        %v2773 = vld [vmem:[#allocation11 + $0x94] sm:$0xf]
        %v2774 = vld [vmem:[#allocation11 + $0x98] sm:$0xf]
        %v2775 = vld [vmem:[#allocation11 + $0x9c] sm:$0xf]
        %v2776 = vld [vmem:[#allocation11 + $0xa0] sm:$0xf]
        %v2777 = vld [vmem:[#allocation11 + $0xa4] sm:$0xf]
        %v2778 = vld [vmem:[#allocation11 + $0xa8] sm:$0xf]
        %v2779 = vld [vmem:[#allocation11 + $0xac] sm:$0xf]
        %v2780 = vld [vmem:[#allocation11 + $0xb0] sm:$0xf]
        %v2781 = vld [vmem:[#allocation11 + $0xb4] sm:$0xf]
        %v2782 = vld [vmem:[#allocation11 + $0xb8] sm:$0xf]
        %v2783 = vld [vmem:[#allocation11 + $0xbc] sm:$0xf]
        %v2784 = vld [vmem:[#allocation11 + $0xc0] sm:$0xf]
        %v2785 = vld [vmem:[#allocation11 + $0xc4] sm:$0xf]
        %v2786 = vld [vmem:[#allocation11 + $0xc8] sm:$0xf]
        %v2787 = vld [vmem:[#allocation11 + $0xcc] sm:$0xf]
        %v2788 = vld [vmem:[#allocation11 + $0xd0] sm:$0xf]
        %v2789 = vld [vmem:[#allocation11 + $0xd4] sm:$0xf]
        %v2790 = vld [vmem:[#allocation11 + $0xd8] sm:$0xf]
        %v2791 = vld [vmem:[#allocation11 + $0xdc] sm:$0xf]
        %v2792 = vld [vmem:[#allocation11 + $0xe0] sm:$0xf]
        %v2793 = vld [vmem:[#allocation11 + $0xe4] sm:$0xf]
        %v2794 = vld [vmem:[#allocation11 + $0xe8] sm:$0xf]
        %v2795 = vld [vmem:[#allocation11 + $0xec] sm:$0xf]
        %v2796 = vld [vmem:[#allocation11 + $0xf0] sm:$0xf]
        %v2797 = vld [vmem:[#allocation11 + $0xf4] sm:$0xf]
        %v2798 = vld [vmem:[#allocation11 + $0xf8] sm:$0xf]
        %v2799 = vld [vmem:[#allocation11 + $0xfc] sm:$0xf]
        %v2800 = vld [vmem:[#allocation11 + $0x100] sm:$0xf]
        %v2801 = vld [vmem:[#allocation11 + $0x104] sm:$0xf]
        %v2802 = vld [vmem:[#allocation11 + $0x108] sm:$0xf]
        %v2803 = vld [vmem:[#allocation11 + $0x10c] sm:$0xf]
        %v2804 = vld [vmem:[#allocation11 + $0x110] sm:$0xf]
        %v2805 = vld [vmem:[#allocation11 + $0x114] sm:$0xf]
        %v2806 = vld [vmem:[#allocation11 + $0x118] sm:$0xf]
        %v2807 = vld [vmem:[#allocation11 + $0x11c] sm:$0xf]
        %v2808 = vld [vmem:[#allocation11 + $0x120] sm:$0xf]
        %v2809 = vld [vmem:[#allocation11 + $0x124] sm:$0xf]
        %v2810 = vld [vmem:[#allocation11 + $0x128] sm:$0xf]
        %v2811 = vld [vmem:[#allocation11 + $0x12c] sm:$0xf]
        %v2812 = vld [vmem:[#allocation11 + $0x130] sm:$0xf]
        %v2813 = vld [vmem:[#allocation11 + $0x134] sm:$0xf]
        %v2814 = vld [vmem:[#allocation11 + $0x138] sm:$0xf]
        %v2815 = vld [vmem:[#allocation11 + $0x13c] sm:$0xf]
        %v2816 = vld [vmem:[#allocation11 + $0x140] sm:$0xf]
        %v2817 = vld [vmem:[#allocation11 + $0x144] sm:$0xf]
        %v2818 = vld [vmem:[#allocation11 + $0x148] sm:$0xf]
        %v2819 = vld [vmem:[#allocation11 + $0x14c] sm:$0xf]
        %v2820 = vld [vmem:[#allocation11 + $0x150] sm:$0xf]
        %v2821 = vld [vmem:[#allocation11 + $0x154] sm:$0xf]
        %v2822 = vld [vmem:[#allocation11 + $0x158] sm:$0xf]
        %v2823 = vld [vmem:[#allocation11 + $0x15c] sm:$0xf]
        %v2824 = vld [vmem:[#allocation11 + $0x160] sm:$0xf]
        %v2825 = vld [vmem:[#allocation11 + $0x164] sm:$0xf]
        %v2826 = vld [vmem:[#allocation11 + $0x168] sm:$0xf]
        %v2827 = vld [vmem:[#allocation11 + $0x16c] sm:$0xf]
        %v2828 = vld [vmem:[#allocation11 + $0x170] sm:$0xf]
        %v2829 = vld [vmem:[#allocation11 + $0x174] sm:$0xf]
        %v2830 = vld [vmem:[#allocation11 + $0x178] sm:$0xf]
        %v2831 = vld [vmem:[#allocation11 + $0x17c] sm:$0xf]
        %v2832 = vpack.c.bf16 %v2729, %v2729
        %v2833 = vld [vmem:[#allocation13] sm:$0xf]
        %v2834 = vld [vmem:[#allocation13 + $0x4] sm:$0xf]
        %v2835 = vld [vmem:[#allocation13 + $0x8] sm:$0xf]
        %v2836 = vld [vmem:[#allocation13 + $0xc] sm:$0xf]
        %v2837 = vld [vmem:[#allocation13 + $0x10] sm:$0xf]
        %v2838 = vld [vmem:[#allocation13 + $0x14] sm:$0xf]
        %v2839 = vld [vmem:[#allocation13 + $0x18] sm:$0xf]
        %v2840 = vld [vmem:[#allocation13 + $0x1c] sm:$0xf]
        %v2849 = vunpack.c.l.b16 %v2833
        %v2850 = vunpack.c.l.b16 %v2834
        %v2851 = vunpack.c.l.b16 %v2835
        %v2852 = vunpack.c.l.b16 %v2836
        %v2853 = vunpack.c.l.b16 %v2837
        %v2854 = vunpack.c.l.b16 %v2838
        %v2855 = vunpack.c.l.b16 %v2839
        %v2856 = vunpack.c.l.b16 %v2840
        %v2857 = vpack.c.b16 %v2850, %v2849
        %v2858 = vpack.c.b16 %v2852, %v2851
        %v2859 = vpack.c.b16 %v2854, %v2853
        %v2860 = vpack.c.b16 %v2856, %v2855
        %vm2865 = vcmask 523264
        %v2867 = vsel %vm2865, %v2832, 0
        %2869 = vmatprep.subr.bf16.mxu0 0
        %2870 = vmatpush1.bf16.msra.mxu0 %v2857
        %2871 = vmatprep.subr.bf16.mxu0 0
        %2872 = vmatpush1.bf16.msra.mxu0 %v2858
        %2873 = vmatprep.subr.bf16.mxu0 0
        %2874 = vmatpush1.bf16.msra.mxu0 %v2859
        %2875 = vmatprep.subr.bf16.mxu0 0
        %2876 = vmatpush1.bf16.msra.mxu0 %v2860
        %2877 = vmatprep.subr.bf16.mxu0 0
        %2878 = vmatpush1.bf16.msra.mxu0 0
        %2879 = vmatprep.subr.bf16.mxu0 0
        %2880 = vmatpush1.bf16.msra.mxu0 0
        %2881 = vmatprep.subr.bf16.mxu0 0
        %2882 = vmatpush1.bf16.msra.mxu0 0
        %2883 = vmatprep.subr.bf16.mxu0 0
        %2884 = vmatpush1.bf16.msra.mxu0 0
        %2885 = vmatprep.subr.bf16.mxu0 0
        %2886 = vmatpush1.bf16.msra.mxu0 0
        %2887 = vmatprep.subr.bf16.mxu0 0
        %2888 = vmatpush1.bf16.msra.mxu0 0
        %2889 = vmatprep.subr.bf16.mxu0 0
        %2890 = vmatpush1.bf16.msra.mxu0 0
        %2891 = vmatprep.subr.bf16.mxu0 0
        %2892 = vmatpush1.bf16.msra.mxu0 0
        %2893 = vmatprep.subr.bf16.mxu0 0
        %2894 = vmatpush1.bf16.msra.mxu0 0
        %2895 = vmatprep.subr.bf16.mxu0 0
        %2896 = vmatpush1.bf16.msra.mxu0 0
        %2897 = vmatprep.subr.bf16.mxu0 0
        %2898 = vmatpush1.bf16.msra.mxu0 0
        %2899 = vmatprep.subr.bf16.mxu0 0
        %2900 = vmatpush1.bf16.msra.mxu0 0
        %2901 = vmatprep.mubr.bf16.mxu0 0
        %2902 = vmatmul.mubr.bf16.gmra.mrb[0].mxu0 %v2867
        %v2903 = vpop.f32.mrb[0].mxu0
        %v2904 = vadd.f32 0.0, %v2903
        %v2905 = vpop.f32.mrb[0].mxu0
        %v2906 = vpop.f32.mrb[0].mxu0
        %v2907 = vpop.f32.mrb[0].mxu0
        %2908 = vdwg.mxu0
        %v3005 = vunpack.c.l.b16 %v2736
        %v3006 = vunpack.c.l.b16 %v2737
        %v3007 = vunpack.c.l.b16 %v2738
        %v3008 = vunpack.c.l.b16 %v2739
        %v3009 = vunpack.c.l.b16 %v2740
        %v3010 = vunpack.c.l.b16 %v2741
        %v3011 = vunpack.c.l.b16 %v2742
        %v3012 = vunpack.c.l.b16 %v2743
        %v3013 = vunpack.c.l.b16 %v2744
        %v3014 = vunpack.c.l.b16 %v2745
        %v3015 = vunpack.c.l.b16 %v2746
        %v3016 = vunpack.c.l.b16 %v2747
        %v3017 = vunpack.c.l.b16 %v2748
        %v3018 = vunpack.c.l.b16 %v2749
        %v3019 = vunpack.c.l.b16 %v2750
        %v3020 = vunpack.c.l.b16 %v2751
        %v3021 = vunpack.c.l.b16 %v2752
        %v3022 = vunpack.c.l.b16 %v2753
        %v3023 = vunpack.c.l.b16 %v2754
        %v3024 = vunpack.c.l.b16 %v2755
        %v3025 = vunpack.c.l.b16 %v2756
        %v3026 = vunpack.c.l.b16 %v2757
        %v3027 = vunpack.c.l.b16 %v2758
        %v3028 = vunpack.c.l.b16 %v2759
        %v3029 = vunpack.c.l.b16 %v2760
        %v3030 = vunpack.c.l.b16 %v2761
        %v3031 = vunpack.c.l.b16 %v2762
        %v3032 = vunpack.c.l.b16 %v2763
        %v3033 = vunpack.c.l.b16 %v2764
        %v3034 = vunpack.c.l.b16 %v2765
        %v3035 = vunpack.c.l.b16 %v2766
        %v3036 = vunpack.c.l.b16 %v2767
        %v3037 = vunpack.c.l.b16 %v2768
        %v3038 = vunpack.c.l.b16 %v2769
        %v3039 = vunpack.c.l.b16 %v2770
        %v3040 = vunpack.c.l.b16 %v2771
        %v3041 = vunpack.c.l.b16 %v2772
        %v3042 = vunpack.c.l.b16 %v2773
        %v3043 = vunpack.c.l.b16 %v2774
        %v3044 = vunpack.c.l.b16 %v2775
        %v3045 = vunpack.c.l.b16 %v2776
        %v3046 = vunpack.c.l.b16 %v2777
        %v3047 = vunpack.c.l.b16 %v2778
        %v3048 = vunpack.c.l.b16 %v2779
        %v3049 = vunpack.c.l.b16 %v2780
        %v3050 = vunpack.c.l.b16 %v2781
        %v3051 = vunpack.c.l.b16 %v2782
        %v3052 = vunpack.c.l.b16 %v2783
        %v3053 = vunpack.c.l.b16 %v2784
        %v3054 = vunpack.c.l.b16 %v2785
        %v3055 = vunpack.c.l.b16 %v2786
        %v3056 = vunpack.c.l.b16 %v2787
        %v3057 = vunpack.c.l.b16 %v2788
        %v3058 = vunpack.c.l.b16 %v2789
        %v3059 = vunpack.c.l.b16 %v2790
        %v3060 = vunpack.c.l.b16 %v2791
        %v3061 = vunpack.c.l.b16 %v2792
        %v3062 = vunpack.c.l.b16 %v2793
        %v3063 = vunpack.c.l.b16 %v2794
        %v3064 = vunpack.c.l.b16 %v2795
        %v3065 = vunpack.c.l.b16 %v2796
        %v3066 = vunpack.c.l.b16 %v2797
        %v3067 = vunpack.c.l.b16 %v2798
        %v3068 = vunpack.c.l.b16 %v2799
        %v3069 = vunpack.c.l.b16 %v2800
        %v3070 = vunpack.c.l.b16 %v2801
        %v3071 = vunpack.c.l.b16 %v2802
        %v3072 = vunpack.c.l.b16 %v2803
        %v3073 = vunpack.c.l.b16 %v2804
        %v3074 = vunpack.c.l.b16 %v2805
        %v3075 = vunpack.c.l.b16 %v2806
        %v3076 = vunpack.c.l.b16 %v2807
        %v3077 = vunpack.c.l.b16 %v2808
        %v3078 = vunpack.c.l.b16 %v2809
        %v3079 = vunpack.c.l.b16 %v2810
        %v3080 = vunpack.c.l.b16 %v2811
        %v3081 = vunpack.c.l.b16 %v2812
        %v3082 = vunpack.c.l.b16 %v2813
        %v3083 = vunpack.c.l.b16 %v2814
        %v3084 = vunpack.c.l.b16 %v2815
        %v3085 = vunpack.c.l.b16 %v2816
        %v3086 = vunpack.c.l.b16 %v2817
        %v3087 = vunpack.c.l.b16 %v2818
        %v3088 = vunpack.c.l.b16 %v2819
        %v3089 = vunpack.c.l.b16 %v2820
        %v3090 = vunpack.c.l.b16 %v2821
        %v3091 = vunpack.c.l.b16 %v2822
        %v3092 = vunpack.c.l.b16 %v2823
        %v3093 = vunpack.c.l.b16 %v2824
        %v3094 = vunpack.c.l.b16 %v2825
        %v3095 = vunpack.c.l.b16 %v2826
        %v3096 = vunpack.c.l.b16 %v2827
        %v3097 = vunpack.c.l.b16 %v2828
        %v3098 = vunpack.c.l.b16 %v2829
        %v3099 = vunpack.c.l.b16 %v2830
        %v3100 = vunpack.c.l.b16 %v2831
        %v3101 = vpack.c.b16 %v3006, %v3005
        %v3102 = vpack.c.b16 %v3008, %v3007
        %v3103 = vpack.c.b16 %v3010, %v3009
        %v3104 = vpack.c.b16 %v3012, %v3011
        %v3105 = vpack.c.b16 %v3014, %v3013
        %v3106 = vpack.c.b16 %v3016, %v3015
        %v3107 = vpack.c.b16 %v3018, %v3017
        %v3108 = vpack.c.b16 %v3020, %v3019
        %v3109 = vpack.c.b16 %v3022, %v3021
        %v3110 = vpack.c.b16 %v3024, %v3023
        %v3111 = vpack.c.b16 %v3026, %v3025
        %v3112 = vpack.c.b16 %v3028, %v3027
        %v3113 = vpack.c.b16 %v3030, %v3029
        %v3114 = vpack.c.b16 %v3032, %v3031
        %v3115 = vpack.c.b16 %v3034, %v3033
        %v3116 = vpack.c.b16 %v3036, %v3035
        %v3117 = vpack.c.b16 %v3038, %v3037
        %v3118 = vpack.c.b16 %v3040, %v3039
        %v3119 = vpack.c.b16 %v3042, %v3041
        %v3120 = vpack.c.b16 %v3044, %v3043
        %v3121 = vpack.c.b16 %v3046, %v3045
        %v3122 = vpack.c.b16 %v3048, %v3047
        %v3123 = vpack.c.b16 %v3050, %v3049
        %v3124 = vpack.c.b16 %v3052, %v3051
        %v3125 = vpack.c.b16 %v3054, %v3053
        %v3126 = vpack.c.b16 %v3056, %v3055
        %v3127 = vpack.c.b16 %v3058, %v3057
        %v3128 = vpack.c.b16 %v3060, %v3059
        %v3129 = vpack.c.b16 %v3062, %v3061
        %v3130 = vpack.c.b16 %v3064, %v3063
        %v3131 = vpack.c.b16 %v3066, %v3065
        %v3132 = vpack.c.b16 %v3068, %v3067
        %v3133 = vpack.c.b16 %v3070, %v3069
        %v3134 = vpack.c.b16 %v3072, %v3071
        %v3135 = vpack.c.b16 %v3074, %v3073
        %v3136 = vpack.c.b16 %v3076, %v3075
        %v3137 = vpack.c.b16 %v3078, %v3077
        %v3138 = vpack.c.b16 %v3080, %v3079
        %v3139 = vpack.c.b16 %v3082, %v3081
        %v3140 = vpack.c.b16 %v3084, %v3083
        %v3141 = vpack.c.b16 %v3086, %v3085
        %v3142 = vpack.c.b16 %v3088, %v3087
        %v3143 = vpack.c.b16 %v3090, %v3089
        %v3144 = vpack.c.b16 %v3092, %v3091
        %v3145 = vpack.c.b16 %v3094, %v3093
        %v3146 = vpack.c.b16 %v3096, %v3095
        %v3147 = vpack.c.b16 %v3098, %v3097
        %v3148 = vpack.c.b16 %v3100, %v3099
        %3197 = vmatprep.subr.bf16.mxu0 0
        %3198 = vmatpush1.bf16.msra.mxu0 %v3101
        %3199 = vmatprep.subr.bf16.mxu0 0
        %3200 = vmatpush1.bf16.msra.mxu0 %v3102
        %3201 = vmatprep.subr.bf16.mxu0 0
        %3202 = vmatpush1.bf16.msra.mxu0 %v3103
        %3203 = vmatprep.subr.bf16.mxu0 0
        %3204 = vmatpush1.bf16.msra.mxu0 %v3104
        %3205 = vmatprep.subr.bf16.mxu0 0
        %3206 = vmatpush1.bf16.msra.mxu0 %v3105
        %3207 = vmatprep.subr.bf16.mxu0 0
        %3208 = vmatpush1.bf16.msra.mxu0 %v3106
        %3209 = vmatprep.subr.bf16.mxu0 0
        %3210 = vmatpush1.bf16.msra.mxu0 %v3107
        %3211 = vmatprep.subr.bf16.mxu0 0
        %3212 = vmatpush1.bf16.msra.mxu0 %v3108
        %3213 = vmatprep.subr.bf16.mxu0 0
        %3214 = vmatpush1.bf16.msra.mxu0 %v3109
        %3215 = vmatprep.subr.bf16.mxu0 0
        %3216 = vmatpush1.bf16.msra.mxu0 %v3110
        %3217 = vmatprep.subr.bf16.mxu0 0
        %3218 = vmatpush1.bf16.msra.mxu0 %v3111
        %3219 = vmatprep.subr.bf16.mxu0 0
        %3220 = vmatpush1.bf16.msra.mxu0 %v3112
        %3221 = vmatprep.subr.bf16.mxu0 0
        %3222 = vmatpush1.bf16.msra.mxu0 %v3113
        %3223 = vmatprep.subr.bf16.mxu0 0
        %3224 = vmatpush1.bf16.msra.mxu0 %v3114
        %3225 = vmatprep.subr.bf16.mxu0 0
        %3226 = vmatpush1.bf16.msra.mxu0 %v3115
        %3227 = vmatprep.subr.bf16.mxu0 0
        %3228 = vmatpush1.bf16.msra.mxu0 %v3116
        %3229 = vmatprep.mubr.bf16.mxu0 %v2731
        %3230 = vmatmul.mubr.bf16.gmra.mrb[0].mxu0 %v2730
        %v3231 = vpop.f32.mrb[0].mxu0
        %v3232 = vadd.f32 %v2904, %v3231
        %v3233 = vpop.f32.mrb[0].mxu0
        %v3234 = vpop.f32.mrb[0].mxu0
        %v3235 = vpop.f32.mrb[0].mxu0
        %3236 = vdwg.mxu0
        %3237 = vmatprep.subr.bf16.mxu0 0
        %3238 = vmatpush1.bf16.msra.mxu0 %v3117
        %3239 = vmatprep.subr.bf16.mxu0 0
        %3240 = vmatpush1.bf16.msra.mxu0 %v3118
        %3241 = vmatprep.subr.bf16.mxu0 0
        %3242 = vmatpush1.bf16.msra.mxu0 %v3119
        %3243 = vmatprep.subr.bf16.mxu0 0
        %3244 = vmatpush1.bf16.msra.mxu0 %v3120
        %3245 = vmatprep.subr.bf16.mxu0 0
        %3246 = vmatpush1.bf16.msra.mxu0 %v3121
        %3247 = vmatprep.subr.bf16.mxu0 0
        %3248 = vmatpush1.bf16.msra.mxu0 %v3122
        %3249 = vmatprep.subr.bf16.mxu0 0
        %3250 = vmatpush1.bf16.msra.mxu0 %v3123
        %3251 = vmatprep.subr.bf16.mxu0 0
        %3252 = vmatpush1.bf16.msra.mxu0 %v3124
        %3253 = vmatprep.subr.bf16.mxu0 0
        %3254 = vmatpush1.bf16.msra.mxu0 %v3125
        %3255 = vmatprep.subr.bf16.mxu0 0
        %3256 = vmatpush1.bf16.msra.mxu0 %v3126
        %3257 = vmatprep.subr.bf16.mxu0 0
        %3258 = vmatpush1.bf16.msra.mxu0 %v3127
        %3259 = vmatprep.subr.bf16.mxu0 0
        %3260 = vmatpush1.bf16.msra.mxu0 %v3128
        %3261 = vmatprep.subr.bf16.mxu0 0
        %3262 = vmatpush1.bf16.msra.mxu0 %v3129
        %3263 = vmatprep.subr.bf16.mxu0 0
        %3264 = vmatpush1.bf16.msra.mxu0 %v3130
        %3265 = vmatprep.subr.bf16.mxu0 0
        %3266 = vmatpush1.bf16.msra.mxu0 %v3131
        %3267 = vmatprep.subr.bf16.mxu0 0
        %3268 = vmatpush1.bf16.msra.mxu0 %v3132
        %3269 = vmatprep.mubr.bf16.mxu0 %v2733
        %3270 = vmatmul.mubr.bf16.gmra.mrb[0].mxu0 %v2732
        %v3271 = vpop.f32.mrb[0].mxu0
        %v3272 = vadd.f32 %v3232, %v3271
        %v3273 = vpop.f32.mrb[0].mxu0
        %v3274 = vpop.f32.mrb[0].mxu0
        %v3275 = vpop.f32.mrb[0].mxu0
        %3276 = vdwg.mxu0
        %3277 = vmatprep.subr.bf16.mxu0 0
        %3278 = vmatpush1.bf16.msra.mxu0 %v3133
        %3279 = vmatprep.subr.bf16.mxu0 0
        %3280 = vmatpush1.bf16.msra.mxu0 %v3134
        %3281 = vmatprep.subr.bf16.mxu0 0
        %3282 = vmatpush1.bf16.msra.mxu0 %v3135
        %3283 = vmatprep.subr.bf16.mxu0 0
        %3284 = vmatpush1.bf16.msra.mxu0 %v3136
        %3285 = vmatprep.subr.bf16.mxu0 0
        %3286 = vmatpush1.bf16.msra.mxu0 %v3137
        %3287 = vmatprep.subr.bf16.mxu0 0
        %3288 = vmatpush1.bf16.msra.mxu0 %v3138
        %3289 = vmatprep.subr.bf16.mxu0 0
        %3290 = vmatpush1.bf16.msra.mxu0 %v3139
        %3291 = vmatprep.subr.bf16.mxu0 0
        %3292 = vmatpush1.bf16.msra.mxu0 %v3140
        %3293 = vmatprep.subr.bf16.mxu0 0
        %3294 = vmatpush1.bf16.msra.mxu0 %v3141
        %3295 = vmatprep.subr.bf16.mxu0 0
        %3296 = vmatpush1.bf16.msra.mxu0 %v3142
        %3297 = vmatprep.subr.bf16.mxu0 0
        %3298 = vmatpush1.bf16.msra.mxu0 %v3143
        %3299 = vmatprep.subr.bf16.mxu0 0
        %3300 = vmatpush1.bf16.msra.mxu0 %v3144
        %3301 = vmatprep.subr.bf16.mxu0 0
        %3302 = vmatpush1.bf16.msra.mxu0 %v3145
        %3303 = vmatprep.subr.bf16.mxu0 0
        %3304 = vmatpush1.bf16.msra.mxu0 %v3146
        %3305 = vmatprep.subr.bf16.mxu0 0
        %3306 = vmatpush1.bf16.msra.mxu0 %v3147
        %3307 = vmatprep.subr.bf16.mxu0 0
        %3308 = vmatpush1.bf16.msra.mxu0 %v3148
        %3309 = vmatprep.mubr.bf16.mxu0 %v2735
        %3310 = vmatmul.mubr.bf16.gmra.mrb[0].mxu0 %v2734
        %v3311 = vpop.f32.mrb[0].mxu0
        %v3312 = vadd.f32 %v3272, %v3311
        %v3313 = vpop.f32.mrb[0].mxu0
        %v3314 = vpop.f32.mrb[0].mxu0
        %v3315 = vpop.f32.mrb[0].mxu0
        %3316 = vdwg.mxu0
        %v3317 = vld [vmem:[#allocation14] sm:$0x1]
        %v3319 = vlaneseq
        %v3320 = vshrl.u32 %v3319, 7
        %v3321 = vsub.s32 0, %v3320
        %v3322 = vrot.slane %v3317, %v3321
        %v3324 = vadd.f32 %v3312, %v3322
        %v3325 = vmax.f32 %v3324, 0.0
        %v3326 = vpack.c.bf16 %v3325, %v3325
        %v3327 = vld [vmem:[#allocation16] sm:$0xf]
        %v3328 = vld [vmem:[#allocation16 + $0x4] sm:$0xf]
        %v3329 = vld [vmem:[#allocation16 + $0x8] sm:$0xf]
        %v3330 = vld [vmem:[#allocation16 + $0xc] sm:$0xf]
        %v3331 = vld [vmem:[#allocation16 + $0x10] sm:$0xf]
        %v3332 = vld [vmem:[#allocation16 + $0x14] sm:$0xf]
        %v3333 = vld [vmem:[#allocation16 + $0x18] sm:$0xf]
        %v3334 = vld [vmem:[#allocation16 + $0x1c] sm:$0xf]
        %v3335 = vld [vmem:[#allocation16 + $0x20] sm:$0xf]
        %v3336 = vld [vmem:[#allocation16 + $0x24] sm:$0xf]
        %v3337 = vld [vmem:[#allocation16 + $0x28] sm:$0xf]
        %v3338 = vld [vmem:[#allocation16 + $0x2c] sm:$0xf]
        %v3339 = vld [vmem:[#allocation16 + $0x30] sm:$0xf]
        %v3340 = vld [vmem:[#allocation16 + $0x34] sm:$0xf]
        %v3341 = vld [vmem:[#allocation16 + $0x38] sm:$0xf]
        %v3342 = vld [vmem:[#allocation16 + $0x3c] sm:$0xf]
        %v3343 = vld [vmem:[#allocation17] sm:$0x1]
        %v3345 = vlaneseq
        %v3346 = vshrl.u32 %v3345, 7
        %v3347 = vsub.s32 0, %v3346
        %v3348 = vrot.slane %v3343, %v3347
        %v3366 = vunpack.c.l.b16 %v3327
        %v3367 = vunpack.c.l.b16 %v3328
        %v3368 = vunpack.c.l.b16 %v3329
        %v3369 = vunpack.c.l.b16 %v3330
        %v3370 = vunpack.c.l.b16 %v3331
        %v3371 = vunpack.c.l.b16 %v3332
        %v3372 = vunpack.c.l.b16 %v3333
        %v3373 = vunpack.c.l.b16 %v3334
        %v3374 = vunpack.c.l.b16 %v3335
        %v3375 = vunpack.c.l.b16 %v3336
        %v3376 = vunpack.c.l.b16 %v3337
        %v3377 = vunpack.c.l.b16 %v3338
        %v3378 = vunpack.c.l.b16 %v3339
        %v3379 = vunpack.c.l.b16 %v3340
        %v3380 = vunpack.c.l.b16 %v3341
        %v3381 = vunpack.c.l.b16 %v3342
        %v3382 = vpack.c.b16 %v3367, %v3366
        %v3383 = vpack.c.b16 %v3369, %v3368
        %v3384 = vpack.c.b16 %v3371, %v3370
        %v3385 = vpack.c.b16 %v3373, %v3372
        %v3386 = vpack.c.b16 %v3375, %v3374
        %v3387 = vpack.c.b16 %v3377, %v3376
        %v3388 = vpack.c.b16 %v3379, %v3378
        %v3389 = vpack.c.b16 %v3381, %v3380
        %3398 = vmatprep.subr.bf16.mxu0 0
        %3399 = vmatpush1.bf16.msra.mxu0 %v3382
        %3400 = vmatprep.subr.bf16.mxu0 0
        %3401 = vmatpush1.bf16.msra.mxu0 %v3383
        %3402 = vmatprep.subr.bf16.mxu0 0
        %3403 = vmatpush1.bf16.msra.mxu0 %v3384
        %3404 = vmatprep.subr.bf16.mxu0 0
        %3405 = vmatpush1.bf16.msra.mxu0 %v3385
        %3406 = vmatprep.subr.bf16.mxu0 0
        %3407 = vmatpush1.bf16.msra.mxu0 %v3386
        %3408 = vmatprep.subr.bf16.mxu0 0
        %3409 = vmatpush1.bf16.msra.mxu0 %v3387
        %3410 = vmatprep.subr.bf16.mxu0 0
        %3411 = vmatpush1.bf16.msra.mxu0 %v3388
        %3412 = vmatprep.subr.bf16.mxu0 0
        %3413 = vmatpush1.bf16.msra.mxu0 %v3389
        %3414 = vmatprep.subr.bf16.mxu0 0
        %3415 = vmatpush1.bf16.msra.mxu0 0
        %3416 = vmatprep.subr.bf16.mxu0 0
        %3417 = vmatpush1.bf16.msra.mxu0 0
        %3418 = vmatprep.subr.bf16.mxu0 0
        %3419 = vmatpush1.bf16.msra.mxu0 0
        %3420 = vmatprep.subr.bf16.mxu0 0
        %3421 = vmatpush1.bf16.msra.mxu0 0
        %3422 = vmatprep.subr.bf16.mxu0 0
        %3423 = vmatpush1.bf16.msra.mxu0 0
        %3424 = vmatprep.subr.bf16.mxu0 0
        %3425 = vmatpush1.bf16.msra.mxu0 0
        %3426 = vmatprep.subr.bf16.mxu0 0
        %3427 = vmatpush1.bf16.msra.mxu0 0
        %3428 = vmatprep.subr.bf16.mxu0 0
        %3429 = vmatpush1.bf16.msra.mxu0 0
        %3430 = vmatprep.mubr.bf16.mxu0 0
        %3431 = vmatmul.mubr.bf16.gmra.mrb[0].mxu0 %v3326
        %v3432 = vpop.f32.mrb[0].mxu0
        %v3433 = vadd.f32 %v3348, %v3432
        %v3434 = vpop.f32.mrb[0].mxu0
        %v3435 = vpop.f32.mrb[0].mxu0
        %v3436 = vpop.f32.mrb[0].mxu0
        %3437 = vdwg.mxu0
        %3438 = vst [vmem:[%s536] sm:$0xff] %v3433
        %s3439 = sand.u32 %s282, 1
        %s3440 = scalar_lea.sflag [#allocation4], %s3439
        %s3441 = sand.u32 %s282, 1
        %s3442 = smul.addr %s3441, 8
        %s3443 = scalar_lea.vmem [#allocation19], %s3442
        // Predicated region
        $region105: #{tpu_custom_call.1} parent=63 // pred_check
          %p3444 = pneg %p292
        $region106: #{tpu_custom_call.1} parent=63 // pred_check_branch
          %3446 = sbr.rel (%p3444) target = $region108
        $region107: #{tpu_custom_call.1} parent=63 // pred_region
          %s3448 = ssub.s32 128, 128
          %3449 = vsyncadd %s3440, %s3448
          %s3450 = smul.addr %s33, 128
          %s3451 = scalar_lea.hbm %s11, %s3450
          %s3453 = sshll.u32 %s3443, 4
          %s3454 = int_to_ptr.vmem [resolvable:$true] %s3453
          %3456 = dma.vmem_to_hbm [thread:$0]  %s3454, 128, %s3451, %s3440
        $region108: #{tpu_custom_call.1} parent=63 // pred_fallthru
          _
      $region64: #{tpu_custom_call.1} parent=5 // pred_fallthru
        _
      %p3457 = scmp.le.s32.totalorder 2, %s28
      // Predicated region
      $region109: #{tpu_custom_call.1} parent=5 // pred_check
        %p3458 = pneg %p3457
      $region110: #{tpu_custom_call.1} parent=5 // pred_check_branch
        %3460 = sbr.rel (%p3458) target = $region112
      $region111: #{tpu_custom_call.1} parent=5 // pred_region
        %s3461 = ssub.s32 %s28, 2
        // Predicated region
        $region113: #{tpu_custom_call.1} parent=111 // pred_check
          %p3462 = pneg %p298
        $region114: #{tpu_custom_call.1} parent=111 // pred_check_branch
          %3464 = sbr.rel (%p3462) target = $region116
        $region115: #{tpu_custom_call.1} parent=111 // pred_region
          %s3465 = sand.u32 %s283, 1
          %s3466 = scalar_lea.sflag [#allocation4], %s3465
          %s3467 = sand.u32 %s283, 1
          %s3468 = smul.addr %s3467, 8
          %s3469 = scalar_lea.vmem [#allocation19], %s3468
          %3470 = dma.done %s3466, 128
        $region116: #{tpu_custom_call.1} parent=111 // pred_fallthru
          _
      $region112: #{tpu_custom_call.1} parent=5 // pred_fallthru
        _
    $region6: #{tpu_custom_call.1} parent=1 // loop_footer
      %s32 = sadd.s32 1, %s28
    $region7: #{tpu_custom_call.1} parent=1 // loop_footer_branch
      %27 = sbr.rel target = $region3
    $region8: #{tpu_custom_call.1} parent=1 // loop_exit
      _
    %3471 = vsyncpa [#allocation3], 1
    %s3472 = scalar_lea.sflag [#allocation3], 1
    %3473 = vsyncpa %s3472, 1
    %3474 = vsyncpa [#allocation6], 1
    %3475 = vsyncpa [#allocation9], 1
    %3476 = vsyncpa [#allocation12], 1
    %3477 = vsyncpa [#allocation15], 1
    %3478 = vsyncpa [#allocation18], 1
    %3479 = vsyncpa [#allocation4], 1
    %s3480 = scalar_lea.sflag [#allocation4], 1
    %3481 = vsyncpa %s3480, 1

</llo_original>
